<compile_context>
chip_gen: v5e
topology: v5e:2x2
jax: 0.10.0
libtpu: 0.0.40
codegen_flags: <defaults>
</compile_context>

<pallas_src>
import math
import functools

import numpy as np
import jax
import jax.numpy as jnp
from jax.experimental import pallas as pl
from jax.experimental.pallas import tpu as pltpu

_BF16 = jnp.bfloat16
_F32 = jnp.float32


# ----------------------------------------------------------------------------
# Pallas kernels
# ----------------------------------------------------------------------------
def _stem_kernel(x_ref, w_ref, b_ref, pos_ref, o_ref):
    """x_proj + positional embedding for one batch row: o = x @ W + b + pos."""
    o_ref[0] = (
        jnp.dot(x_ref[0].astype(_BF16), w_ref[...], preferred_element_type=_F32)
        + b_ref[...] + pos_ref[...]
    )


def _cond_kernel(*refs, has_attr, attr_dim, cond_heads):
    """TimeEmbedding + ContinuousCondEmbedder, fused; outputs SiLU(t_emb).

    Vectorized over batch.  embedding∘in_proj and out_proj∘linear of the
    attribute embedder are pre-folded at pack time, so this kernel runs one
    batch-dense QKV matmul, a 2-head batched attention, and attr_dim small
    batch-dense projection matmuls.
    """
    if has_attr:
        (t_ref, wt1, bt1, wt2, bt2,
         attr_ref, mask_ref, wqc, bqc, binc, wol, cbias, o_ref) = refs
    else:
        t_ref, wt1, bt1, wt2, bt2, o_ref = refs

    # TimeEmbedding: Linear(1, D) -> Mish -> Linear(D, D)
    te = t_ref[...] * wt1[...] + bt1[...]                          # (B, D)
    te = te * jnp.tanh(jax.nn.softplus(te))                        # Mish (f32)
    te = jnp.dot(te.astype(_BF16), wt2[...], preferred_element_type=_F32) + bt2[...]

    if has_attr:
        A = attr_dim
        dh = 128 // cond_heads

        # embedding ∘ in_proj folded at pack time: one batch-dense matmul.
        raw = jnp.dot(attr_ref[...].astype(_BF16), wqc[...],
                      preferred_element_type=_F32) + bqc[...]      # (B, A*384)
        binv = binc[...]                                           # (1, 384) unmasked in_proj bias
        m = mask_ref[...]                                          # (B, A)
        qs, ks, vs = [], [], []
        for a in range(A):                                         # static attr loop (slices only)
            qkv_a = raw[:, a * 384:(a + 1) * 384] * m[:, a:a + 1] + binv
            qs.append(qkv_a[:, 0:128])
            ks.append(qkv_a[:, 128:256])
            vs.append(qkv_a[:, 256:384])
        q3 = jnp.stack(qs, axis=1)                                 # (B, A, 128)
        k3 = jnp.stack(ks, axis=1)
        v3 = jnp.stack(vs, axis=1)

        heads = []
        for hh in range(cond_heads):                               # static (=2); scale folded into Q
            sl = slice(hh * dh, (hh + 1) * dh)
            s = jnp.einsum("bad,bcd->bac", q3[..., sl].astype(_BF16),
                           k3[..., sl].astype(_BF16), preferred_element_type=_F32)
            s = s - jnp.max(s, axis=-1, keepdims=True)
            p = jnp.exp(s)
            p = p * pl.reciprocal(jnp.sum(p, axis=-1, keepdims=True), approx=True)
            heads.append(jnp.einsum("bac,bcd->bad", p.astype(_BF16),
                                    v3[..., sl].astype(_BF16),
                                    preferred_element_type=_F32))
        o3 = jnp.concatenate(heads, axis=-1)                       # (B, A, 128)

        # out_proj ∘ final linear folded at pack time (wol); biases pre-summed in cbias
        cond = cbias[...]                                          # (1, D)
        for a in range(A):
            cond = cond + jnp.dot(o3[:, a, :].astype(_BF16),
                                  wol[a * 128:(a + 1) * 128, :],
                                  preferred_element_type=_F32)
        te = te + cond

    # SiLU(t_emb), shared by every adaLN head (all blocks + final layer)
    o_ref[...] = te * jax.nn.sigmoid(te)


def _adaln_kernel(s_ref, w_ref, b_ref, o_ref):
    """One 6*D column chunk of the stacked adaLN modulation matmul."""
    o_ref[...] = jnp.dot(s_ref[...].astype(_BF16), w_ref[...],
                         preferred_element_type=_F32) + b_ref[...]


def _dit_blocks_kernel(x_ref, mod_ref, wqkv_ref, bqkv_ref, wo_ref, bo_ref,
                       w1_ref, b1_ref, w2_ref, b2_ref, o_ref, *, n_heads, eps):
    """Fully fused DiT block; grid=(B, depth); activations resident across depth."""
    d = pl.program_id(1)

    @pl.when(d == 0)
    def _():
        o_ref[...] = x_ref[...]                    # bring stem output into the resident slab

    x = o_ref[0]                                   # (L, D) f32, carried across depth in VMEM
    mod = mod_ref[0, 0]                            # (6, D)
    D = x.shape[-1]
    dh = D // n_heads
    shift_msa, scale_msa, gate_msa = mod[0:1], mod[1:2], mod[2:3]
    shift_mlp, scale_mlp, gate_mlp = mod[3:4], mod[4:5], mod[5:6]

    def ln_mod(v, shift, scale):
        mu = jnp.mean(v, axis=-1, keepdims=True)
        var = jnp.mean((v - mu) ** 2, axis=-1, keepdims=True)
        return (v - mu) * jax.lax.rsqrt(var + eps) * (1.0 + scale) + shift

    # ---- attention branch (torch code overwrites x with the modulated norm) ----
    h = ln_mod(x, shift_msa, scale_msa)
    qkv = jnp.dot(h.astype(_BF16), wqkv_ref[0],
                  preferred_element_type=_F32) + bqkv_ref[0]
    q, k, v = qkv[:, :D], qkv[:, D:2 * D], qkv[:, 2 * D:]
    heads = []
    for hh in range(n_heads):                      # static; 1/sqrt(dh) folded into wqkv Q cols
        sl = slice(hh * dh, (hh + 1) * dh)
        s = jax.lax.dot_general(q[:, sl].astype(_BF16), k[:, sl].astype(_BF16),
                                (((1,), (1,)), ((), ())),
                                preferred_element_type=_F32)
        s = s - jnp.max(s, axis=-1, keepdims=True)
        p = jnp.exp(s)
        p = p * pl.reciprocal(jnp.sum(p, axis=-1, keepdims=True), approx=True)
        heads.append(jnp.dot(p.astype(_BF16), v[:, sl].astype(_BF16),
                             preferred_element_type=_F32))
    attn = jnp.concatenate(heads, axis=-1)         # single head-merge (lane concat)
    attn = jnp.dot(attn.astype(_BF16), wo_ref[0],  # single full-K out_proj matmul
                   preferred_element_type=_F32) + bo_ref[0]
    x = h + gate_msa * attn                        # residual base is modulate(norm1(x)) per spec

    # ---- MLP branch ------------------------------------------------------------
    h2 = ln_mod(x, shift_mlp, scale_mlp)
    hid = jnp.dot(h2.astype(_BF16), w1_ref[0],
                  preferred_element_type=_F32) + b1_ref[0]
    c = math.sqrt(2.0 / math.pi)                   # GELU (tanh approx), f32
    hid = 0.5 * hid * (1.0 + jnp.tanh(c * (hid + 0.044715 * hid * hid * hid)))
    mlp = jnp.dot(hid.astype(_BF16), w2_ref[0],
                  preferred_element_type=_F32) + b2_ref[0]
    o_ref[0] = x + gate_mlp * mlp


def _final_kernel(x_ref, mod_ref, w_ref, b_ref, o_ref, *, eps):
    """Final layer: LN + modulate + linear (output lanes padded to 128)."""
    x = x_ref[0]
    mod = mod_ref[0]                               # (2, D)
    shift, scale = mod[0:1], mod[1:2]
    mu = jnp.mean(x, axis=-1, keepdims=True)
    var = jnp.mean((x - mu) ** 2, axis=-1, keepdims=True)
    h = (x - mu) * jax.lax.rsqrt(var + eps) * (1.0 + scale) + shift
    o_ref[0] = jnp.dot(h.astype(_BF16), w_ref[...],
                       preferred_element_type=_F32) + b_ref[...]


# ----------------------------------------------------------------------------
# Pallas wrappers
# ----------------------------------------------------------------------------
_PAR_B = pltpu.CompilerParams(dimension_semantics=("parallel",))


def _full_spec(shape):
    return pl.BlockSpec(shape, lambda b: (0,) * len(shape))


def _blocks_vmem_bytes(L, D, n_heads):
    """Explicit scoped-VMEM request for the fused block kernel."""
    wbytes = (D * 3 * D + D * D + D * 4 * D + 4 * D * D) * 2          # bf16 weights, one block
    bbytes = (3 * D + D + 4 * D + D) * 4
    act = 3 * L * D * 4                                               # x-in, resident out, copy
    interm = (L * 3 * D + n_heads * L * L + 2 * L * D + L * 4 * D) * 4
    modb = 2 * 6 * D * 4
    est = 2 * (wbytes + bbytes) + act + modb + 2 * interm             # double-buffering + slack
    return int(min(96 << 20, max(32 << 20, est)))


def _pallas_stem(x_p, wx, bx, pos, d_model):
    B, L, Kp = x_p.shape
    return pl.pallas_call(
        _stem_kernel,
        out_shape=jax.ShapeDtypeStruct((B, L, d_model), jnp.float32),
        grid=(B,),
        in_specs=[
            pl.BlockSpec((1, L, Kp), lambda b: (b, 0, 0)),
            _full_spec(wx.shape), _full_spec(bx.shape), _full_spec(pos.shape),
        ],
        out_specs=pl.BlockSpec((1, L, d_model), lambda b: (b, 0, 0)),
        compiler_params=_PAR_B,
    )(x_p, wx, bx, pos)


def _pallas_cond(kp, t, attr, mask):
    B = t.shape[0]
    D = kp["d_model"]
    A = kp["attr_dim"]
    has_attr = attr is not None

    args = [t, kp["wt1"], kp["bt1"], kp["wt2"], kp["bt2"]]
    if has_attr:
        Ap = kp["wqc"].shape[0]
        attr_p = jnp.pad(attr, ((0, 0), (0, Ap - attr.shape[1])))
        m = jnp.ones((B, A), jnp.float32) if mask is None else mask.astype(jnp.float32)
        args += [attr_p, m, kp["wqc"], kp["bqc"], kp["binc"], kp["wol"], kp["cbias"]]

    kern = functools.partial(_cond_kernel, has_attr=has_attr, attr_dim=A, cond_heads=2)
    return pl.pallas_call(
        kern, out_shape=jax.ShapeDtypeStruct((B, D), jnp.float32)
    )(*args)


def _pallas_adaln(silu_te, wada, bada, n_chunks, D):
    B = silu_te.shape[0]
    total = wada.shape[1]
    chunk = total // n_chunks
    if chunk % 128 != 0:                       # fall back to a single step for tiny/odd D
        chunk, n_chunks = total, 1
    return pl.pallas_call(
        _adaln_kernel,
        out_shape=jax.ShapeDtypeStruct((B, total), jnp.float32),
        grid=(n_chunks,),
        in_specs=[
            pl.BlockSpec((B, D), lambda g: (0, 0)),
            pl.BlockSpec((D, chunk), lambda g: (0, g)),     # column-tiled stacked adaLN weight
            pl.BlockSpec((1, chunk), lambda g: (0, g)),
        ],
        out_specs=pl.BlockSpec((B, chunk), lambda g: (0, g)),
        compiler_params=pltpu.CompilerParams(dimension_semantics=("parallel",)),
    )(silu_te, wada, bada)


def _pallas_dit_blocks(x, mod_all, kp, n_heads, depth):
    B, L, D = x.shape
    kern = functools.partial(_dit_blocks_kernel, n_heads=n_heads, eps=1e-6)
    return pl.pallas_call(
        kern,
        out_shape=jax.ShapeDtypeStruct((B, L, D), jnp.float32),
        grid=(B, depth),
        in_specs=[
            pl.BlockSpec((1, L, D), lambda b, d: (b, 0, 0)),        # stem output (read at d==0)
            pl.BlockSpec((1, 1, 6, D), lambda b, d: (b, d, 0, 0)),  # this block's modulations
            pl.BlockSpec((1, D, 3 * D), lambda b, d: (d, 0, 0)),    # per-depth streamed weights
            pl.BlockSpec((1, 1, 3 * D), lambda b, d: (d, 0, 0)),
            pl.BlockSpec((1, D, D), lambda b, d: (d, 0, 0)),
            pl.BlockSpec((1, 1, D), lambda b, d: (d, 0, 0)),
            pl.BlockSpec((1, D, 4 * D), lambda b, d: (d, 0, 0)),
            pl.BlockSpec((1, 1, 4 * D), lambda b, d: (d, 0, 0)),
            pl.BlockSpec((1, 4 * D, D), lambda b, d: (d, 0, 0)),
            pl.BlockSpec((1, 1, D), lambda b, d: (d, 0, 0)),
        ],
        out_specs=pl.BlockSpec((1, L, D), lambda b, d: (b, 0, 0)),  # resident across depth
        compiler_params=pltpu.CompilerParams(
            dimension_semantics=("parallel", "arbitrary"),
            vmem_limit_bytes=_blocks_vmem_bytes(L, D, n_heads)),
    )(x, mod_all, kp["wqkv"], kp["bqkv"], kp["wo"], kp["bo"],
      kp["w1"], kp["b1"], kp["w2"], kp["b2"])


def _pallas_final(x, mod_f, wfin, bfin):
    B, L, D = x.shape
    Np = wfin.shape[1]
    return pl.pallas_call(
        functools.partial(_final_kernel, eps=1e-6),
        out_shape=jax.ShapeDtypeStruct((B, L, Np), jnp.float32),
        grid=(B,),
        in_specs=[
            pl.BlockSpec((1, L, D), lambda b: (b, 0, 0)),
            pl.BlockSpec((1, 2, D), lambda b: (b, 0, 0)),
            _full_spec(wfin.shape), _full_spec(bfin.shape),
        ],
        out_specs=pl.BlockSpec((1, L, Np), lambda b: (b, 0, 0)),
        compiler_params=_PAR_B,
    )(x, mod_f, wfin, bfin)


# ----------------------------------------------------------------------------
# Model glue
# ----------------------------------------------------------------------------
def sinusoidal_pos_emb(length, dim):
    half = dim // 2
    freq = jnp.exp(jnp.arange(half, dtype=jnp.float32) * -(math.log(10000.0) / (half - 1)))
    pos = jnp.arange(length, dtype=jnp.float32)[:, None] * freq[None, :]
    return jnp.concatenate([jnp.sin(pos), jnp.cos(pos)], axis=-1)   # (L, dim)


def dit1d_forward(kp, x, t, attr=None, mask=None):
    B, L, x_dim = x.shape
    D = kp["d_model"]
    depth = kp["depth"]
    n_heads = kp["n_heads"]

    # stem: x_proj + pos emb (only the tiny raw input is padded per-call)
    Kp = kp["wx"].shape[0]
    x_p = jnp.pad(x, ((0, 0), (0, 0), (0, Kp - x_dim)))
    pos = sinusoidal_pos_emb(L, D)
    h = _pallas_stem(x_p, kp["wx"], kp["bx"], pos, D)

    # conditioning: SiLU(time emb + attr embedder), then all adaLN mods (tiled matmul)
    silu_te = _pallas_cond(kp, t, attr, mask)                               # (B, D)
    mod_all = _pallas_adaln(silu_te, kp["wada"], kp["bada"], depth + 1, D)
    mod_all = mod_all.reshape(B, depth + 1, 6, D)

    # all DiT blocks in one fused, depth-pipelined pallas_call
    h = _pallas_dit_blocks(h, mod_all, kp, n_heads, depth)

    # final layer (lane-dense 128-wide output, sliced back to x_dim)
    mod_f = mod_all[:, depth, 0:2, :]
    out_full = _pallas_final(h, mod_f, kp["wfin"], kp["bfin"])
    return out_full[:, :, :x_dim]


# ----------------------------------------------------------------------------
# Parameter init (raw, matches the torch module layout) + kernel packing
# ----------------------------------------------------------------------------
def dense_params(key, in_dim, out_dim, w_std=0.02):
    kw, kb = jax.random.split(key)
    return {
        "w": (jax.random.normal(kw, (in_dim, out_dim)) * w_std).astype(jnp.float32),
        "b": (jax.random.normal(kb, (out_dim,)) * 0.01).astype(jnp.float32),
    }


def init_params(key, x_dim, attr_dim, d_model, n_heads, depth):
    keys = jax.random.split(key, 9 + depth)
    params = {
        "x_proj": dense_params(keys[0], x_dim, d_model),
        "t_mlp0": dense_params(keys[1], 1, d_model),
        "t_mlp2": dense_params(keys[2], d_model, d_model),
        "attr_proj": {
            "embedding": dense_params(keys[3], attr_dim, attr_dim * 128),
            "attn": {
                "in_proj": dense_params(keys[4], 128, 3 * 128),
                "out_proj": dense_params(keys[5], 128, 128),
            },
            "linear": dense_params(keys[6], 128 * attr_dim, d_model),
        },
        "final": {
            "adaLN": dense_params(keys[7], d_model, 2 * d_model),
            "linear": dense_params(keys[8], d_model, x_dim),
        },
        "blocks": [],
    }
    for i in range(depth):
        k = jax.random.split(keys[9 + i], 5)
        params["blocks"].append(
            {
                "attn": {
                    "in_proj": dense_params(k[0], d_model, 3 * d_model),
                    "out_proj": dense_params(k[1], d_model, d_model),
                },
                "fc1": dense_params(k[2], d_model, 4 * d_model),
                "fc2": dense_params(k[3], 4 * d_model, d_model),
                "adaLN": dense_params(k[4], d_model, 6 * d_model),
            }
        )
    return params


def _round_up(v, m):
    return ((v + m - 1) // m) * m


def pack_params(p, *, x_dim, attr_dim, d_model, n_heads):
    """One-time padding / stacking / folding of weights for the fused kernels."""
    D = d_model
    assert D % n_heads == 0
    dh = D // n_heads
    depth = len(p["blocks"])
    kx = _round_up(max(x_dim, 1), 8)
    ka = _round_up(max(attr_dim, 1), 8)
    nf = _round_up(max(x_dim, 1), 128)              # lane-dense final output
    inv_blk = 1.0 / math.sqrt(dh)
    inv_cond = 1.0 / math.sqrt(64)                  # cond attention: 2 heads of 64

    def bf(w):
        return jnp.asarray(w, jnp.bfloat16)

    def brow(b):
        return jnp.asarray(b, jnp.float32).reshape(1, -1)

    def row_pad(w, rows):
        return jnp.pad(w, ((0, rows - w.shape[0]), (0, 0)))

    # ---- per-block weights, stacked on a leading depth axis ----
    wqkv, bqkv, wo, bo, w1, b1, w2, b2 = [], [], [], [], [], [], [], []
    for blk in p["blocks"]:
        wq = blk["attn"]["in_proj"]["w"].at[:, :D].multiply(inv_blk)   # fold 1/sqrt(dh) into Q
        bq = blk["attn"]["in_proj"]["b"].at[:D].multiply(inv_blk)
        wqkv.append(bf(wq)); bqkv.append(brow(bq))
        wo.append(bf(blk["attn"]["out_proj"]["w"])); bo.append(brow(blk["attn"]["out_proj"]["b"]))
        w1.append(bf(blk["fc1"]["w"])); b1.append(brow(blk["fc1"]["b"]))
        w2.append(bf(blk["fc2"]["w"])); b2.append(brow(blk["fc2"]["b"]))

    # ---- stacked adaLN (blocks + final layer padded to a uniform 6*D chunk) ----
    wada = jnp.concatenate(
        [blk["adaLN"]["w"] for blk in p["blocks"]]
        + [jnp.pad(p["final"]["adaLN"]["w"], ((0, 0), (0, 4 * D)))], axis=1)
    bada = jnp.concatenate(
        [blk["adaLN"]["b"] for blk in p["blocks"]]
        + [jnp.pad(p["final"]["adaLN"]["b"], (0, 4 * D))]).reshape(1, -1)

    # ---- ContinuousCondEmbedder: fold embedding∘in_proj and out_proj∘linear ----
    A = attr_dim
    we = row_pad(p["attr_proj"]["embedding"]["w"], ka)          # (ka, A*128)
    be = p["attr_proj"]["embedding"]["b"]                       # (A*128,)
    win = p["attr_proj"]["attn"]["in_proj"]["w"].at[:, :128].multiply(inv_cond)
    bin_ = p["attr_proj"]["attn"]["in_proj"]["b"].at[:128].multiply(inv_cond)
    woc = p["attr_proj"]["attn"]["out_proj"]["w"]               # (128, 128)
    boc = p["attr_proj"]["attn"]["out_proj"]["b"]               # (128,)
    wl = p["attr_proj"]["linear"]["w"]                          # (A*128, D)
    bl = p["attr_proj"]["linear"]["b"]                          # (D,)
    wqc = jnp.concatenate([we[:, a * 128:(a + 1) * 128] @ win for a in range(A)], axis=1)
    bqc = jnp.concatenate([be[a * 128:(a + 1) * 128] @ win for a in range(A)], axis=0)
    wl3 = wl.reshape(A, 128, D)
    wol = jnp.concatenate([woc @ wl3[a] for a in range(A)], axis=0)          # (A*128, D)
    cbias = (boc @ wl3.sum(0) + bl).reshape(1, -1)                           # (1, D)

    return {
        "d_model": D, "n_heads": n_heads, "x_dim": x_dim, "attr_dim": attr_dim,
        "depth": depth,
        # stem
        "wx": bf(row_pad(p["x_proj"]["w"], kx)), "bx": brow(p["x_proj"]["b"]),
        # time embedding
        "wt1": jnp.asarray(p["t_mlp0"]["w"], jnp.float32).reshape(1, D),
        "bt1": brow(p["t_mlp0"]["b"]),
        "wt2": bf(p["t_mlp2"]["w"]), "bt2": brow(p["t_mlp2"]["b"]),
        # attribute embedder (pack-time fused)
        "wqc": bf(wqc), "bqc": brow(bqc), "binc": brow(bin_),
        "wol": bf(wol), "cbias": brow(cbias),
        # adaLN stack
        "wada": bf(wada), "bada": jnp.asarray(bada, jnp.float32),
        # final layer
        "wfin": bf(jnp.pad(p["final"]["linear"]["w"], ((0, 0), (0, nf - x_dim)))),
        "bfin": brow(jnp.pad(p["final"]["linear"]["b"], (0, nf - x_dim))),
        # stacked block weights (depth, ...)
        "wqkv": jnp.stack(wqkv), "bqkv": jnp.stack(bqkv),
        "wo": jnp.stack(wo), "bo": jnp.stack(bo),
        "w1": jnp.stack(w1), "b1": jnp.stack(b1),
        "w2": jnp.stack(w2), "b2": jnp.stack(b2),
    }


# ----------------------------------------------------------------------------
# Pure-JAX f32 reference (for correctness check)
# ----------------------------------------------------------------------------
def _ref_linear(x, p, act=None):
    if act == "silu":
        x = x * jax.nn.sigmoid(x)
    elif act == "mish":
        x = x * jnp.tanh(jax.nn.softplus(x))
    return x @ p["w"] + p["b"]


def _ref_gelu_tanh(h):
    c = math.sqrt(2.0 / math.pi)
    return 0.5 * h * (1.0 + jnp.tanh(c * (h + 0.044715 * h * h * h)))


def _ref_mha(p, x, n_heads):
    B, L, D = x.shape
    dh = D // n_heads
    qkv = _ref_linear(x.reshape(B * L, D), p["in_proj"])
    q, k, v = jnp.split(qkv, 3, axis=-1)

    def sh(a):
        return a.reshape(B, L, n_heads, dh).transpose(0, 2, 1, 3)

    q, k, v = sh(q), sh(k), sh(v)
    s = jnp.einsum("bhld,bhmd->bhlm", q, k) / math.sqrt(dh)
    pattn = jax.nn.softmax(s, axis=-1)
    o = jnp.einsum("bhlm,bhmd->bhld", pattn, v)
    o = o.transpose(0, 2, 1, 3).reshape(B * L, D)
    return _ref_linear(o, p["out_proj"]).reshape(B, L, D)


def _ref_ln_mod(x, shift, scale, eps=1e-6):
    mu = x.mean(-1, keepdims=True)
    var = ((x - mu) ** 2).mean(-1, keepdims=True)
    xn = (x - mu) * jax.lax.rsqrt(var + eps)
    return xn * (1.0 + scale[:, None, :]) + shift[:, None, :]


def ref_forward(params, x, t, attr, mask, *, d_model, n_heads):
    B, L, _ = x.shape
    pos = sinusoidal_pos_emb(L, d_model)
    h = _ref_linear(x.reshape(B * L, -1), params["x_proj"]).reshape(B, L, d_model) + pos[None]
    te = _ref_linear(t, params["t_mlp0"])
    te = _ref_linear(te, params["t_mlp2"], act="mish")
    if attr is not None:
        pa = params["attr_proj"]
        emb = _ref_linear(attr, pa["embedding"]).reshape(B, -1, 128)
        if mask is not None:
            emb = emb * mask[:, :, None]
        emb = _ref_mha(pa["attn"], emb, 2)
        te = te + _ref_linear(emb.reshape(B, -1), pa["linear"])
    for p in params["blocks"]:
        mod = _ref_linear(te, p["adaLN"], act="silu")
        s1, c1, g1, s2, c2, g2 = jnp.split(mod, 6, axis=-1)
        # torch-literal DiTBlock: x is overwritten by modulate(norm1(x))
        h = _ref_ln_mod(h, s1, c1)
        h = h + g1[:, None, :] * _ref_mha(p["attn"], h, n_heads)
        hh = _ref_ln_mod(h, s2, c2)
        m = _ref_linear(_ref_gelu_tanh(_ref_linear(hh.reshape(B * L, -1), p["fc1"])), p["fc2"])
        h = h + g2[:, None, :] * m.reshape(B, L, -1)
    mod = _ref_linear(te, params["final"]["adaLN"], act="silu")
    s, c = jnp.split(mod, 2, axis=-1)
    h = _ref_ln_mod(h, s, c)
    return _ref_linear(h.reshape(B * L, -1), params["final"]["linear"]).reshape(B, L, -1)


# ----------------------------------------------------------------------------
if __name__ == "__main__":
    # TODO(synk): nn.Dropout is inference-mode identity (no RNG dropout in kernels).
    x_dim, attr_dim, d_model, n_heads, depth = 4, 3, 128, 2, 2
    B, L = 2, 16

    key = jax.random.PRNGKey(0)
    kp_key, kx, kt, kattr, km = jax.random.split(key, 5)
    raw = init_params(kp_key, x_dim, attr_dim, d_model, n_heads, depth)
    packed = pack_params(raw, x_dim=x_dim, attr_dim=attr_dim,
                         d_model=d_model, n_heads=n_heads)

    x = jax.random.normal(kx, (B, L, x_dim), dtype=jnp.float32)
    t = jax.random.uniform(kt, (B, 1), dtype=jnp.float32)
    attr = jax.random.normal(kattr, (B, attr_dim), dtype=jnp.float32)
    mask = (jax.random.uniform(km, (B, attr_dim)) > 0.3).astype(jnp.float32)

    fwd = jax.jit(lambda x_, t_, a_, m_: dit1d_forward(packed, x_, t_, a_, m_))
    out = jax.block_until_ready(fwd(x, t, attr, mask))

    ref = ref_forward(raw, x, t, attr, mask, d_model=d_model, n_heads=n_heads)
    np.testing.assert_allclose(np.asarray(out), np.asarray(ref), rtol=2e-2, atol=2e-2)
    assert out.shape == (B, L, x_dim)
    print("KERNEL_OK")
</pallas_src>

<mosaic_0001>
module attributes {stable_mosaic.version = 11 : i64} {
  func.func @_cond_kernel(%arg0: memref<2x1xf32, #tpu.memory_space<vmem>>, %arg1: memref<1x128xf32, #tpu.memory_space<vmem>>, %arg2: memref<1x128xf32, #tpu.memory_space<vmem>>, %arg3: memref<128x128xbf16, #tpu.memory_space<vmem>>, %arg4: memref<1x128xf32, #tpu.memory_space<vmem>>, %arg5: memref<2x8xf32, #tpu.memory_space<vmem>>, %arg6: memref<2x3xf32, #tpu.memory_space<vmem>>, %arg7: memref<8x1152xbf16, #tpu.memory_space<vmem>>, %arg8: memref<1x1152xf32, #tpu.memory_space<vmem>>, %arg9: memref<1x384xf32, #tpu.memory_space<vmem>>, %arg10: memref<384x128xbf16, #tpu.memory_space<vmem>>, %arg11: memref<1x128xf32, #tpu.memory_space<vmem>>, %arg12: memref<2x128xf32, #tpu.memory_space<vmem>>) attributes {dimension_semantics = [], scalar_prefetch = 0 : i64, scratch_operands = 0 : i64, tpu.core_type = #tpu.core_type<tc>} {
    %c0 = arith.constant 0 : index
    %c0_0 = arith.constant 0 : index
    %0 = vector.load %arg0[%c0, %c0_0] : memref<2x1xf32, #tpu.memory_space<vmem>>, vector<2x1xf32>
    %c0_1 = arith.constant 0 : index
    %c0_2 = arith.constant 0 : index
    %1 = vector.load %arg1[%c0_1, %c0_2] : memref<1x128xf32, #tpu.memory_space<vmem>>, vector<1x128xf32>
    %2 = vector.broadcast %0 : vector<2x1xf32> to vector<2x128xf32>
    %3 = vector.broadcast %1 : vector<1x128xf32> to vector<2x128xf32>
    %4 = arith.mulf %2, %3 : vector<2x128xf32>
    %c0_3 = arith.constant 0 : index
    %c0_4 = arith.constant 0 : index
    %5 = vector.load %arg2[%c0_3, %c0_4] : memref<1x128xf32, #tpu.memory_space<vmem>>, vector<1x128xf32>
    %6 = vector.broadcast %5 : vector<1x128xf32> to vector<2x128xf32>
    %7 = arith.addf %4, %6 : vector<2x128xf32>
    %cst = arith.constant 0.000000e+00 : f32
    %8 = vector.broadcast %cst : f32 to vector<2x128xf32>
    %9 = arith.maximumf %7, %8 : vector<2x128xf32>
    %10 = vector.broadcast %cst : f32 to vector<2x128xf32>
    %11 = arith.subf %7, %10 : vector<2x128xf32>
    %12 = arith.cmpf one, %11, %11 : vector<2x128xf32>
    %13 = vector.broadcast %cst : f32 to vector<2x128xf32>
    %14 = arith.addf %7, %13 : vector<2x128xf32>
    %15 = math.absf %11 : vector<2x128xf32>
    %cst_5 = arith.constant 0.000000e+00 : f32
    %16 = vector.broadcast %cst_5 : f32 to vector<2x128xf32>
    %17 = arith.subf %16, %15 : vector<2x128xf32>
    %18 = math.exp %17 : vector<2x128xf32>
    %19 = math.log1p %18 : vector<2x128xf32>
    %20 = arith.addf %9, %19 : vector<2x128xf32>
    %21 = arith.select %12, %14, %20 : vector<2x128xi1>, vector<2x128xf32>
    %22 = math.tanh %21 : vector<2x128xf32>
    %23 = arith.mulf %7, %22 : vector<2x128xf32>
    %24 = arith.truncf %23 : vector<2x128xf32> to vector<2x128xbf16>
    %c0_6 = arith.constant 0 : index
    %c0_7 = arith.constant 0 : index
    %25 = vector.load %arg3[%c0_6, %c0_7] : memref<128x128xbf16, #tpu.memory_space<vmem>>, vector<128x128xbf16>
    %cst_8 = arith.constant dense<0.000000e+00> : vector<2x128xf32>
    %26 = tpu.matmul %24, %25, %cst_8 {dimension_numbers = #tpu.dot_dimension_numbers<[1], [0], [0], [1], [0, 0, 1, 1], [], []>} : vector<2x128xbf16>, vector<128x128xbf16>, vector<2x128xf32> -> vector<2x128xf32>
    %c0_9 = arith.constant 0 : index
    %c0_10 = arith.constant 0 : index
    %27 = vector.load %arg4[%c0_9, %c0_10] : memref<1x128xf32, #tpu.memory_space<vmem>>, vector<1x128xf32>
    %28 = vector.broadcast %27 : vector<1x128xf32> to vector<2x128xf32>
    %29 = arith.addf %26, %28 : vector<2x128xf32>
    %c0_11 = arith.constant 0 : index
    %c0_12 = arith.constant 0 : index
    %30 = vector.load %arg5[%c0_11, %c0_12] : memref<2x8xf32, #tpu.memory_space<vmem>>, vector<2x8xf32>
    %31 = arith.truncf %30 : vector<2x8xf32> to vector<2x8xbf16>
    %c0_13 = arith.constant 0 : index
    %c0_14 = arith.constant 0 : index
    %32 = vector.load %arg7[%c0_13, %c0_14] : memref<8x1152xbf16, #tpu.memory_space<vmem>>, vector<8x1152xbf16>
    %cst_15 = arith.constant dense<0.000000e+00> : vector<2x1152xf32>
    %33 = tpu.matmul %31, %32, %cst_15 {dimension_numbers = #tpu.dot_dimension_numbers<[1], [0], [0], [1], [0, 0, 1, 1], [], []>} : vector<2x8xbf16>, vector<8x1152xbf16>, vector<2x1152xf32> -> vector<2x1152xf32>
    %c0_16 = arith.constant 0 : index
    %c0_17 = arith.constant 0 : index
    %34 = vector.load %arg8[%c0_16, %c0_17] : memref<1x1152xf32, #tpu.memory_space<vmem>>, vector<1x1152xf32>
    %35 = vector.broadcast %34 : vector<1x1152xf32> to vector<2x1152xf32>
    %36 = arith.addf %33, %35 : vector<2x1152xf32>
    %c0_18 = arith.constant 0 : index
    %c0_19 = arith.constant 0 : index
    %37 = vector.load %arg9[%c0_18, %c0_19] : memref<1x384xf32, #tpu.memory_space<vmem>>, vector<1x384xf32>
    %c0_20 = arith.constant 0 : index
    %c0_21 = arith.constant 0 : index
    %38 = vector.load %arg6[%c0_20, %c0_21] : memref<2x3xf32, #tpu.memory_space<vmem>>, vector<2x3xf32>
    %39 = vector.extract_strided_slice %36 {offsets = [0, 0], sizes = [2, 384], strides = [1, 1]} : vector<2x1152xf32> to vector<2x384xf32>
    %40 = vector.extract_strided_slice %38 {offsets = [0, 0], sizes = [2, 1], strides = [1, 1]} : vector<2x3xf32> to vector<2x1xf32>
    %41 = vector.broadcast %40 : vector<2x1xf32> to vector<2x384xf32>
    %42 = arith.mulf %39, %41 : vector<2x384xf32>
    %43 = vector.broadcast %37 : vector<1x384xf32> to vector<2x384xf32>
    %44 = arith.addf %42, %43 : vector<2x384xf32>
    %45 = vector.extract_strided_slice %44 {offsets = [0, 0], sizes = [2, 128], strides = [1, 1]} : vector<2x384xf32> to vector<2x128xf32>
    %46 = vector.extract_strided_slice %44 {offsets = [0, 128], sizes = [2, 128], strides = [1, 1]} : vector<2x384xf32> to vector<2x128xf32>
    %47 = vector.extract_strided_slice %44 {offsets = [0, 256], sizes = [2, 128], strides = [1, 1]} : vector<2x384xf32> to vector<2x128xf32>
    %48 = vector.extract_strided_slice %36 {offsets = [0, 384], sizes = [2, 384], strides = [1, 1]} : vector<2x1152xf32> to vector<2x384xf32>
    %49 = vector.extract_strided_slice %38 {offsets = [0, 1], sizes = [2, 1], strides = [1, 1]} : vector<2x3xf32> to vector<2x1xf32>
    %50 = vector.broadcast %49 : vector<2x1xf32> to vector<2x384xf32>
    %51 = arith.mulf %48, %50 : vector<2x384xf32>
    %52 = vector.broadcast %37 : vector<1x384xf32> to vector<2x384xf32>
    %53 = arith.addf %51, %52 : vector<2x384xf32>
    %54 = vector.extract_strided_slice %53 {offsets = [0, 0], sizes = [2, 128], strides = [1, 1]} : vector<2x384xf32> to vector<2x128xf32>
    %55 = vector.extract_strided_slice %53 {offsets = [0, 128], sizes = [2, 128], strides = [1, 1]} : vector<2x384xf32> to vector<2x128xf32>
    %56 = vector.extract_strided_slice %53 {offsets = [0, 256], sizes = [2, 128], strides = [1, 1]} : vector<2x384xf32> to vector<2x128xf32>
    %57 = vector.extract_strided_slice %36 {offsets = [0, 768], sizes = [2, 384], strides = [1, 1]} : vector<2x1152xf32> to vector<2x384xf32>
    %58 = vector.extract_strided_slice %38 {offsets = [0, 2], sizes = [2, 1], strides = [1, 1]} : vector<2x3xf32> to vector<2x1xf32>
    %59 = vector.broadcast %58 : vector<2x1xf32> to vector<2x384xf32>
    %60 = arith.mulf %57, %59 : vector<2x384xf32>
    %61 = vector.broadcast %37 : vector<1x384xf32> to vector<2x384xf32>
    %62 = arith.addf %60, %61 : vector<2x384xf32>
    %63 = vector.extract_strided_slice %62 {offsets = [0, 0], sizes = [2, 128], strides = [1, 1]} : vector<2x384xf32> to vector<2x128xf32>
    %64 = vector.extract_strided_slice %62 {offsets = [0, 128], sizes = [2, 128], strides = [1, 1]} : vector<2x384xf32> to vector<2x128xf32>
    %65 = vector.extract_strided_slice %62 {offsets = [0, 256], sizes = [2, 128], strides = [1, 1]} : vector<2x384xf32> to vector<2x128xf32>
    %66 = vector.shape_cast %45 : vector<2x128xf32> to vector<2x1x128xf32>
    %67 = vector.shape_cast %54 : vector<2x128xf32> to vector<2x1x128xf32>
    %68 = vector.shape_cast %63 : vector<2x128xf32> to vector<2x1x128xf32>
    %69 = tpu.concatenate %66, %67, %68 in 1 : vector<2x1x128xf32>, vector<2x1x128xf32>, vector<2x1x128xf32> -> vector<2x3x128xf32>
    %70 = vector.shape_cast %46 : vector<2x128xf32> to vector<2x1x128xf32>
    %71 = vector.shape_cast %55 : vector<2x128xf32> to vector<2x1x128xf32>
    %72 = vector.shape_cast %64 : vector<2x128xf32> to vector<2x1x128xf32>
    %73 = tpu.concatenate %70, %71, %72 in 1 : vector<2x1x128xf32>, vector<2x1x128xf32>, vector<2x1x128xf32> -> vector<2x3x128xf32>
    %74 = vector.shape_cast %47 : vector<2x128xf32> to vector<2x1x128xf32>
    %75 = vector.shape_cast %56 : vector<2x128xf32> to vector<2x1x128xf32>
    %76 = vector.shape_cast %65 : vector<2x128xf32> to vector<2x1x128xf32>
    %77 = tpu.concatenate %74, %75, %76 in 1 : vector<2x1x128xf32>, vector<2x1x128xf32>, vector<2x1x128xf32> -> vector<2x3x128xf32>
    %78 = vector.extract_strided_slice %69 {offsets = [0, 0, 0], sizes = [2, 3, 64], strides = [1, 1, 1]} : vector<2x3x128xf32> to vector<2x3x64xf32>
    %79 = arith.truncf %78 : vector<2x3x64xf32> to vector<2x3x64xbf16>
    %80 = vector.extract_strided_slice %73 {offsets = [0, 0, 0], sizes = [2, 3, 64], strides = [1, 1, 1]} : vector<2x3x128xf32> to vector<2x3x64xf32>
    %81 = arith.truncf %80 : vector<2x3x64xf32> to vector<2x3x64xbf16>
    "tpu.trace_start"() <{level = 10 : i32, message = "bad,bcd->bac"}> : () -> ()
    %cst_22 = arith.constant dense<0.000000e+00> : vector<2x3x3xf32>
    %82 = tpu.matmul %79, %81, %cst_22 {dimension_numbers = #tpu.dot_dimension_numbers<[2], [2], [1], [1], [0, 0, 0, 1, 1, 1], [0], [0]>} : vector<2x3x64xbf16>, vector<2x3x64xbf16>, vector<2x3x3xf32> -> vector<2x3x3xf32>
    "tpu.trace_stop"() : () -> ()
    %cst_23 = arith.constant dense<0xFF800000> : vector<2x3xf32>
    %83 = vector.multi_reduction <maximumf>, %82, %cst_23 [2] : vector<2x3x3xf32> to vector<2x3xf32>
    %84 = vector.shape_cast %83 : vector<2x3xf32> to vector<2x3x1xf32>
    %85 = vector.broadcast %84 : vector<2x3x1xf32> to vector<2x3x3xf32>
    %86 = arith.subf %82, %85 : vector<2x3x3xf32>
    %87 = math.exp %86 : vector<2x3x3xf32>
    %cst_24 = arith.constant dense<0.000000e+00> : vector<2x3xf32>
    %88 = vector.multi_reduction <add>, %87, %cst_24 [2] : vector<2x3x3xf32> to vector<2x3xf32>
    %89 = vector.shape_cast %88 : vector<2x3xf32> to vector<2x3x1xf32>
    %90 = tpu.reciprocal %89 {approx = true} : vector<2x3x1xf32> -> vector<2x3x1xf32>
    %91 = vector.broadcast %90 : vector<2x3x1xf32> to vector<2x3x3xf32>
    %92 = arith.mulf %87, %91 : vector<2x3x3xf32>
    %93 = arith.truncf %92 : vector<2x3x3xf32> to vector<2x3x3xbf16>
    %94 = vector.extract_strided_slice %77 {offsets = [0, 0, 0], sizes = [2, 3, 64], strides = [1, 1, 1]} : vector<2x3x128xf32> to vector<2x3x64xf32>
    %95 = arith.truncf %94 : vector<2x3x64xf32> to vector<2x3x64xbf16>
    "tpu.trace_start"() <{level = 10 : i32, message = "bac,bcd->bad"}> : () -> ()
    %cst_25 = arith.constant dense<0.000000e+00> : vector<2x3x64xf32>
    %96 = tpu.matmul %93, %95, %cst_25 {dimension_numbers = #tpu.dot_dimension_numbers<[2], [1], [1], [2], [0, 0, 0, 1, 1, 2], [0], [0]>} : vector<2x3x3xbf16>, vector<2x3x64xbf16>, vector<2x3x64xf32> -> vector<2x3x64xf32>
    "tpu.trace_stop"() : () -> ()
    %97 = vector.extract_strided_slice %69 {offsets = [0, 0, 64], sizes = [2, 3, 64], strides = [1, 1, 1]} : vector<2x3x128xf32> to vector<2x3x64xf32>
    %98 = arith.truncf %97 : vector<2x3x64xf32> to vector<2x3x64xbf16>
    %99 = vector.extract_strided_slice %73 {offsets = [0, 0, 64], sizes = [2, 3, 64], strides = [1, 1, 1]} : vector<2x3x128xf32> to vector<2x3x64xf32>
    %100 = arith.truncf %99 : vector<2x3x64xf32> to vector<2x3x64xbf16>
    "tpu.trace_start"() <{level = 10 : i32, message = "bad,bcd->bac"}> : () -> ()
    %cst_26 = arith.constant dense<0.000000e+00> : vector<2x3x3xf32>
    %101 = tpu.matmul %98, %100, %cst_26 {dimension_numbers = #tpu.dot_dimension_numbers<[2], [2], [1], [1], [0, 0, 0, 1, 1, 1], [0], [0]>} : vector<2x3x64xbf16>, vector<2x3x64xbf16>, vector<2x3x3xf32> -> vector<2x3x3xf32>
    "tpu.trace_stop"() : () -> ()
    %cst_27 = arith.constant dense<0xFF800000> : vector<2x3xf32>
    %102 = vector.multi_reduction <maximumf>, %101, %cst_27 [2] : vector<2x3x3xf32> to vector<2x3xf32>
    %103 = vector.shape_cast %102 : vector<2x3xf32> to vector<2x3x1xf32>
    %104 = vector.broadcast %103 : vector<2x3x1xf32> to vector<2x3x3xf32>
    %105 = arith.subf %101, %104 : vector<2x3x3xf32>
    %106 = math.exp %105 : vector<2x3x3xf32>
    %cst_28 = arith.constant dense<0.000000e+00> : vector<2x3xf32>
    %107 = vector.multi_reduction <add>, %106, %cst_28 [2] : vector<2x3x3xf32> to vector<2x3xf32>
    %108 = vector.shape_cast %107 : vector<2x3xf32> to vector<2x3x1xf32>
    %109 = tpu.reciprocal %108 {approx = true} : vector<2x3x1xf32> -> vector<2x3x1xf32>
    %110 = vector.broadcast %109 : vector<2x3x1xf32> to vector<2x3x3xf32>
    %111 = arith.mulf %106, %110 : vector<2x3x3xf32>
    %112 = arith.truncf %111 : vector<2x3x3xf32> to vector<2x3x3xbf16>
    %113 = vector.extract_strided_slice %77 {offsets = [0, 0, 64], sizes = [2, 3, 64], strides = [1, 1, 1]} : vector<2x3x128xf32> to vector<2x3x64xf32>
    %114 = arith.truncf %113 : vector<2x3x64xf32> to vector<2x3x64xbf16>
    "tpu.trace_start"() <{level = 10 : i32, message = "bac,bcd->bad"}> : () -> ()
    %cst_29 = arith.constant dense<0.000000e+00> : vector<2x3x64xf32>
    %115 = tpu.matmul %112, %114, %cst_29 {dimension_numbers = #tpu.dot_dimension_numbers<[2], [1], [1], [2], [0, 0, 0, 1, 1, 2], [0], [0]>} : vector<2x3x3xbf16>, vector<2x3x64xbf16>, vector<2x3x64xf32> -> vector<2x3x64xf32>
    "tpu.trace_stop"() : () -> ()
    %116 = tpu.concatenate %96, %115 in 2 : vector<2x3x64xf32>, vector<2x3x64xf32> -> vector<2x3x128xf32>
    %c0_30 = arith.constant 0 : index
    %c0_31 = arith.constant 0 : index
    %117 = vector.load %arg11[%c0_30, %c0_31] : memref<1x128xf32, #tpu.memory_space<vmem>>, vector<1x128xf32>
    %118 = vector.extract_strided_slice %116 {offsets = [0, 0, 0], sizes = [2, 1, 128], strides = [1, 1, 1]} : vector<2x3x128xf32> to vector<2x1x128xf32>
    %119 = vector.shape_cast %118 : vector<2x1x128xf32> to vector<2x128xf32>
    %120 = arith.truncf %119 : vector<2x128xf32> to vector<2x128xbf16>
    %c0_32 = arith.constant 0 : index
    %c0_33 = arith.constant 0 : index
    %121 = vector.load %arg10[%c0_32, %c0_33] : memref<384x128xbf16, #tpu.memory_space<vmem>>, vector<128x128xbf16>
    %cst_34 = arith.constant dense<0.000000e+00> : vector<2x128xf32>
    %122 = tpu.matmul %120, %121, %cst_34 {dimension_numbers = #tpu.dot_dimension_numbers<[1], [0], [0], [1], [0, 0, 1, 1], [], []>} : vector<2x128xbf16>, vector<128x128xbf16>, vector<2x128xf32> -> vector<2x128xf32>
    %123 = vector.broadcast %117 : vector<1x128xf32> to vector<2x128xf32>
    %124 = arith.addf %123, %122 : vector<2x128xf32>
    %125 = vector.extract_strided_slice %116 {offsets = [0, 1, 0], sizes = [2, 1, 128], strides = [1, 1, 1]} : vector<2x3x128xf32> to vector<2x1x128xf32>
    %126 = vector.shape_cast %125 : vector<2x1x128xf32> to vector<2x128xf32>
    %127 = arith.truncf %126 : vector<2x128xf32> to vector<2x128xbf16>
    %c128 = arith.constant 128 : index
    %c0_35 = arith.constant 0 : index
    %128 = vector.load %arg10[%c128, %c0_35] : memref<384x128xbf16, #tpu.memory_space<vmem>>, vector<128x128xbf16>
    %cst_36 = arith.constant dense<0.000000e+00> : vector<2x128xf32>
    %129 = tpu.matmul %127, %128, %cst_36 {dimension_numbers = #tpu.dot_dimension_numbers<[1], [0], [0], [1], [0, 0, 1, 1], [], []>} : vector<2x128xbf16>, vector<128x128xbf16>, vector<2x128xf32> -> vector<2x128xf32>
    %130 = arith.addf %124, %129 : vector<2x128xf32>
    %131 = vector.extract_strided_slice %116 {offsets = [0, 2, 0], sizes = [2, 1, 128], strides = [1, 1, 1]} : vector<2x3x128xf32> to vector<2x1x128xf32>
    %132 = vector.shape_cast %131 : vector<2x1x128xf32> to vector<2x128xf32>
    %133 = arith.truncf %132 : vector<2x128xf32> to vector<2x128xbf16>
    %c256 = arith.constant 256 : index
    %c0_37 = arith.constant 0 : index
    %134 = vector.load %arg10[%c256, %c0_37] : memref<384x128xbf16, #tpu.memory_space<vmem>>, vector<128x128xbf16>
    %cst_38 = arith.constant dense<0.000000e+00> : vector<2x128xf32>
    %135 = tpu.matmul %133, %134, %cst_38 {dimension_numbers = #tpu.dot_dimension_numbers<[1], [0], [0], [1], [0, 0, 1, 1], [], []>} : vector<2x128xbf16>, vector<128x128xbf16>, vector<2x128xf32> -> vector<2x128xf32>
    %136 = arith.addf %130, %135 : vector<2x128xf32>
    %137 = arith.addf %29, %136 : vector<2x128xf32>
    %138 = arith.negf %137 : vector<2x128xf32>
    %139 = math.exp %138 : vector<2x128xf32>
    %cst_39 = arith.constant 1.000000e+00 : f32
    %140 = vector.broadcast %cst_39 : f32 to vector<2x128xf32>
    %141 = arith.addf %140, %139 : vector<2x128xf32>
    %142 = arith.divf %140, %141 : vector<2x128xf32>
    %143 = arith.mulf %137, %142 : vector<2x128xf32>
    %c0_40 = arith.constant 0 : index
    %c0_41 = arith.constant 0 : index
    %144 = vector.load %arg12[%c0_40, %c0_41] : memref<2x128xf32, #tpu.memory_space<vmem>>, vector<2x128xf32>
    tpu.vector_store %arg12[%c0_40, %c0_41], %143 {strides = array<i32>} : memref<2x128xf32, #tpu.memory_space<vmem>>, vector<2x128xf32>,
    return
  }
}

module attributes {stable_mosaic.version = 11 : i64} {
  func.func @_adaln_kernel(%arg0: i32, %arg1: memref<2x128xf32, #tpu.memory_space<vmem>>, %arg2: memref<128x768xbf16, #tpu.memory_space<vmem>>, %arg3: memref<1x768xf32, #tpu.memory_space<vmem>>, %arg4: memref<2x768xf32, #tpu.memory_space<vmem>>) attributes {dimension_semantics = [#tpu.dimension_semantics<parallel>], iteration_bounds = array<i64: 3>, scalar_prefetch = 0 : i64, scratch_operands = 0 : i64, tpu.core_type = #tpu.core_type<tc>, window_params = [{pipeline_mode = #tpu.pipeline_mode<synchronous>, transform_indices = @transform_0, window_bounds = array<i64: 2, 128>}, {transform_indices = @transform_1, window_bounds = array<i64: 128, 768>}, {transform_indices = @transform_2, window_bounds = array<i64: 1, 768>}, {transform_indices = @transform_3, window_bounds = array<i64: 2, 768>}]} {
    %c0 = arith.constant 0 : index
    %c0_0 = arith.constant 0 : index
    %0 = vector.load %arg1[%c0, %c0_0] : memref<2x128xf32, #tpu.memory_space<vmem>>, vector<2x128xf32>
    %1 = arith.truncf %0 : vector<2x128xf32> to vector<2x128xbf16>
    %c0_1 = arith.constant 0 : index
    %c0_2 = arith.constant 0 : index
    %2 = vector.load %arg2[%c0_1, %c0_2] : memref<128x768xbf16, #tpu.memory_space<vmem>>, vector<128x768xbf16>
    %cst = arith.constant dense<0.000000e+00> : vector<2x768xf32>
    %3 = tpu.matmul %1, %2, %cst {dimension_numbers = #tpu.dot_dimension_numbers<[1], [0], [0], [1], [0, 0, 1, 1], [], []>} : vector<2x128xbf16>, vector<128x768xbf16>, vector<2x768xf32> -> vector<2x768xf32>
    %c0_3 = arith.constant 0 : index
    %c0_4 = arith.constant 0 : index
    %4 = vector.load %arg3[%c0_3, %c0_4] : memref<1x768xf32, #tpu.memory_space<vmem>>, vector<1x768xf32>
    %5 = vector.broadcast %4 : vector<1x768xf32> to vector<2x768xf32>
    %6 = arith.addf %3, %5 : vector<2x768xf32>
    %c0_5 = arith.constant 0 : index
    %c0_6 = arith.constant 0 : index
    %7 = vector.load %arg4[%c0_5, %c0_6] : memref<2x768xf32, #tpu.memory_space<vmem>>, vector<2x768xf32>
    tpu.vector_store %arg4[%c0_5, %c0_6], %6 {strides = array<i32>} : memref<2x768xf32, #tpu.memory_space<vmem>>, vector<2x768xf32>,
    return
  }
  func.func @transform_0(%arg0: i32) -> (i32, i32) {
    %c0_i32 = arith.constant 0 : i32
    %c0_i32_0 = arith.constant 0 : i32
    %c0_i32_1 = arith.constant 0 : i32
    return %c0_i32, %c0_i32_0 : i32, i32
  }
  func.func @transform_1(%arg0: i32) -> (i32, i32) {
    %c0_i32 = arith.constant 0 : i32
    %c0_i32_0 = arith.constant 0 : i32
    return %c0_i32, %arg0 : i32, i32
  }
  func.func @transform_2(%arg0: i32) -> (i32, i32) {
    %c0_i32 = arith.constant 0 : i32
    %c0_i32_0 = arith.constant 0 : i32
    return %c0_i32, %arg0 : i32, i32
  }
  func.func @transform_3(%arg0: i32) -> (i32, i32) {
    %c0_i32 = arith.constant 0 : i32
    %c0_i32_0 = arith.constant 0 : i32
    return %c0_i32, %arg0 : i32, i32
  }
}

module attributes {stable_mosaic.version = 11 : i64} {
  func.func @_stem_kernel(%arg0: i32, %arg1: memref<1x16x8xf32, #tpu.memory_space<vmem>>, %arg2: memref<8x128xbf16, #tpu.memory_space<vmem>>, %arg3: memref<1x128xf32, #tpu.memory_space<vmem>>, %arg4: memref<16x128xf32, #tpu.memory_space<vmem>>, %arg5: memref<1x16x128xf32, #tpu.memory_space<vmem>>) attributes {dimension_semantics = [#tpu.dimension_semantics<parallel>], iteration_bounds = array<i64: 2>, scalar_prefetch = 0 : i64, scratch_operands = 0 : i64, tpu.core_type = #tpu.core_type<tc>, window_params = [{transform_indices = @transform_0, window_bounds = array<i64: 1, 16, 8>}, {pipeline_mode = #tpu.pipeline_mode<synchronous>, transform_indices = @transform_1, window_bounds = array<i64: 8, 128>}, {pipeline_mode = #tpu.pipeline_mode<synchronous>, transform_indices = @transform_2, window_bounds = array<i64: 1, 128>}, {pipeline_mode = #tpu.pipeline_mode<synchronous>, transform_indices = @transform_3, window_bounds = array<i64: 16, 128>}, {transform_indices = @transform_4, window_bounds = array<i64: 1, 16, 128>}]} {
    %c0 = arith.constant 0 : index
    %c0_0 = arith.constant 0 : index
    %c0_1 = arith.constant 0 : index
    %0 = vector.load %arg1[%c0, %c0_0, %c0_1] : memref<1x16x8xf32, #tpu.memory_space<vmem>>, vector<1x16x8xf32>
    %1 = vector.shape_cast %0 : vector<1x16x8xf32> to vector<16x8xf32>
    %2 = arith.truncf %1 : vector<16x8xf32> to vector<16x8xbf16>
    %c0_2 = arith.constant 0 : index
    %c0_3 = arith.constant 0 : index
    %3 = vector.load %arg2[%c0_2, %c0_3] : memref<8x128xbf16, #tpu.memory_space<vmem>>, vector<8x128xbf16>
    %cst = arith.constant dense<0.000000e+00> : vector<16x128xf32>
    %4 = tpu.matmul %2, %3, %cst {dimension_numbers = #tpu.dot_dimension_numbers<[1], [0], [0], [1], [0, 0, 1, 1], [], []>} : vector<16x8xbf16>, vector<8x128xbf16>, vector<16x128xf32> -> vector<16x128xf32>
    %c0_4 = arith.constant 0 : index
    %c0_5 = arith.constant 0 : index
    %5 = vector.load %arg3[%c0_4, %c0_5] : memref<1x128xf32, #tpu.memory_space<vmem>>, vector<1x128xf32>
    %6 = vector.broadcast %5 : vector<1x128xf32> to vector<16x128xf32>
    %7 = arith.addf %4, %6 : vector<16x128xf32>
    %c0_6 = arith.constant 0 : index
    %c0_7 = arith.constant 0 : index
    %8 = vector.load %arg4[%c0_6, %c0_7] : memref<16x128xf32, #tpu.memory_space<vmem>>, vector<16x128xf32>
    %9 = arith.addf %7, %8 : vector<16x128xf32>
    %c0_8 = arith.constant 0 : index
    %c0_9 = arith.constant 0 : index
    %c0_10 = arith.constant 0 : index
    %10 = vector.load %arg5[%c0_8, %c0_9, %c0_10] : memref<1x16x128xf32, #tpu.memory_space<vmem>>, vector<1x16x128xf32>
    %11 = vector.shape_cast %10 : vector<1x16x128xf32> to vector<16x128xf32>
    %12 = vector.shape_cast %9 : vector<16x128xf32> to vector<1x16x128xf32>
    tpu.vector_store %arg5[%c0_8, %c0_9, %c0_10], %12 {strides = array<i32>} : memref<1x16x128xf32, #tpu.memory_space<vmem>>, vector<1x16x128xf32>,
    return
  }
  func.func @transform_0(%arg0: i32) -> (i32, i32, i32) {
    %c0_i32 = arith.constant 0 : i32
    %c0_i32_0 = arith.constant 0 : i32
    %c0_i32_1 = arith.constant 0 : i32
    return %arg0, %c0_i32, %c0_i32_0 : i32, i32, i32
  }
  func.func @transform_1(%arg0: i32) -> (i32, i32) {
    %c0_i32 = arith.constant 0 : i32
    %c0_i32_0 = arith.constant 0 : i32
    %c0_i32_1 = arith.constant 0 : i32
    return %c0_i32, %c0_i32_0 : i32, i32
  }
  func.func @transform_2(%arg0: i32) -> (i32, i32) {
    %c0_i32 = arith.constant 0 : i32
    %c0_i32_0 = arith.constant 0 : i32
    %c0_i32_1 = arith.constant 0 : i32
    return %c0_i32, %c0_i32_0 : i32, i32
  }
  func.func @transform_3(%arg0: i32) -> (i32, i32) {
    %c0_i32 = arith.constant 0 : i32
    %c0_i32_0 = arith.constant 0 : i32
    %c0_i32_1 = arith.constant 0 : i32
    return %c0_i32, %c0_i32_0 : i32, i32
  }
  func.func @transform_4(%arg0: i32) -> (i32, i32, i32) {
    %c0_i32 = arith.constant 0 : i32
    %c0_i32_0 = arith.constant 0 : i32
    %c0_i32_1 = arith.constant 0 : i32
    return %arg0, %c0_i32, %c0_i32_0 : i32, i32, i32
  }
}

module attributes {stable_mosaic.version = 11 : i64} {
  func.func @_dit_blocks_kernel(%arg0: i32, %arg1: i32, %arg2: memref<1x16x128xf32, #tpu.memory_space<vmem>>, %arg3: memref<1x1x6x128xf32, #tpu.memory_space<vmem>>, %arg4: memref<1x128x384xbf16, #tpu.memory_space<vmem>>, %arg5: memref<1x1x384xf32, #tpu.memory_space<vmem>>, %arg6: memref<1x128x128xbf16, #tpu.memory_space<vmem>>, %arg7: memref<1x1x128xf32, #tpu.memory_space<vmem>>, %arg8: memref<1x128x512xbf16, #tpu.memory_space<vmem>>, %arg9: memref<1x1x512xf32, #tpu.memory_space<vmem>>, %arg10: memref<1x512x128xbf16, #tpu.memory_space<vmem>>, %arg11: memref<1x1x128xf32, #tpu.memory_space<vmem>>, %arg12: memref<1x16x128xf32, #tpu.memory_space<vmem>>) attributes {dimension_semantics = [#tpu.dimension_semantics<parallel>, #tpu.dimension_semantics<arbitrary>], iteration_bounds = array<i64: 2, 2>, scalar_prefetch = 0 : i64, scratch_operands = 0 : i64, tpu.core_type = #tpu.core_type<tc>, window_params = [{transform_indices = @transform_0, window_bounds = array<i64: 1, 16, 128>}, {transform_indices = @transform_1, window_bounds = array<i64: 1, 1, 6, 128>}, {transform_indices = @transform_2, window_bounds = array<i64: 1, 128, 384>}, {transform_indices = @transform_3, window_bounds = array<i64: 1, 1, 384>}, {transform_indices = @transform_4, window_bounds = array<i64: 1, 128, 128>}, {transform_indices = @transform_5, window_bounds = array<i64: 1, 1, 128>}, {transform_indices = @transform_6, window_bounds = array<i64: 1, 128, 512>}, {transform_indices = @transform_7, window_bounds = array<i64: 1, 1, 512>}, {transform_indices = @transform_8, window_bounds = array<i64: 1, 512, 128>}, {transform_indices = @transform_9, window_bounds = array<i64: 1, 1, 128>}, {transform_indices = @transform_10, window_bounds = array<i64: 1, 16, 128>}]} {
    %c0_i32 = arith.constant 0 : i32
    %0 = arith.cmpi eq, %arg1, %c0_i32 : i32
    %1 = arith.extui %0 : i1 to i32
    %c0_i32_0 = arith.constant 0 : i32
    %2 = arith.cmpi ne, %1, %c0_i32_0 : i32
    scf.if %2 {
      %c0_61 = arith.constant 0 : index
      %c0_62 = arith.constant 0 : index
      %c0_63 = arith.constant 0 : index
      %157 = vector.load %arg2[%c0_61, %c0_62, %c0_63] : memref<1x16x128xf32, #tpu.memory_space<vmem>>, vector<1x16x128xf32>
      %c0_64 = arith.constant 0 : index
      %c0_65 = arith.constant 0 : index
      %c0_66 = arith.constant 0 : index
      %158 = vector.load %arg12[%c0_64, %c0_65, %c0_66] : memref<1x16x128xf32, #tpu.memory_space<vmem>>, vector<1x16x128xf32>
      tpu.vector_store %arg12[%c0_64, %c0_65, %c0_66], %157 {strides = array<i32>} : memref<1x16x128xf32, #tpu.memory_space<vmem>>, vector<1x16x128xf32>,
    } else {
    }
    %c0 = arith.constant 0 : index
    %c0_1 = arith.constant 0 : index
    %c0_2 = arith.constant 0 : index
    %3 = vector.load %arg12[%c0, %c0_1, %c0_2] : memref<1x16x128xf32, #tpu.memory_space<vmem>>, vector<1x16x128xf32>
    %4 = vector.shape_cast %3 : vector<1x16x128xf32> to vector<16x128xf32>
    %c0_3 = arith.constant 0 : index
    %c0_4 = arith.constant 0 : index
    %c0_5 = arith.constant 0 : index
    %c0_6 = arith.constant 0 : index
    %5 = vector.load %arg3[%c0_3, %c0_4, %c0_5, %c0_6] : memref<1x1x6x128xf32, #tpu.memory_space<vmem>>, vector<1x1x6x128xf32>
    %6 = vector.shape_cast %5 : vector<1x1x6x128xf32> to vector<6x128xf32>
    %7 = vector.extract_strided_slice %6 {offsets = [0, 0], sizes = [1, 128], strides = [1, 1]} : vector<6x128xf32> to vector<1x128xf32>
    %8 = vector.extract_strided_slice %6 {offsets = [1, 0], sizes = [1, 128], strides = [1, 1]} : vector<6x128xf32> to vector<1x128xf32>
    %9 = vector.extract_strided_slice %6 {offsets = [2, 0], sizes = [1, 128], strides = [1, 1]} : vector<6x128xf32> to vector<1x128xf32>
    %10 = vector.extract_strided_slice %6 {offsets = [3, 0], sizes = [1, 128], strides = [1, 1]} : vector<6x128xf32> to vector<1x128xf32>
    %11 = vector.extract_strided_slice %6 {offsets = [4, 0], sizes = [1, 128], strides = [1, 1]} : vector<6x128xf32> to vector<1x128xf32>
    %12 = vector.extract_strided_slice %6 {offsets = [5, 0], sizes = [1, 128], strides = [1, 1]} : vector<6x128xf32> to vector<1x128xf32>
    %cst = arith.constant dense<0.000000e+00> : vector<16xf32>
    %13 = vector.multi_reduction <add>, %4, %cst [1] : vector<16x128xf32> to vector<16xf32>
    %14 = vector.shape_cast %13 : vector<16xf32> to vector<16x1xf32>
    %cst_7 = arith.constant 1.280000e+02 : f32
    %15 = vector.broadcast %cst_7 : f32 to vector<16x1xf32>
    %16 = arith.divf %14, %15 : vector<16x1xf32>
    %17 = vector.broadcast %16 : vector<16x1xf32> to vector<16x128xf32>
    %18 = arith.subf %4, %17 : vector<16x128xf32>
    %19 = arith.mulf %18, %18 : vector<16x128xf32>
    %cst_8 = arith.constant dense<0.000000e+00> : vector<16xf32>
    %20 = vector.multi_reduction <add>, %19, %cst_8 [1] : vector<16x128xf32> to vector<16xf32>
    %21 = vector.shape_cast %20 : vector<16xf32> to vector<16x1xf32>
    %cst_9 = arith.constant 1.280000e+02 : f32
    %22 = vector.broadcast %cst_9 : f32 to vector<16x1xf32>
    %23 = arith.divf %21, %22 : vector<16x1xf32>
    %24 = vector.broadcast %16 : vector<16x1xf32> to vector<16x128xf32>
    %25 = arith.subf %4, %24 : vector<16x128xf32>
    %cst_10 = arith.constant 9.99999997E-7 : f32
    %26 = vector.broadcast %cst_10 : f32 to vector<16x1xf32>
    %27 = arith.addf %23, %26 : vector<16x1xf32>
    %28 = math.rsqrt %27 : vector<16x1xf32>
    %29 = vector.broadcast %28 : vector<16x1xf32> to vector<16x128xf32>
    %30 = arith.mulf %25, %29 : vector<16x128xf32>
    %cst_11 = arith.constant 1.000000e+00 : f32
    %31 = vector.broadcast %cst_11 : f32 to vector<1x128xf32>
    %32 = arith.addf %31, %8 : vector<1x128xf32>
    %33 = vector.broadcast %32 : vector<1x128xf32> to vector<16x128xf32>
    %34 = arith.mulf %30, %33 : vector<16x128xf32>
    %35 = vector.broadcast %7 : vector<1x128xf32> to vector<16x128xf32>
    %36 = arith.addf %34, %35 : vector<16x128xf32>
    %37 = arith.truncf %36 : vector<16x128xf32> to vector<16x128xbf16>
    %c0_12 = arith.constant 0 : index
    %c0_13 = arith.constant 0 : index
    %c0_14 = arith.constant 0 : index
    %38 = vector.load %arg4[%c0_12, %c0_13, %c0_14] : memref<1x128x384xbf16, #tpu.memory_space<vmem>>, vector<1x128x384xbf16>
    %39 = vector.shape_cast %38 : vector<1x128x384xbf16> to vector<128x384xbf16>
    %cst_15 = arith.constant dense<0.000000e+00> : vector<16x384xf32>
    %40 = tpu.matmul %37, %39, %cst_15 {dimension_numbers = #tpu.dot_dimension_numbers<[1], [0], [0], [1], [0, 0, 1, 1], [], []>} : vector<16x128xbf16>, vector<128x384xbf16>, vector<16x384xf32> -> vector<16x384xf32>
    %c0_16 = arith.constant 0 : index
    %c0_17 = arith.constant 0 : index
    %c0_18 = arith.constant 0 : index
    %41 = vector.load %arg5[%c0_16, %c0_17, %c0_18] : memref<1x1x384xf32, #tpu.memory_space<vmem>>, vector<1x1x384xf32>
    %42 = vector.shape_cast %41 : vector<1x1x384xf32> to vector<1x384xf32>
    %43 = vector.broadcast %42 : vector<1x384xf32> to vector<16x384xf32>
    %44 = arith.addf %40, %43 : vector<16x384xf32>
    %45 = vector.extract_strided_slice %44 {offsets = [0, 0], sizes = [16, 128], strides = [1, 1]} : vector<16x384xf32> to vector<16x128xf32>
    %46 = vector.extract_strided_slice %44 {offsets = [0, 128], sizes = [16, 128], strides = [1, 1]} : vector<16x384xf32> to vector<16x128xf32>
    %47 = vector.extract_strided_slice %44 {offsets = [0, 256], sizes = [16, 128], strides = [1, 1]} : vector<16x384xf32> to vector<16x128xf32>
    %48 = vector.extract_strided_slice %45 {offsets = [0, 0], sizes = [16, 64], strides = [1, 1]} : vector<16x128xf32> to vector<16x64xf32>
    %49 = arith.truncf %48 : vector<16x64xf32> to vector<16x64xbf16>
    %50 = vector.extract_strided_slice %46 {offsets = [0, 0], sizes = [16, 64], strides = [1, 1]} : vector<16x128xf32> to vector<16x64xf32>
    %51 = arith.truncf %50 : vector<16x64xf32> to vector<16x64xbf16>
    %cst_19 = arith.constant dense<0.000000e+00> : vector<16x16xf32>
    %52 = tpu.matmul %49, %51, %cst_19 {dimension_numbers = #tpu.dot_dimension_numbers<[1], [1], [0], [0], [0, 0, 1, 0], [], []>} : vector<16x64xbf16>, vector<16x64xbf16>, vector<16x16xf32> -> vector<16x16xf32>
    %cst_20 = arith.constant dense<0xFF800000> : vector<16xf32>
    %53 = vector.multi_reduction <maximumf>, %52, %cst_20 [1] : vector<16x16xf32> to vector<16xf32>
    %54 = vector.shape_cast %53 : vector<16xf32> to vector<16x1xf32>
    %55 = vector.broadcast %54 : vector<16x1xf32> to vector<16x16xf32>
    %56 = arith.subf %52, %55 : vector<16x16xf32>
    %57 = math.exp %56 : vector<16x16xf32>
    %cst_21 = arith.constant dense<0.000000e+00> : vector<16xf32>
    %58 = vector.multi_reduction <add>, %57, %cst_21 [1] : vector<16x16xf32> to vector<16xf32>
    %59 = vector.shape_cast %58 : vector<16xf32> to vector<16x1xf32>
    %60 = tpu.reciprocal %59 {approx = true} : vector<16x1xf32> -> vector<16x1xf32>
    %61 = vector.broadcast %60 : vector<16x1xf32> to vector<16x16xf32>
    %62 = arith.mulf %57, %61 : vector<16x16xf32>
    %63 = arith.truncf %62 : vector<16x16xf32> to vector<16x16xbf16>
    %64 = vector.extract_strided_slice %47 {offsets = [0, 0], sizes = [16, 64], strides = [1, 1]} : vector<16x128xf32> to vector<16x64xf32>
    %65 = arith.truncf %64 : vector<16x64xf32> to vector<16x64xbf16>
    %cst_22 = arith.constant dense<0.000000e+00> : vector<16x64xf32>
    %66 = tpu.matmul %63, %65, %cst_22 {dimension_numbers = #tpu.dot_dimension_numbers<[1], [0], [0], [1], [0, 0, 1, 1], [], []>} : vector<16x16xbf16>, vector<16x64xbf16>, vector<16x64xf32> -> vector<16x64xf32>
    %67 = vector.extract_strided_slice %45 {offsets = [0, 64], sizes = [16, 64], strides = [1, 1]} : vector<16x128xf32> to vector<16x64xf32>
    %68 = arith.truncf %67 : vector<16x64xf32> to vector<16x64xbf16>
    %69 = vector.extract_strided_slice %46 {offsets = [0, 64], sizes = [16, 64], strides = [1, 1]} : vector<16x128xf32> to vector<16x64xf32>
    %70 = arith.truncf %69 : vector<16x64xf32> to vector<16x64xbf16>
    %cst_23 = arith.constant dense<0.000000e+00> : vector<16x16xf32>
    %71 = tpu.matmul %68, %70, %cst_23 {dimension_numbers = #tpu.dot_dimension_numbers<[1], [1], [0], [0], [0, 0, 1, 0], [], []>} : vector<16x64xbf16>, vector<16x64xbf16>, vector<16x16xf32> -> vector<16x16xf32>
    %cst_24 = arith.constant dense<0xFF800000> : vector<16xf32>
    %72 = vector.multi_reduction <maximumf>, %71, %cst_24 [1] : vector<16x16xf32> to vector<16xf32>
    %73 = vector.shape_cast %72 : vector<16xf32> to vector<16x1xf32>
    %74 = vector.broadcast %73 : vector<16x1xf32> to vector<16x16xf32>
    %75 = arith.subf %71, %74 : vector<16x16xf32>
    %76 = math.exp %75 : vector<16x16xf32>
    %cst_25 = arith.constant dense<0.000000e+00> : vector<16xf32>
    %77 = vector.multi_reduction <add>, %76, %cst_25 [1] : vector<16x16xf32> to vector<16xf32>
    %78 = vector.shape_cast %77 : vector<16xf32> to vector<16x1xf32>
    %79 = tpu.reciprocal %78 {approx = true} : vector<16x1xf32> -> vector<16x1xf32>
    %80 = vector.broadcast %79 : vector<16x1xf32> to vector<16x16xf32>
    %81 = arith.mulf %76, %80 : vector<16x16xf32>
    %82 = arith.truncf %81 : vector<16x16xf32> to vector<16x16xbf16>
    %83 = vector.extract_strided_slice %47 {offsets = [0, 64], sizes = [16, 64], strides = [1, 1]} : vector<16x128xf32> to vector<16x64xf32>
    %84 = arith.truncf %83 : vector<16x64xf32> to vector<16x64xbf16>
    %cst_26 = arith.constant dense<0.000000e+00> : vector<16x64xf32>
    %85 = tpu.matmul %82, %84, %cst_26 {dimension_numbers = #tpu.dot_dimension_numbers<[1], [0], [0], [1], [0, 0, 1, 1], [], []>} : vector<16x16xbf16>, vector<16x64xbf16>, vector<16x64xf32> -> vector<16x64xf32>
    %86 = tpu.concatenate %66, %85 in 1 : vector<16x64xf32>, vector<16x64xf32> -> vector<16x128xf32>
    %87 = arith.truncf %86 : vector<16x128xf32> to vector<16x128xbf16>
    %c0_27 = arith.constant 0 : index
    %c0_28 = arith.constant 0 : index
    %c0_29 = arith.constant 0 : index
    %88 = vector.load %arg6[%c0_27, %c0_28, %c0_29] : memref<1x128x128xbf16, #tpu.memory_space<vmem>>, vector<1x128x128xbf16>
    %89 = vector.shape_cast %88 : vector<1x128x128xbf16> to vector<128x128xbf16>
    %cst_30 = arith.constant dense<0.000000e+00> : vector<16x128xf32>
    %90 = tpu.matmul %87, %89, %cst_30 {dimension_numbers = #tpu.dot_dimension_numbers<[1], [0], [0], [1], [0, 0, 1, 1], [], []>} : vector<16x128xbf16>, vector<128x128xbf16>, vector<16x128xf32> -> vector<16x128xf32>
    %c0_31 = arith.constant 0 : index
    %c0_32 = arith.constant 0 : index
    %c0_33 = arith.constant 0 : index
    %91 = vector.load %arg7[%c0_31, %c0_32, %c0_33] : memref<1x1x128xf32, #tpu.memory_space<vmem>>, vector<1x1x128xf32>
    %92 = vector.shape_cast %91 : vector<1x1x128xf32> to vector<1x128xf32>
    %93 = vector.broadcast %92 : vector<1x128xf32> to vector<16x128xf32>
    %94 = arith.addf %90, %93 : vector<16x128xf32>
    %95 = vector.broadcast %9 : vector<1x128xf32> to vector<16x128xf32>
    %96 = arith.mulf %95, %94 : vector<16x128xf32>
    %97 = arith.addf %36, %96 : vector<16x128xf32>
    %cst_34 = arith.constant dense<0.000000e+00> : vector<16xf32>
    %98 = vector.multi_reduction <add>, %97, %cst_34 [1] : vector<16x128xf32> to vector<16xf32>
    %99 = vector.shape_cast %98 : vector<16xf32> to vector<16x1xf32>
    %cst_35 = arith.constant 1.280000e+02 : f32
    %100 = vector.broadcast %cst_35 : f32 to vector<16x1xf32>
    %101 = arith.divf %99, %100 : vector<16x1xf32>
    %102 = vector.broadcast %101 : vector<16x1xf32> to vector<16x128xf32>
    %103 = arith.subf %97, %102 : vector<16x128xf32>
    %104 = arith.mulf %103, %103 : vector<16x128xf32>
    %cst_36 = arith.constant dense<0.000000e+00> : vector<16xf32>
    %105 = vector.multi_reduction <add>, %104, %cst_36 [1] : vector<16x128xf32> to vector<16xf32>
    %106 = vector.shape_cast %105 : vector<16xf32> to vector<16x1xf32>
    %cst_37 = arith.constant 1.280000e+02 : f32
    %107 = vector.broadcast %cst_37 : f32 to vector<16x1xf32>
    %108 = arith.divf %106, %107 : vector<16x1xf32>
    %109 = vector.broadcast %101 : vector<16x1xf32> to vector<16x128xf32>
    %110 = arith.subf %97, %109 : vector<16x128xf32>
    %cst_38 = arith.constant 9.99999997E-7 : f32
    %111 = vector.broadcast %cst_38 : f32 to vector<16x1xf32>
    %112 = arith.addf %108, %111 : vector<16x1xf32>
    %113 = math.rsqrt %112 : vector<16x1xf32>
    %114 = vector.broadcast %113 : vector<16x1xf32> to vector<16x128xf32>
    %115 = arith.mulf %110, %114 : vector<16x128xf32>
    %cst_39 = arith.constant 1.000000e+00 : f32
    %116 = vector.broadcast %cst_39 : f32 to vector<1x128xf32>
    %117 = arith.addf %116, %11 : vector<1x128xf32>
    %118 = vector.broadcast %117 : vector<1x128xf32> to vector<16x128xf32>
    %119 = arith.mulf %115, %118 : vector<16x128xf32>
    %120 = vector.broadcast %10 : vector<1x128xf32> to vector<16x128xf32>
    %121 = arith.addf %119, %120 : vector<16x128xf32>
    %122 = arith.truncf %121 : vector<16x128xf32> to vector<16x128xbf16>
    %c0_40 = arith.constant 0 : index
    %c0_41 = arith.constant 0 : index
    %c0_42 = arith.constant 0 : index
    %123 = vector.load %arg8[%c0_40, %c0_41, %c0_42] : memref<1x128x512xbf16, #tpu.memory_space<vmem>>, vector<1x128x512xbf16>
    %124 = vector.shape_cast %123 : vector<1x128x512xbf16> to vector<128x512xbf16>
    %cst_43 = arith.constant dense<0.000000e+00> : vector<16x512xf32>
    %125 = tpu.matmul %122, %124, %cst_43 {dimension_numbers = #tpu.dot_dimension_numbers<[1], [0], [0], [1], [0, 0, 1, 1], [], []>} : vector<16x128xbf16>, vector<128x512xbf16>, vector<16x512xf32> -> vector<16x512xf32>
    %c0_44 = arith.constant 0 : index
    %c0_45 = arith.constant 0 : index
    %c0_46 = arith.constant 0 : index
    %126 = vector.load %arg9[%c0_44, %c0_45, %c0_46] : memref<1x1x512xf32, #tpu.memory_space<vmem>>, vector<1x1x512xf32>
    %127 = vector.shape_cast %126 : vector<1x1x512xf32> to vector<1x512xf32>
    %128 = vector.broadcast %127 : vector<1x512xf32> to vector<16x512xf32>
    %129 = arith.addf %125, %128 : vector<16x512xf32>
    %cst_47 = arith.constant 5.000000e-01 : f32
    %130 = vector.broadcast %cst_47 : f32 to vector<16x512xf32>
    %131 = arith.mulf %130, %129 : vector<16x512xf32>
    %cst_48 = arith.constant 4.471500e-02 : f32
    %132 = vector.broadcast %cst_48 : f32 to vector<16x512xf32>
    %133 = arith.mulf %132, %129 : vector<16x512xf32>
    %134 = arith.mulf %133, %129 : vector<16x512xf32>
    %135 = arith.mulf %134, %129 : vector<16x512xf32>
    %136 = arith.addf %129, %135 : vector<16x512xf32>
    %cst_49 = arith.constant 0.797884583 : f32
    %137 = vector.broadcast %cst_49 : f32 to vector<16x512xf32>
    %138 = arith.mulf %137, %136 : vector<16x512xf32>
    %139 = math.tanh %138 : vector<16x512xf32>
    %cst_50 = arith.constant 1.000000e+00 : f32
    %140 = vector.broadcast %cst_50 : f32 to vector<16x512xf32>
    %141 = arith.addf %140, %139 : vector<16x512xf32>
    %142 = arith.mulf %131, %141 : vector<16x512xf32>
    %143 = arith.truncf %142 : vector<16x512xf32> to vector<16x512xbf16>
    %c0_51 = arith.constant 0 : index
    %c0_52 = arith.constant 0 : index
    %c0_53 = arith.constant 0 : index
    %144 = vector.load %arg10[%c0_51, %c0_52, %c0_53] : memref<1x512x128xbf16, #tpu.memory_space<vmem>>, vector<1x512x128xbf16>
    %145 = vector.shape_cast %144 : vector<1x512x128xbf16> to vector<512x128xbf16>
    %cst_54 = arith.constant dense<0.000000e+00> : vector<16x128xf32>
    %146 = tpu.matmul %143, %145, %cst_54 {dimension_numbers = #tpu.dot_dimension_numbers<[1], [0], [0], [1], [0, 0, 1, 1], [], []>} : vector<16x512xbf16>, vector<512x128xbf16>, vector<16x128xf32> -> vector<16x128xf32>
    %c0_55 = arith.constant 0 : index
    %c0_56 = arith.constant 0 : index
    %c0_57 = arith.constant 0 : index
    %147 = vector.load %arg11[%c0_55, %c0_56, %c0_57] : memref<1x1x128xf32, #tpu.memory_space<vmem>>, vector<1x1x128xf32>
    %148 = vector.shape_cast %147 : vector<1x1x128xf32> to vector<1x128xf32>
    %149 = vector.broadcast %148 : vector<1x128xf32> to vector<16x128xf32>
    %150 = arith.addf %146, %149 : vector<16x128xf32>
    %151 = vector.broadcast %12 : vector<1x128xf32> to vector<16x128xf32>
    %152 = arith.mulf %151, %150 : vector<16x128xf32>
    %153 = arith.addf %97, %152 : vector<16x128xf32>
    %c0_58 = arith.constant 0 : index
    %c0_59 = arith.constant 0 : index
    %c0_60 = arith.constant 0 : index
    %154 = vector.load %arg12[%c0_58, %c0_59, %c0_60] : memref<1x16x128xf32, #tpu.memory_space<vmem>>, vector<1x16x128xf32>
    %155 = vector.shape_cast %154 : vector<1x16x128xf32> to vector<16x128xf32>
    %156 = vector.shape_cast %153 : vector<16x128xf32> to vector<1x16x128xf32>
    tpu.vector_store %arg12[%c0_58, %c0_59, %c0_60], %156 {strides = array<i32>} : memref<1x16x128xf32, #tpu.memory_space<vmem>>, vector<1x16x128xf32>,
    return
  }
  func.func @transform_0(%arg0: i32, %arg1: i32) -> (i32, i32, i32) {
    %c0_i32 = arith.constant 0 : i32
    %c0_i32_0 = arith.constant 0 : i32
    %c0_i32_1 = arith.constant 0 : i32
    return %arg0, %c0_i32, %c0_i32_0 : i32, i32, i32
  }
  func.func @transform_1(%arg0: i32, %arg1: i32) -> (i32, i32, i32, i32) {
    %c0_i32 = arith.constant 0 : i32
    %c0_i32_0 = arith.constant 0 : i32
    %c0_i32_1 = arith.constant 0 : i32
    return %arg0, %arg1, %c0_i32, %c0_i32_0 : i32, i32, i32, i32
  }
  func.func @transform_2(%arg0: i32, %arg1: i32) -> (i32, i32, i32) {
    %c0_i32 = arith.constant 0 : i32
    %c0_i32_0 = arith.constant 0 : i32
    %c0_i32_1 = arith.constant 0 : i32
    return %arg1, %c0_i32, %c0_i32_0 : i32, i32, i32
  }
  func.func @transform_3(%arg0: i32, %arg1: i32) -> (i32, i32, i32) {
    %c0_i32 = arith.constant 0 : i32
    %c0_i32_0 = arith.constant 0 : i32
    %c0_i32_1 = arith.constant 0 : i32
    return %arg1, %c0_i32, %c0_i32_0 : i32, i32, i32
  }
  func.func @transform_4(%arg0: i32, %arg1: i32) -> (i32, i32, i32) {
    %c0_i32 = arith.constant 0 : i32
    %c0_i32_0 = arith.constant 0 : i32
    %c0_i32_1 = arith.constant 0 : i32
    return %arg1, %c0_i32, %c0_i32_0 : i32, i32, i32
  }
  func.func @transform_5(%arg0: i32, %arg1: i32) -> (i32, i32, i32) {
    %c0_i32 = arith.constant 0 : i32
    %c0_i32_0 = arith.constant 0 : i32
    %c0_i32_1 = arith.constant 0 : i32
    return %arg1, %c0_i32, %c0_i32_0 : i32, i32, i32
  }
  func.func @transform_6(%arg0: i32, %arg1: i32) -> (i32, i32, i32) {
    %c0_i32 = arith.constant 0 : i32
    %c0_i32_0 = arith.constant 0 : i32
    %c0_i32_1 = arith.constant 0 : i32
    return %arg1, %c0_i32, %c0_i32_0 : i32, i32, i32
  }
  func.func @transform_7(%arg0: i32, %arg1: i32) -> (i32, i32, i32) {
    %c0_i32 = arith.constant 0 : i32
    %c0_i32_0 = arith.constant 0 : i32
    %c0_i32_1 = arith.constant 0 : i32
    return %arg1, %c0_i32, %c0_i32_0 : i32, i32, i32
  }
  func.func @transform_8(%arg0: i32, %arg1: i32) -> (i32, i32, i32) {
    %c0_i32 = arith.constant 0 : i32
    %c0_i32_0 = arith.constant 0 : i32
    %c0_i32_1 = arith.constant 0 : i32
    return %arg1, %c0_i32, %c0_i32_0 : i32, i32, i32
  }
  func.func @transform_9(%arg0: i32, %arg1: i32) -> (i32, i32, i32) {
    %c0_i32 = arith.constant 0 : i32
    %c0_i32_0 = arith.constant 0 : i32
    %c0_i32_1 = arith.constant 0 : i32
    return %arg1, %c0_i32, %c0_i32_0 : i32, i32, i32
  }
  func.func @transform_10(%arg0: i32, %arg1: i32) -> (i32, i32, i32) {
    %c0_i32 = arith.constant 0 : i32
    %c0_i32_0 = arith.constant 0 : i32
    %c0_i32_1 = arith.constant 0 : i32
    return %arg0, %c0_i32, %c0_i32_0 : i32, i32, i32
  }
}

module attributes {stable_mosaic.version = 11 : i64} {
  func.func @_final_kernel(%arg0: i32, %arg1: memref<1x16x128xf32, #tpu.memory_space<vmem>>, %arg2: memref<1x2x128xf32, #tpu.memory_space<vmem>>, %arg3: memref<128x128xbf16, #tpu.memory_space<vmem>>, %arg4: memref<1x128xf32, #tpu.memory_space<vmem>>, %arg5: memref<1x16x128xf32, #tpu.memory_space<vmem>>) attributes {dimension_semantics = [#tpu.dimension_semantics<parallel>], iteration_bounds = array<i64: 2>, scalar_prefetch = 0 : i64, scratch_operands = 0 : i64, tpu.core_type = #tpu.core_type<tc>, window_params = [{transform_indices = @transform_0, window_bounds = array<i64: 1, 16, 128>}, {transform_indices = @transform_1, window_bounds = array<i64: 1, 2, 128>}, {pipeline_mode = #tpu.pipeline_mode<synchronous>, transform_indices = @transform_2, window_bounds = array<i64: 128, 128>}, {pipeline_mode = #tpu.pipeline_mode<synchronous>, transform_indices = @transform_3, window_bounds = array<i64: 1, 128>}, {transform_indices = @transform_4, window_bounds = array<i64: 1, 16, 128>}]} {
    %c0 = arith.constant 0 : index
    %c0_0 = arith.constant 0 : index
    %c0_1 = arith.constant 0 : index
    %0 = vector.load %arg1[%c0, %c0_0, %c0_1] : memref<1x16x128xf32, #tpu.memory_space<vmem>>, vector<1x16x128xf32>
    %1 = vector.shape_cast %0 : vector<1x16x128xf32> to vector<16x128xf32>
    %c0_2 = arith.constant 0 : index
    %c0_3 = arith.constant 0 : index
    %c0_4 = arith.constant 0 : index
    %2 = vector.load %arg2[%c0_2, %c0_3, %c0_4] : memref<1x2x128xf32, #tpu.memory_space<vmem>>, vector<1x2x128xf32>
    %3 = vector.shape_cast %2 : vector<1x2x128xf32> to vector<2x128xf32>
    %4 = vector.extract_strided_slice %3 {offsets = [0, 0], sizes = [1, 128], strides = [1, 1]} : vector<2x128xf32> to vector<1x128xf32>
    %5 = vector.extract_strided_slice %3 {offsets = [1, 0], sizes = [1, 128], strides = [1, 1]} : vector<2x128xf32> to vector<1x128xf32>
    %cst = arith.constant dense<0.000000e+00> : vector<16xf32>
    %6 = vector.multi_reduction <add>, %1, %cst [1] : vector<16x128xf32> to vector<16xf32>
    %7 = vector.shape_cast %6 : vector<16xf32> to vector<16x1xf32>
    %cst_5 = arith.constant 1.280000e+02 : f32
    %8 = vector.broadcast %cst_5 : f32 to vector<16x1xf32>
    %9 = arith.divf %7, %8 : vector<16x1xf32>
    %10 = vector.broadcast %9 : vector<16x1xf32> to vector<16x128xf32>
    %11 = arith.subf %1, %10 : vector<16x128xf32>
    %12 = arith.mulf %11, %11 : vector<16x128xf32>
    %cst_6 = arith.constant dense<0.000000e+00> : vector<16xf32>
    %13 = vector.multi_reduction <add>, %12, %cst_6 [1] : vector<16x128xf32> to vector<16xf32>
    %14 = vector.shape_cast %13 : vector<16xf32> to vector<16x1xf32>
    %cst_7 = arith.constant 1.280000e+02 : f32
    %15 = vector.broadcast %cst_7 : f32 to vector<16x1xf32>
    %16 = arith.divf %14, %15 : vector<16x1xf32>
    %17 = vector.broadcast %9 : vector<16x1xf32> to vector<16x128xf32>
    %18 = arith.subf %1, %17 : vector<16x128xf32>
    %cst_8 = arith.constant 9.99999997E-7 : f32
    %19 = vector.broadcast %cst_8 : f32 to vector<16x1xf32>
    %20 = arith.addf %16, %19 : vector<16x1xf32>
    %21 = math.rsqrt %20 : vector<16x1xf32>
    %22 = vector.broadcast %21 : vector<16x1xf32> to vector<16x128xf32>
    %23 = arith.mulf %18, %22 : vector<16x128xf32>
    %cst_9 = arith.constant 1.000000e+00 : f32
    %24 = vector.broadcast %cst_9 : f32 to vector<1x128xf32>
    %25 = arith.addf %24, %5 : vector<1x128xf32>
    %26 = vector.broadcast %25 : vector<1x128xf32> to vector<16x128xf32>
    %27 = arith.mulf %23, %26 : vector<16x128xf32>
    %28 = vector.broadcast %4 : vector<1x128xf32> to vector<16x128xf32>
    %29 = arith.addf %27, %28 : vector<16x128xf32>
    %30 = arith.truncf %29 : vector<16x128xf32> to vector<16x128xbf16>
    %c0_10 = arith.constant 0 : index
    %c0_11 = arith.constant 0 : index
    %31 = vector.load %arg3[%c0_10, %c0_11] : memref<128x128xbf16, #tpu.memory_space<vmem>>, vector<128x128xbf16>
    %cst_12 = arith.constant dense<0.000000e+00> : vector<16x128xf32>
    %32 = tpu.matmul %30, %31, %cst_12 {dimension_numbers = #tpu.dot_dimension_numbers<[1], [0], [0], [1], [0, 0, 1, 1], [], []>} : vector<16x128xbf16>, vector<128x128xbf16>, vector<16x128xf32> -> vector<16x128xf32>
    %c0_13 = arith.constant 0 : index
    %c0_14 = arith.constant 0 : index
    %33 = vector.load %arg4[%c0_13, %c0_14] : memref<1x128xf32, #tpu.memory_space<vmem>>, vector<1x128xf32>
    %34 = vector.broadcast %33 : vector<1x128xf32> to vector<16x128xf32>
    %35 = arith.addf %32, %34 : vector<16x128xf32>
    %c0_15 = arith.constant 0 : index
    %c0_16 = arith.constant 0 : index
    %c0_17 = arith.constant 0 : index
    %36 = vector.load %arg5[%c0_15, %c0_16, %c0_17] : memref<1x16x128xf32, #tpu.memory_space<vmem>>, vector<1x16x128xf32>
    %37 = vector.shape_cast %36 : vector<1x16x128xf32> to vector<16x128xf32>
    %38 = vector.shape_cast %35 : vector<16x128xf32> to vector<1x16x128xf32>
    tpu.vector_store %arg5[%c0_15, %c0_16, %c0_17], %38 {strides = array<i32>} : memref<1x16x128xf32, #tpu.memory_space<vmem>>, vector<1x16x128xf32>,
    return
  }
  func.func @transform_0(%arg0: i32) -> (i32, i32, i32) {
    %c0_i32 = arith.constant 0 : i32
    %c0_i32_0 = arith.constant 0 : i32
    %c0_i32_1 = arith.constant 0 : i32
    return %arg0, %c0_i32, %c0_i32_0 : i32, i32, i32
  }
  func.func @transform_1(%arg0: i32) -> (i32, i32, i32) {
    %c0_i32 = arith.constant 0 : i32
    %c0_i32_0 = arith.constant 0 : i32
    %c0_i32_1 = arith.constant 0 : i32
    return %arg0, %c0_i32, %c0_i32_0 : i32, i32, i32
  }
  func.func @transform_2(%arg0: i32) -> (i32, i32) {
    %c0_i32 = arith.constant 0 : i32
    %c0_i32_0 = arith.constant 0 : i32
    %c0_i32_1 = arith.constant 0 : i32
    return %c0_i32, %c0_i32_0 : i32, i32
  }
  func.func @transform_3(%arg0: i32) -> (i32, i32) {
    %c0_i32 = arith.constant 0 : i32
    %c0_i32_0 = arith.constant 0 : i32
    %c0_i32_1 = arith.constant 0 : i32
    return %c0_i32, %c0_i32_0 : i32, i32
  }
  func.func @transform_4(%arg0: i32) -> (i32, i32, i32) {
    %c0_i32 = arith.constant 0 : i32
    %c0_i32_0 = arith.constant 0 : i32
    %c0_i32_1 = arith.constant 0 : i32
    return %arg0, %c0_i32, %c0_i32_0 : i32, i32, i32
  }
}

</mosaic_0001>

<llo_original>
// kernel: _lambda_.5
$region0: #{_lambda_.5}
  #allocation0 [shape = 'u32[]', space=smem, size = 0x4, offset = 0x4, fixed_abs, tag = 'smem constant byte address 0x4 - core index']
  #allocation1 [shape = 'u32[72,128]{1,0:T(1,128)}', space=vmem, size = 0x9000, scoped, tag = 'internal scratch']
  %s0 = inlined_call_operand.vmem [shape: f32[2,16,8], index: 0, kind: input, shape index: {}]
  %s1 = inlined_call_operand.vmem [shape: bf16[8,128], index: 1, kind: input, shape index: {}]
  %s2 = inlined_call_operand.vmem [shape: f32[1,128], index: 2, kind: input, shape index: {}]
  %s3 = inlined_call_operand.vmem [shape: f32[16,128], index: 3, kind: input, shape index: {}]
  %s4 = inlined_call_operand.vmem [shape: f32[2,16,128], index: 4, kind: output, shape index: {}]
  %s5 = sld [smem:[#allocation0]]
  $region49: #{_lambda_.5} parent=0
    _
  %s7 = ssub.s32 1, %s5
  %s8 = scalar_select 0, %s7, %s5
  loop: start=0, step=1, limit=4
  $region2: #{_lambda_.5} parent=0 // loop_pre_header
    _
  $region3: #{_lambda_.5} parent=0 // loop_header
    %s10 = sphi 0, %s14
    %p11 = scmp.ge.s32.totalorder %s10, 4
    %s20 = sphi 0, %s22
    %s23 = sphi 0, %s20
    %s24 = sphi 0, %s23
    %s40 = sphi 0, %s24
    %s44 = sphi 0, %s44
    %s46 = sphi 0, %s44
    %s47 = sphi 0, %s46
    %s61 = sphi 0, %s47
    %s65 = sphi 0, %s65
    %s67 = sphi 0, %s65
    %s68 = sphi 0, %s67
    %s82 = sphi 0, %s68
    %s86 = sphi 0, %s86
    %s88 = sphi 0, %s86
    %s89 = sphi 0, %s88
    %s103 = sphi 0, %s89
    %s109 = sphi 0, %s111
    %s112 = sphi 0, %s109
    %s113 = sphi 0, %s112
    %s129 = sphi 0, %s113
  $region4: #{_lambda_.5} parent=0 // loop_header_branch
    %13 = sbr.rel (%p11) target = $region8
  $region5: #{_lambda_.5} parent=0 // loop_body
    %s15 = ssub.s32 %s10, 1
    %s16 = ssub.s32 %s10, 2
    %s17 = sadd.s32 %s10, 1
    %s18 = ssub.s32 %s10, %s17
    %p19 = scmp.eq.s32.totalorder %s18, 0
    %s21 = sadd.s32 %s20, 1
    %s22 = scalar_select %p19, %s20, %s21
    %p25 = pneg %p19
    %p26 = scmp.eq.s32.totalorder %s10, 1
    %p27 = por %p25, %p26
    %p28 = scmp.ne.s32.totalorder %s20, %s23
    %p29 = scmp.eq.s32.totalorder %s10, 0
    %p30 = por %p28, %p29
    %p31 = scmp.ne.s32.totalorder %s20, %s23
    %p32 = scmp.eq.s32.totalorder %s15, 1
    %p33 = por %p31, %p32
    %p34 = scmp.ne.s32.totalorder %s23, %s24
    %p35 = scmp.eq.s32.totalorder %s15, 0
    %p36 = por %p34, %p35
    %p37 = scmp.ne.s32.totalorder %s23, %s24
    %p38 = scmp.eq.s32.totalorder %s16, 1
    %p39 = por %p37, %p38
    %p41 = scmp.ne.s32.totalorder %s24, %s40
    %p42 = scmp.eq.s32.totalorder %s16, 0
    %p43 = por %p41, %p42
    %s45 = sadd.s32 %s44, 1
    %p48 = scmp.eq.s32.totalorder %s10, 1
    %p49 = scmp.ne.s32.totalorder %s44, %s46
    %p50 = scmp.eq.s32.totalorder %s10, 0
    %p51 = por %p49, %p50
    %p52 = scmp.ne.s32.totalorder %s44, %s46
    %p53 = scmp.eq.s32.totalorder %s15, 1
    %p54 = por %p52, %p53
    %p55 = scmp.ne.s32.totalorder %s46, %s47
    %p56 = scmp.eq.s32.totalorder %s15, 0
    %p57 = por %p55, %p56
    %p58 = scmp.ne.s32.totalorder %s46, %s47
    %p59 = scmp.eq.s32.totalorder %s16, 1
    %p60 = por %p58, %p59
    %p62 = scmp.ne.s32.totalorder %s47, %s61
    %p63 = scmp.eq.s32.totalorder %s16, 0
    %p64 = por %p62, %p63
    %s66 = sadd.s32 %s65, 1
    %p69 = scmp.eq.s32.totalorder %s10, 1
    %p70 = scmp.ne.s32.totalorder %s65, %s67
    %p71 = scmp.eq.s32.totalorder %s10, 0
    %p72 = por %p70, %p71
    %p73 = scmp.ne.s32.totalorder %s65, %s67
    %p74 = scmp.eq.s32.totalorder %s15, 1
    %p75 = por %p73, %p74
    %p76 = scmp.ne.s32.totalorder %s67, %s68
    %p77 = scmp.eq.s32.totalorder %s15, 0
    %p78 = por %p76, %p77
    %p79 = scmp.ne.s32.totalorder %s67, %s68
    %p80 = scmp.eq.s32.totalorder %s16, 1
    %p81 = por %p79, %p80
    %p83 = scmp.ne.s32.totalorder %s68, %s82
    %p84 = scmp.eq.s32.totalorder %s16, 0
    %p85 = por %p83, %p84
    %s87 = sadd.s32 %s86, 1
    %p90 = scmp.eq.s32.totalorder %s10, 1
    %p91 = scmp.ne.s32.totalorder %s86, %s88
    %p92 = scmp.eq.s32.totalorder %s10, 0
    %p93 = por %p91, %p92
    %p94 = scmp.ne.s32.totalorder %s86, %s88
    %p95 = scmp.eq.s32.totalorder %s15, 1
    %p96 = por %p94, %p95
    %p97 = scmp.ne.s32.totalorder %s88, %s89
    %p98 = scmp.eq.s32.totalorder %s15, 0
    %p99 = por %p97, %p98
    %p100 = scmp.ne.s32.totalorder %s88, %s89
    %p101 = scmp.eq.s32.totalorder %s16, 1
    %p102 = por %p100, %p101
    %p104 = scmp.ne.s32.totalorder %s89, %s103
    %p105 = scmp.eq.s32.totalorder %s16, 0
    %p106 = por %p104, %p105
    %s107 = ssub.s32 %s10, %s17
    %p108 = scmp.eq.s32.totalorder %s107, 0
    %s110 = sadd.s32 %s109, 1
    %s111 = scalar_select %p108, %s109, %s110
    %p114 = pneg %p108
    %p115 = scmp.eq.s32.totalorder %s10, 1
    %p116 = por %p114, %p115
    %p117 = scmp.ne.s32.totalorder %s109, %s112
    %p118 = scmp.eq.s32.totalorder %s10, 0
    %p119 = por %p117, %p118
    %p120 = scmp.ne.s32.totalorder %s109, %s112
    %p121 = scmp.eq.s32.totalorder %s15, 1
    %p122 = por %p120, %p121
    %p123 = scmp.ne.s32.totalorder %s112, %s113
    %p124 = scmp.eq.s32.totalorder %s15, 0
    %p125 = por %p123, %p124
    %p126 = scmp.ne.s32.totalorder %s112, %s113
    %p127 = scmp.eq.s32.totalorder %s16, 1
    %p128 = por %p126, %p127
    %p130 = scmp.ne.s32.totalorder %s113, %s129
    %p131 = scmp.eq.s32.totalorder %s16, 0
    %p132 = por %p130, %p131
    %p133 = scmp.le.s32.totalorder 1, %s10
    %p134 = scmp.lt.s32.totalorder %s10, 3
    %p135 = pnand %p133, %p134
    %p136 = pneg %p135
    // Predicated region
    $region9: #{_lambda_.5} parent=5 // pred_check
      _
    $region10: #{_lambda_.5} parent=5 // pred_check_branch
      %138 = sbr.rel (%p135) target = $region12
    $region11: #{_lambda_.5} parent=5 // pred_region
      %s139 = ssub.s32 %s10, 1
      // Predicated region
      $region13: #{_lambda_.5} parent=11 // pred_check
        %p140 = pneg %p57
      $region14: #{_lambda_.5} parent=11 // pred_check_branch
        %142 = sbr.rel (%p140) target = $region16
      $region15: #{_lambda_.5} parent=11 // pred_region
        _
      $region16: #{_lambda_.5} parent=11 // pred_fallthru
        _
      // Predicated region
      $region17: #{_lambda_.5} parent=11 // pred_check
        %p143 = pneg %p78
      $region18: #{_lambda_.5} parent=11 // pred_check_branch
        %145 = sbr.rel (%p143) target = $region20
      $region19: #{_lambda_.5} parent=11 // pred_region
        _
      $region20: #{_lambda_.5} parent=11 // pred_fallthru
        _
      // Predicated region
      $region21: #{_lambda_.5} parent=11 // pred_check
        %p146 = pneg %p99
      $region22: #{_lambda_.5} parent=11 // pred_check_branch
        %148 = sbr.rel (%p146) target = $region24
      $region23: #{_lambda_.5} parent=11 // pred_region
        _
      $region24: #{_lambda_.5} parent=11 // pred_fallthru
        _
    $region12: #{_lambda_.5} parent=5 // pred_fallthru
      _
    %p149 = scmp.lt.s32.totalorder %s10, 2
    // Predicated region
    $region25: #{_lambda_.5} parent=5 // pred_check
      %p150 = pneg %p149
    $region26: #{_lambda_.5} parent=5 // pred_check_branch
      %152 = sbr.rel (%p150) target = $region28
    $region27: #{_lambda_.5} parent=5 // pred_region
      // Predicated region
      $region29: #{_lambda_.5} parent=27 // pred_check
        %p153 = pneg %p30
      $region30: #{_lambda_.5} parent=27 // pred_check_branch
        %155 = sbr.rel (%p153) target = $region32
      $region31: #{_lambda_.5} parent=27 // pred_region
        %p156 = scmp.lt.s32.totalorder %s10, 1
        %s157 = scalar_select %p156, %s10, 1
        %s158 = smul.addr %s157, 2
        %s159 = smul.addr %s158, 8
        %s160 = scalar_lea.vmem %s0, %s159
      $region32: #{_lambda_.5} parent=27 // pred_fallthru
        _
    $region28: #{_lambda_.5} parent=5 // pred_fallthru
      _
    %p161 = scmp.le.s32.totalorder 1, %s10
    %p162 = scmp.lt.s32.totalorder %s10, 3
    %p163 = pnand %p161, %p162
    %p164 = pneg %p163
    // Predicated region
    $region33: #{_lambda_.5} parent=5 // pred_check
      _
    $region34: #{_lambda_.5} parent=5 // pred_check_branch
      %166 = sbr.rel (%p163) target = $region36
    $region35: #{_lambda_.5} parent=5 // pred_region
      %s167 = ssub.s32 %s10, 1
      %p168 = scmp.lt.s32.totalorder %s15, 1
      %s169 = scalar_select %p168, %s15, 1
      %s170 = smul.addr %s169, 2
      %s171 = smul.addr %s170, 8
      %s172 = scalar_lea.vmem %s0, %s171
      %p173 = pneg %p36
      %p174 = pneg %p33
      %p175 = pneg %p57
      %p176 = pneg %p54
      %p177 = pneg %p78
      %p178 = pneg %p75
      %p179 = pneg %p99
      %p180 = pneg %p96
      %p181 = pneg %p125
      %p182 = pneg %p122
      %p183 = scmp.lt.s32.totalorder %s15, 1
      %s184 = scalar_select %p183, %s15, 1
      %s185 = smul.addr %s184, 2
      %s186 = smul.addr %s185, 8
      %s187 = scalar_lea.vmem %s4, %s186
      %p188 = scmp.lt.s32.totalorder %s15, 1
      %s189 = scalar_select %p188, %s15, 1
      %s190 = smul.addr %s189, 2
      %s191 = smul.addr %s190, 8
      %s192 = scalar_lea.vmem %s0, %s191
      %p193 = scmp.lt.s32.totalorder %s15, 1
      %s194 = scalar_select %p193, %s15, 1
      %s195 = smul.addr %s194, 2
      %s196 = smul.addr %s195, 8
      %s197 = scalar_lea.vmem %s4, %s196
      %v199 = vld [vmem:[%s192] sm:$0xff]
      %v200 = vld [vmem:[%s192 + $0x8] sm:$0xff]
      %v201 = vpack.c.bf16 %v200, %v199
      %v202 = vld [vmem:[%s1] sm:$0xf]
      %v203 = vld [vmem:[%s2] sm:$0x1]
      %v205 = vperm.slane %v203, 0
      %vm207 = vcmask 64512
      %v209 = vsel %vm207, %v201, 0
      %vm211 = vcmask 1043456
      %v213 = vsel %vm211, %v202, 0
      %215 = vmatpush.bf16.msra.mxu0 0
      %216 = vmatpush.bf16.msra.mxu0 0
      %217 = vmatpush.bf16.msra.mxu0 0
      %218 = vmatpush.bf16.msra.mxu0 0
      %219 = vmatpush.bf16.msra.mxu0 0
      %220 = vmatpush.bf16.msra.mxu0 0
      %221 = vmatpush.bf16.msra.mxu0 0
      %222 = vmatpush.bf16.msra.mxu0 %v213
      %223 = vmatmul.bf16.gmra.mxu0 %v209
      %v224 = vpop.f32.mrf.mxu0
      %v225 = vadd.f32 %v205, %v224
      %v226 = vpop.f32.mrf.mxu0
      %v227 = vadd.f32 %v205, %v226
      %228 = vdwg.mxu0
      %v229 = vld [vmem:[%s3] sm:$0xff]
      %v230 = vld [vmem:[%s3 + $0x8] sm:$0xff]
      %v231 = vadd.f32 %v225, %v229
      %v232 = vadd.f32 %v227, %v230
      %233 = vst [vmem:[%s197] sm:$0xff] %v231
      %234 = vst [vmem:[%s197 + $0x8] sm:$0xff] %v232
      %p235 = scmp.lt.s32.totalorder %s15, 1
      %s236 = scalar_select %p235, %s15, 1
      %s237 = smul.addr %s236, 2
      %s238 = smul.addr %s237, 8
      %s239 = scalar_lea.vmem %s4, %s238
      // Predicated region
      $region37: #{_lambda_.5} parent=35 // pred_check
        %p240 = pneg %p122
      $region38: #{_lambda_.5} parent=35 // pred_check_branch
        %242 = sbr.rel (%p240) target = $region40
      $region39: #{_lambda_.5} parent=35 // pred_region
        _
      $region40: #{_lambda_.5} parent=35 // pred_fallthru
        _
    $region36: #{_lambda_.5} parent=5 // pred_fallthru
      _
    %p243 = scmp.le.s32.totalorder 2, %s10
    // Predicated region
    $region41: #{_lambda_.5} parent=5 // pred_check
      %p244 = pneg %p243
    $region42: #{_lambda_.5} parent=5 // pred_check_branch
      %246 = sbr.rel (%p244) target = $region44
    $region43: #{_lambda_.5} parent=5 // pred_region
      %s247 = ssub.s32 %s10, 2
      // Predicated region
      $region45: #{_lambda_.5} parent=43 // pred_check
        %p248 = pneg %p128
      $region46: #{_lambda_.5} parent=43 // pred_check_branch
        %250 = sbr.rel (%p248) target = $region48
      $region47: #{_lambda_.5} parent=43 // pred_region
        %p251 = scmp.lt.s32.totalorder %s16, 1
        %s252 = scalar_select %p251, %s16, 1
        %s253 = smul.addr %s252, 2
        %s254 = smul.addr %s253, 8
        %s255 = scalar_lea.vmem %s4, %s254
      $region48: #{_lambda_.5} parent=43 // pred_fallthru
        _
    $region44: #{_lambda_.5} parent=5 // pred_fallthru
      _
  $region6: #{_lambda_.5} parent=0 // loop_footer
    %s14 = sadd.s32 1, %s10
  $region7: #{_lambda_.5} parent=0 // loop_footer_branch
    %9 = sbr.rel target = $region3
  $region8: #{_lambda_.5} parent=0 // loop_exit
    _

// kernel: _lambda_.7
$region0: #{_lambda_.7}
  #allocation0 [shape = 'u32[]', space=smem, size = 0x4, offset = 0x4, fixed_abs, tag = 'smem constant byte address 0x4 - core index']
  #allocation1 [shape = 'u32[72,128]{1,0:T(1,128)}', space=vmem, size = 0x9000, scoped, tag = 'internal scratch']
  %s0 = inlined_call_operand.vmem [shape: f32[2,128], index: 0, kind: input, shape index: {}]
  %s1 = inlined_call_operand.hbm [shape: bf16[128,2304], index: 1, kind: input, shape index: {}]
  %s2 = inlined_call_operand.vmem [shape: f32[1,2304], index: 2, kind: input, shape index: {}]
  %s3 = inlined_call_operand.vmem [shape: f32[2,2304], index: 3, kind: output, shape index: {}]
  %s4 = sld [smem:[#allocation0]]
  $region49: #{_lambda_.7} parent=0
    _
  %s6 = ssub.s32 1, %s4
  %s7 = scalar_select 0, %s6, %s4
  $region1: #{_lambda_.7} parent=0
    #allocation2 [shape = 'u8[393216]{0}', space=vmem, size = 0x60000, scoped, tag = 'input window, operand 1']
    #allocation3 [shape = 's32[2]{0}', space=sflag, size = 0x8, scoped, tag = 'scoped memory for _lambda_.7']
    %8 = vsyncpa [#allocation3], 0
    %s9 = scalar_lea.sflag [#allocation3], 1
    %10 = vsyncpa %s9, 0
    loop: start=0, step=1, limit=5
    $region2: #{_lambda_.7} parent=1 // loop_pre_header
      _
    $region3: #{_lambda_.7} parent=1 // loop_header
      %s12 = sphi 0, %s16
      %p13 = scmp.ge.s32.totalorder %s12, 5
      %s20 = sphi 0, %s20
      %s22 = sphi 0, %s20
      %s23 = sphi 0, %s22
      %s37 = sphi 0, %s23
      %s43 = sphi 0, %s45
      %s46 = sphi 0, %s43
      %s47 = sphi 0, %s46
      %s63 = sphi 0, %s47
      %s69 = sphi 0, %s71
      %s72 = sphi 0, %s69
      %s73 = sphi 0, %s72
      %s89 = sphi 0, %s73
      %s95 = sphi 0, %s97
      %s98 = sphi 0, %s95
      %s99 = sphi 0, %s98
      %s115 = sphi 0, %s99
    $region4: #{_lambda_.7} parent=1 // loop_header_branch
      %15 = sbr.rel (%p13) target = $region8
    $region5: #{_lambda_.7} parent=1 // loop_body
      %s17 = ssub.s32 %s12, 1
      %s18 = ssub.s32 %s12, 2
      %s19 = sadd.s32 %s12, 1
      %s21 = sadd.s32 %s20, 1
      %p24 = scmp.eq.s32.totalorder %s12, 2
      %p25 = scmp.ne.s32.totalorder %s20, %s22
      %p26 = scmp.eq.s32.totalorder %s12, 0
      %p27 = por %p25, %p26
      %p28 = scmp.ne.s32.totalorder %s20, %s22
      %p29 = scmp.eq.s32.totalorder %s17, 2
      %p30 = por %p28, %p29
      %p31 = scmp.ne.s32.totalorder %s22, %s23
      %p32 = scmp.eq.s32.totalorder %s17, 0
      %p33 = por %p31, %p32
      %p34 = scmp.ne.s32.totalorder %s22, %s23
      %p35 = scmp.eq.s32.totalorder %s18, 2
      %p36 = por %p34, %p35
      %p38 = scmp.ne.s32.totalorder %s23, %s37
      %p39 = scmp.eq.s32.totalorder %s18, 0
      %p40 = por %p38, %p39
      %s41 = ssub.s32 %s12, %s19
      %p42 = scmp.eq.s32.totalorder %s41, 0
      %s44 = sadd.s32 %s43, 1
      %s45 = scalar_select %p42, %s43, %s44
      %p48 = pneg %p42
      %p49 = scmp.eq.s32.totalorder %s12, 2
      %p50 = por %p48, %p49
      %p51 = scmp.ne.s32.totalorder %s43, %s46
      %p52 = scmp.eq.s32.totalorder %s12, 0
      %p53 = por %p51, %p52
      %p54 = scmp.ne.s32.totalorder %s43, %s46
      %p55 = scmp.eq.s32.totalorder %s17, 2
      %p56 = por %p54, %p55
      %p57 = scmp.ne.s32.totalorder %s46, %s47
      %p58 = scmp.eq.s32.totalorder %s17, 0
      %p59 = por %p57, %p58
      %p60 = scmp.ne.s32.totalorder %s46, %s47
      %p61 = scmp.eq.s32.totalorder %s18, 2
      %p62 = por %p60, %p61
      %p64 = scmp.ne.s32.totalorder %s47, %s63
      %p65 = scmp.eq.s32.totalorder %s18, 0
      %p66 = por %p64, %p65
      %s67 = ssub.s32 %s12, %s19
      %p68 = scmp.eq.s32.totalorder %s67, 0
      %s70 = sadd.s32 %s69, 1
      %s71 = scalar_select %p68, %s69, %s70
      %p74 = pneg %p68
      %p75 = scmp.eq.s32.totalorder %s12, 2
      %p76 = por %p74, %p75
      %p77 = scmp.ne.s32.totalorder %s69, %s72
      %p78 = scmp.eq.s32.totalorder %s12, 0
      %p79 = por %p77, %p78
      %p80 = scmp.ne.s32.totalorder %s69, %s72
      %p81 = scmp.eq.s32.totalorder %s17, 2
      %p82 = por %p80, %p81
      %p83 = scmp.ne.s32.totalorder %s72, %s73
      %p84 = scmp.eq.s32.totalorder %s17, 0
      %p85 = por %p83, %p84
      %p86 = scmp.ne.s32.totalorder %s72, %s73
      %p87 = scmp.eq.s32.totalorder %s18, 2
      %p88 = por %p86, %p87
      %p90 = scmp.ne.s32.totalorder %s73, %s89
      %p91 = scmp.eq.s32.totalorder %s18, 0
      %p92 = por %p90, %p91
      %s93 = ssub.s32 %s12, %s19
      %p94 = scmp.eq.s32.totalorder %s93, 0
      %s96 = sadd.s32 %s95, 1
      %s97 = scalar_select %p94, %s95, %s96
      %p100 = pneg %p94
      %p101 = scmp.eq.s32.totalorder %s12, 2
      %p102 = por %p100, %p101
      %p103 = scmp.ne.s32.totalorder %s95, %s98
      %p104 = scmp.eq.s32.totalorder %s12, 0
      %p105 = por %p103, %p104
      %p106 = scmp.ne.s32.totalorder %s95, %s98
      %p107 = scmp.eq.s32.totalorder %s17, 2
      %p108 = por %p106, %p107
      %p109 = scmp.ne.s32.totalorder %s98, %s99
      %p110 = scmp.eq.s32.totalorder %s17, 0
      %p111 = por %p109, %p110
      %p112 = scmp.ne.s32.totalorder %s98, %s99
      %p113 = scmp.eq.s32.totalorder %s18, 2
      %p114 = por %p112, %p113
      %p116 = scmp.ne.s32.totalorder %s99, %s115
      %p117 = scmp.eq.s32.totalorder %s18, 0
      %p118 = por %p116, %p117
      %p119 = scmp.le.s32.totalorder 1, %s12
      %p120 = scmp.lt.s32.totalorder %s12, 4
      %p121 = pnand %p119, %p120
      %p122 = pneg %p121
      // Predicated region
      $region9: #{_lambda_.7} parent=5 // pred_check
        _
      $region10: #{_lambda_.7} parent=5 // pred_check_branch
        %124 = sbr.rel (%p121) target = $region12
      $region11: #{_lambda_.7} parent=5 // pred_region
        %s125 = ssub.s32 %s12, 1
        // Predicated region
        $region13: #{_lambda_.7} parent=11 // pred_check
          %p126 = pneg %p33
        $region14: #{_lambda_.7} parent=11 // pred_check_branch
          %128 = sbr.rel (%p126) target = $region16
        $region15: #{_lambda_.7} parent=11 // pred_region
          _
        $region16: #{_lambda_.7} parent=11 // pred_fallthru
          _
      $region12: #{_lambda_.7} parent=5 // pred_fallthru
        _
      %p129 = scmp.lt.s32.totalorder %s12, 3
      // Predicated region
      $region17: #{_lambda_.7} parent=5 // pred_check
        %p130 = pneg %p129
      $region18: #{_lambda_.7} parent=5 // pred_check_branch
        %132 = sbr.rel (%p130) target = $region20
      $region19: #{_lambda_.7} parent=5 // pred_region
        // Predicated region
        $region21: #{_lambda_.7} parent=19 // pred_check
          %p133 = pneg %p53
        $region22: #{_lambda_.7} parent=19 // pred_check_branch
          %135 = sbr.rel (%p133) target = $region24
        $region23: #{_lambda_.7} parent=19 // pred_region
          %s136 = sand.u32 %s43, 1
          %s137 = scalar_lea.sflag [#allocation3], %s136
          %s138 = sand.u32 %s43, 1
          %s139 = smul.addr %s138, 384
          %s140 = scalar_lea.vmem [#allocation2], %s139
          %s141 = smul.u32 6, %s12
          %143 = vsyncadd %s137, 0
          %s144 = smul.addr %s141, 4
          %s145 = scalar_lea.hbm %s1, %s144
          %s146 = sshll.u32 %s145, 4
          %s147 = int_to_ptr.hbm [resolvable:$true] %s146
          %s148 = sshll.u32 %s140, 4
          %s149 = int_to_ptr.vmem [resolvable:$true] %s148
          %154 = dma.hbm_to_vmem [thread:$0]  %s147, 6144, %s149, %s137, 1152, 384, 24
        $region24: #{_lambda_.7} parent=19 // pred_fallthru
          _
        // Predicated region
        $region25: #{_lambda_.7} parent=19 // pred_check
          %p155 = pneg %p79
        $region26: #{_lambda_.7} parent=19 // pred_check_branch
          %157 = sbr.rel (%p155) target = $region28
        $region27: #{_lambda_.7} parent=19 // pred_region
          %s158 = smul.u32 6, %s12
          %p159 = scmp.lt.s32.totalorder %s158, 17
          %s160 = scalar_select %p159, %s158, 17
          %s161 = scalar_lea.vmem %s2, %s160
          %s162 = smul.u32 6, %s12
        $region28: #{_lambda_.7} parent=19 // pred_fallthru
          _
      $region20: #{_lambda_.7} parent=5 // pred_fallthru
        _
      %p163 = scmp.le.s32.totalorder 1, %s12
      %p164 = scmp.lt.s32.totalorder %s12, 4
      %p165 = pnand %p163, %p164
      %p166 = pneg %p165
      // Predicated region
      $region29: #{_lambda_.7} parent=5 // pred_check
        _
      $region30: #{_lambda_.7} parent=5 // pred_check_branch
        %168 = sbr.rel (%p165) target = $region32
      $region31: #{_lambda_.7} parent=5 // pred_region
        %s169 = ssub.s32 %s12, 1
        %s170 = sand.u32 %s46, 1
        %s171 = scalar_lea.sflag [#allocation3], %s170
        %s172 = sand.u32 %s46, 1
        %s173 = smul.addr %s172, 384
        %s174 = scalar_lea.vmem [#allocation2], %s173
        // Predicated region
        $region33: #{_lambda_.7} parent=31 // pred_check
          %p175 = pneg %p59
        $region34: #{_lambda_.7} parent=31 // pred_check_branch
          %177 = sbr.rel (%p175) target = $region36
        $region35: #{_lambda_.7} parent=31 // pred_region
          %179 = dma.done %s171, 6144
        $region36: #{_lambda_.7} parent=31 // pred_fallthru
          _
        %p180 = pneg %p33
        %p181 = pneg %p30
        %s182 = sand.u32 %s46, 1
        %s183 = scalar_lea.sflag [#allocation3], %s182
        %s184 = sand.u32 %s46, 1
        %s185 = smul.addr %s184, 384
        %s186 = scalar_lea.vmem [#allocation2], %s185
        %p187 = pneg %p59
        %p188 = pneg %p56
        %s189 = smul.u32 6, %s17
        %p190 = scmp.lt.s32.totalorder %s189, 17
        %s191 = scalar_select %p190, %s189, 17
        %s192 = scalar_lea.vmem %s2, %s191
        %p193 = pneg %p85
        %p194 = pneg %p82
        %p195 = pneg %p111
        %p196 = pneg %p108
        %s197 = smul.u32 6, %s17
        %p198 = scmp.lt.s32.totalorder %s197, 17
        %s199 = scalar_select %p198, %s197, 17
        %s200 = smul.addr %s199, 2
        %s201 = scalar_lea.vmem %s3, %s200
        %s202 = smul.u32 6, %s17
        %s203 = smul.u32 6, %s17
        %p204 = scmp.lt.s32.totalorder %s203, 17
        %s205 = scalar_select %p204, %s203, 17
        %s206 = scalar_lea.vmem %s2, %s205
        %s207 = smul.u32 6, %s17
        %s208 = smul.u32 6, %s17
        %p209 = scmp.lt.s32.totalorder %s208, 17
        %s210 = scalar_select %p209, %s208, 17
        %s211 = smul.addr %s210, 2
        %s212 = scalar_lea.vmem %s3, %s211
        %s213 = smul.u32 6, %s17
        %v214 = vld [vmem:[%s0] sm:$0x3]
        %v215 = vpack.c.bf16 %v214, %v214
        %v216 = vld [vmem:[%s174] sm:$0xff]
        %v217 = vld [vmem:[%s174 + $0x8] sm:$0xff]
        %v218 = vld [vmem:[%s174 + $0x10] sm:$0xff]
        %v219 = vld [vmem:[%s174 + $0x18] sm:$0xff]
        %v220 = vld [vmem:[%s174 + $0x20] sm:$0xff]
        %v221 = vld [vmem:[%s174 + $0x28] sm:$0xff]
        %v222 = vld [vmem:[%s174 + $0x30] sm:$0xff]
        %v223 = vld [vmem:[%s174 + $0x38] sm:$0xff]
        %v224 = vld [vmem:[%s174 + $0x40] sm:$0xff]
        %v225 = vld [vmem:[%s174 + $0x48] sm:$0xff]
        %v226 = vld [vmem:[%s174 + $0x50] sm:$0xff]
        %v227 = vld [vmem:[%s174 + $0x58] sm:$0xff]
        %v228 = vld [vmem:[%s174 + $0x60] sm:$0xff]
        %v229 = vld [vmem:[%s174 + $0x68] sm:$0xff]
        %v230 = vld [vmem:[%s174 + $0x70] sm:$0xff]
        %v231 = vld [vmem:[%s174 + $0x78] sm:$0xff]
        %v232 = vld [vmem:[%s174 + $0x80] sm:$0xff]
        %v233 = vld [vmem:[%s174 + $0x88] sm:$0xff]
        %v234 = vld [vmem:[%s174 + $0x90] sm:$0xff]
        %v235 = vld [vmem:[%s174 + $0x98] sm:$0xff]
        %v236 = vld [vmem:[%s174 + $0xa0] sm:$0xff]
        %v237 = vld [vmem:[%s174 + $0xa8] sm:$0xff]
        %v238 = vld [vmem:[%s174 + $0xb0] sm:$0xff]
        %v239 = vld [vmem:[%s174 + $0xb8] sm:$0xff]
        %v240 = vld [vmem:[%s174 + $0xc0] sm:$0xff]
        %v241 = vld [vmem:[%s174 + $0xc8] sm:$0xff]
        %v242 = vld [vmem:[%s174 + $0xd0] sm:$0xff]
        %v243 = vld [vmem:[%s174 + $0xd8] sm:$0xff]
        %v244 = vld [vmem:[%s174 + $0xe0] sm:$0xff]
        %v245 = vld [vmem:[%s174 + $0xe8] sm:$0xff]
        %v246 = vld [vmem:[%s174 + $0xf0] sm:$0xff]
        %v247 = vld [vmem:[%s174 + $0xf8] sm:$0xff]
        %v248 = vld [vmem:[%s174 + $0x100] sm:$0xff]
        %v249 = vld [vmem:[%s174 + $0x108] sm:$0xff]
        %v250 = vld [vmem:[%s174 + $0x110] sm:$0xff]
        %v251 = vld [vmem:[%s174 + $0x118] sm:$0xff]
        %v252 = vld [vmem:[%s174 + $0x120] sm:$0xff]
        %v253 = vld [vmem:[%s174 + $0x128] sm:$0xff]
        %v254 = vld [vmem:[%s174 + $0x130] sm:$0xff]
        %v255 = vld [vmem:[%s174 + $0x138] sm:$0xff]
        %v256 = vld [vmem:[%s174 + $0x140] sm:$0xff]
        %v257 = vld [vmem:[%s174 + $0x148] sm:$0xff]
        %v258 = vld [vmem:[%s174 + $0x150] sm:$0xff]
        %v259 = vld [vmem:[%s174 + $0x158] sm:$0xff]
        %v260 = vld [vmem:[%s174 + $0x160] sm:$0xff]
        %v261 = vld [vmem:[%s174 + $0x168] sm:$0xff]
        %v262 = vld [vmem:[%s174 + $0x170] sm:$0xff]
        %v263 = vld [vmem:[%s174 + $0x178] sm:$0xff]
        %v264 = vld [vmem:[%s206] sm:$0x3f]
        %v266 = vperm.slane %v264, 0
        %v267 = vperm.slane %v264, 1
        %v268 = vperm.slane %v264, 2
        %v269 = vperm.slane %v264, 3
        %v270 = vperm.slane %v264, 4
        %v271 = vperm.slane %v264, 5
        %v326 = vunpack.c.l.b16 %v216
        %v327 = vunpack.c.h.b16 %v216
        %v328 = vunpack.c.l.b16 %v217
        %v329 = vunpack.c.h.b16 %v217
        %v330 = vunpack.c.l.b16 %v218
        %v331 = vunpack.c.h.b16 %v218
        %v332 = vunpack.c.l.b16 %v219
        %v333 = vunpack.c.h.b16 %v219
        %v334 = vunpack.c.l.b16 %v220
        %v335 = vunpack.c.h.b16 %v220
        %v336 = vunpack.c.l.b16 %v221
        %v337 = vunpack.c.h.b16 %v221
        %v338 = vunpack.c.l.b16 %v222
        %v339 = vunpack.c.h.b16 %v222
        %v340 = vunpack.c.l.b16 %v223
        %v341 = vunpack.c.h.b16 %v223
        %v342 = vunpack.c.l.b16 %v224
        %v343 = vunpack.c.h.b16 %v224
        %v344 = vunpack.c.l.b16 %v225
        %v345 = vunpack.c.h.b16 %v225
        %v346 = vunpack.c.l.b16 %v226
        %v347 = vunpack.c.h.b16 %v226
        %v348 = vunpack.c.l.b16 %v227
        %v349 = vunpack.c.h.b16 %v227
        %v350 = vunpack.c.l.b16 %v228
        %v351 = vunpack.c.h.b16 %v228
        %v352 = vunpack.c.l.b16 %v229
        %v353 = vunpack.c.h.b16 %v229
        %v354 = vunpack.c.l.b16 %v230
        %v355 = vunpack.c.h.b16 %v230
        %v356 = vunpack.c.l.b16 %v231
        %v357 = vunpack.c.h.b16 %v231
        %v358 = vunpack.c.l.b16 %v232
        %v359 = vunpack.c.h.b16 %v232
        %v360 = vunpack.c.l.b16 %v233
        %v361 = vunpack.c.h.b16 %v233
        %v362 = vunpack.c.l.b16 %v234
        %v363 = vunpack.c.h.b16 %v234
        %v364 = vunpack.c.l.b16 %v235
        %v365 = vunpack.c.h.b16 %v235
        %v366 = vunpack.c.l.b16 %v236
        %v367 = vunpack.c.h.b16 %v236
        %v368 = vunpack.c.l.b16 %v237
        %v369 = vunpack.c.h.b16 %v237
        %v370 = vunpack.c.l.b16 %v238
        %v371 = vunpack.c.h.b16 %v238
        %v372 = vunpack.c.l.b16 %v239
        %v373 = vunpack.c.h.b16 %v239
        %v374 = vunpack.c.l.b16 %v240
        %v375 = vunpack.c.h.b16 %v240
        %v376 = vunpack.c.l.b16 %v241
        %v377 = vunpack.c.h.b16 %v241
        %v378 = vunpack.c.l.b16 %v242
        %v379 = vunpack.c.h.b16 %v242
        %v380 = vunpack.c.l.b16 %v243
        %v381 = vunpack.c.h.b16 %v243
        %v382 = vunpack.c.l.b16 %v244
        %v383 = vunpack.c.h.b16 %v244
        %v384 = vunpack.c.l.b16 %v245
        %v385 = vunpack.c.h.b16 %v245
        %v386 = vunpack.c.l.b16 %v246
        %v387 = vunpack.c.h.b16 %v246
        %v388 = vunpack.c.l.b16 %v247
        %v389 = vunpack.c.h.b16 %v247
        %v390 = vunpack.c.l.b16 %v248
        %v391 = vunpack.c.h.b16 %v248
        %v392 = vunpack.c.l.b16 %v249
        %v393 = vunpack.c.h.b16 %v249
        %v394 = vunpack.c.l.b16 %v250
        %v395 = vunpack.c.h.b16 %v250
        %v396 = vunpack.c.l.b16 %v251
        %v397 = vunpack.c.h.b16 %v251
        %v398 = vunpack.c.l.b16 %v252
        %v399 = vunpack.c.h.b16 %v252
        %v400 = vunpack.c.l.b16 %v253
        %v401 = vunpack.c.h.b16 %v253
        %v402 = vunpack.c.l.b16 %v254
        %v403 = vunpack.c.h.b16 %v254
        %v404 = vunpack.c.l.b16 %v255
        %v405 = vunpack.c.h.b16 %v255
        %v406 = vunpack.c.l.b16 %v256
        %v407 = vunpack.c.h.b16 %v256
        %v408 = vunpack.c.l.b16 %v257
        %v409 = vunpack.c.h.b16 %v257
        %v410 = vunpack.c.l.b16 %v258
        %v411 = vunpack.c.h.b16 %v258
        %v412 = vunpack.c.l.b16 %v259
        %v413 = vunpack.c.h.b16 %v259
        %v414 = vunpack.c.l.b16 %v260
        %v415 = vunpack.c.h.b16 %v260
        %v416 = vunpack.c.l.b16 %v261
        %v417 = vunpack.c.h.b16 %v261
        %v418 = vunpack.c.l.b16 %v262
        %v419 = vunpack.c.h.b16 %v262
        %v420 = vunpack.c.l.b16 %v263
        %v421 = vunpack.c.h.b16 %v263
        %v422 = vpack.c.b16 %v332, %v326
        %v423 = vpack.c.b16 %v333, %v327
        %v424 = vpack.c.b16 %v334, %v328
        %v425 = vpack.c.b16 %v335, %v329
        %v426 = vpack.c.b16 %v336, %v330
        %v427 = vpack.c.b16 %v337, %v331
        %v428 = vpack.c.b16 %v344, %v338
        %v429 = vpack.c.b16 %v345, %v339
        %v430 = vpack.c.b16 %v346, %v340
        %v431 = vpack.c.b16 %v347, %v341
        %v432 = vpack.c.b16 %v348, %v342
        %v433 = vpack.c.b16 %v349, %v343
        %v434 = vpack.c.b16 %v356, %v350
        %v435 = vpack.c.b16 %v357, %v351
        %v436 = vpack.c.b16 %v358, %v352
        %v437 = vpack.c.b16 %v359, %v353
        %v438 = vpack.c.b16 %v360, %v354
        %v439 = vpack.c.b16 %v361, %v355
        %v440 = vpack.c.b16 %v368, %v362
        %v441 = vpack.c.b16 %v369, %v363
        %v442 = vpack.c.b16 %v370, %v364
        %v443 = vpack.c.b16 %v371, %v365
        %v444 = vpack.c.b16 %v372, %v366
        %v445 = vpack.c.b16 %v373, %v367
        %v446 = vpack.c.b16 %v380, %v374
        %v447 = vpack.c.b16 %v381, %v375
        %v448 = vpack.c.b16 %v382, %v376
        %v449 = vpack.c.b16 %v383, %v377
        %v450 = vpack.c.b16 %v384, %v378
        %v451 = vpack.c.b16 %v385, %v379
        %v452 = vpack.c.b16 %v392, %v386
        %v453 = vpack.c.b16 %v393, %v387
        %v454 = vpack.c.b16 %v394, %v388
        %v455 = vpack.c.b16 %v395, %v389
        %v456 = vpack.c.b16 %v396, %v390
        %v457 = vpack.c.b16 %v397, %v391
        %v458 = vpack.c.b16 %v404, %v398
        %v459 = vpack.c.b16 %v405, %v399
        %v460 = vpack.c.b16 %v406, %v400
        %v461 = vpack.c.b16 %v407, %v401
        %v462 = vpack.c.b16 %v408, %v402
        %v463 = vpack.c.b16 %v409, %v403
        %v464 = vpack.c.b16 %v416, %v410
        %v465 = vpack.c.b16 %v417, %v411
        %v466 = vpack.c.b16 %v418, %v412
        %v467 = vpack.c.b16 %v419, %v413
        %v468 = vpack.c.b16 %v420, %v414
        %v469 = vpack.c.b16 %v421, %v415
        %518 = vmatpush.bf16.msra.mxu0 %v464
        %519 = vmatpush.bf16.msra.mxu0 %v458
        %520 = vmatpush.bf16.msra.mxu0 %v452
        %521 = vmatpush.bf16.msra.mxu0 %v446
        %522 = vmatpush.bf16.msra.mxu0 %v440
        %523 = vmatpush.bf16.msra.mxu0 %v434
        %524 = vmatpush.bf16.msra.mxu0 %v428
        %525 = vmatpush.bf16.msra.mxu0 %v422
        %526 = vmatmul.bf16.gmra.mxu0 %v215
        %v527 = vpop.f32.mrf.mxu0
        %v528 = vadd.f32 %v266, %v527
        %v529 = vpop.f32.mrf.mxu0
        %530 = vdwg.mxu0
        %531 = vmatpush.bf16.msra.mxu0 %v465
        %532 = vmatpush.bf16.msra.mxu0 %v459
        %533 = vmatpush.bf16.msra.mxu0 %v453
        %534 = vmatpush.bf16.msra.mxu0 %v447
        %535 = vmatpush.bf16.msra.mxu0 %v441
        %536 = vmatpush.bf16.msra.mxu0 %v435
        %537 = vmatpush.bf16.msra.mxu0 %v429
        %538 = vmatpush.bf16.msra.mxu0 %v423
        %539 = vmatmul.bf16.gmra.mxu0 %v215
        %v540 = vpop.f32.mrf.mxu0
        %v541 = vadd.f32 %v267, %v540
        %v542 = vpop.f32.mrf.mxu0
        %543 = vdwg.mxu0
        %544 = vmatpush.bf16.msra.mxu0 %v466
        %545 = vmatpush.bf16.msra.mxu0 %v460
        %546 = vmatpush.bf16.msra.mxu0 %v454
        %547 = vmatpush.bf16.msra.mxu0 %v448
        %548 = vmatpush.bf16.msra.mxu0 %v442
        %549 = vmatpush.bf16.msra.mxu0 %v436
        %550 = vmatpush.bf16.msra.mxu0 %v430
        %551 = vmatpush.bf16.msra.mxu0 %v424
        %552 = vmatmul.bf16.gmra.mxu0 %v215
        %v553 = vpop.f32.mrf.mxu0
        %v554 = vadd.f32 %v268, %v553
        %v555 = vpop.f32.mrf.mxu0
        %556 = vdwg.mxu0
        %557 = vmatpush.bf16.msra.mxu0 %v467
        %558 = vmatpush.bf16.msra.mxu0 %v461
        %559 = vmatpush.bf16.msra.mxu0 %v455
        %560 = vmatpush.bf16.msra.mxu0 %v449
        %561 = vmatpush.bf16.msra.mxu0 %v443
        %562 = vmatpush.bf16.msra.mxu0 %v437
        %563 = vmatpush.bf16.msra.mxu0 %v431
        %564 = vmatpush.bf16.msra.mxu0 %v425
        %565 = vmatmul.bf16.gmra.mxu0 %v215
        %v566 = vpop.f32.mrf.mxu0
        %v567 = vadd.f32 %v269, %v566
        %v568 = vpop.f32.mrf.mxu0
        %569 = vdwg.mxu0
        %570 = vmatpush.bf16.msra.mxu0 %v468
        %571 = vmatpush.bf16.msra.mxu0 %v462
        %572 = vmatpush.bf16.msra.mxu0 %v456
        %573 = vmatpush.bf16.msra.mxu0 %v450
        %574 = vmatpush.bf16.msra.mxu0 %v444
        %575 = vmatpush.bf16.msra.mxu0 %v438
        %576 = vmatpush.bf16.msra.mxu0 %v432
        %577 = vmatpush.bf16.msra.mxu0 %v426
        %578 = vmatmul.bf16.gmra.mxu0 %v215
        %v579 = vpop.f32.mrf.mxu0
        %v580 = vadd.f32 %v270, %v579
        %v581 = vpop.f32.mrf.mxu0
        %582 = vdwg.mxu0
        %583 = vmatpush.bf16.msra.mxu0 %v469
        %584 = vmatpush.bf16.msra.mxu0 %v463
        %585 = vmatpush.bf16.msra.mxu0 %v457
        %586 = vmatpush.bf16.msra.mxu0 %v451
        %587 = vmatpush.bf16.msra.mxu0 %v445
        %588 = vmatpush.bf16.msra.mxu0 %v439
        %589 = vmatpush.bf16.msra.mxu0 %v433
        %590 = vmatpush.bf16.msra.mxu0 %v427
        %591 = vmatmul.bf16.gmra.mxu0 %v215
        %v592 = vpop.f32.mrf.mxu0
        %v593 = vadd.f32 %v271, %v592
        %v594 = vpop.f32.mrf.mxu0
        %595 = vdwg.mxu0
        %v602 = vrot.slane %v541, 6
        %v603 = vrot.slane %v554, 4
        %v604 = vrot.slane %v567, 2
        %v605 = vrot.slane %v593, 6
        %vm606 = vcmask 1041408
        %v607 = vsel %vm606, %v528, %v602
        %vm608 = vcmask 1045508
        %v609 = vsel %vm608, %v603, %v604
        %vm610 = vcmask 1043456
        %v611 = vsel %vm610, %v607, %v609
        %v612 = vsel %vm606, %v580, %v605
        %615 = vst [vmem:[%s212] sm:$0xff] %v611
        %616 = vst [vmem:[%s212 + $0x8] sm:$0xf] %v612
        %s617 = smul.u32 6, %s17
        %p618 = scmp.lt.s32.totalorder %s617, 17
        %s619 = scalar_select %p618, %s617, 17
        %s620 = smul.addr %s619, 2
        %s621 = scalar_lea.vmem %s3, %s620
        // Predicated region
        $region37: #{_lambda_.7} parent=31 // pred_check
          %p622 = pneg %p108
        $region38: #{_lambda_.7} parent=31 // pred_check_branch
          %624 = sbr.rel (%p622) target = $region40
        $region39: #{_lambda_.7} parent=31 // pred_region
          %s625 = smul.u32 6, %s17
        $region40: #{_lambda_.7} parent=31 // pred_fallthru
          _
      $region32: #{_lambda_.7} parent=5 // pred_fallthru
        _
      %p626 = scmp.le.s32.totalorder 2, %s12
      // Predicated region
      $region41: #{_lambda_.7} parent=5 // pred_check
        %p627 = pneg %p626
      $region42: #{_lambda_.7} parent=5 // pred_check_branch
        %629 = sbr.rel (%p627) target = $region44
      $region43: #{_lambda_.7} parent=5 // pred_region
        %s630 = ssub.s32 %s12, 2
        // Predicated region
        $region45: #{_lambda_.7} parent=43 // pred_check
          %p631 = pneg %p114
        $region46: #{_lambda_.7} parent=43 // pred_check_branch
          %633 = sbr.rel (%p631) target = $region48
        $region47: #{_lambda_.7} parent=43 // pred_region
          %s634 = smul.u32 6, %s18
          %p635 = scmp.lt.s32.totalorder %s634, 17
          %s636 = scalar_select %p635, %s634, 17
          %s637 = smul.addr %s636, 2
          %s638 = scalar_lea.vmem %s3, %s637
        $region48: #{_lambda_.7} parent=43 // pred_fallthru
          _
      $region44: #{_lambda_.7} parent=5 // pred_fallthru
        _
    $region6: #{_lambda_.7} parent=1 // loop_footer
      %s16 = sadd.s32 1, %s12
    $region7: #{_lambda_.7} parent=1 // loop_footer_branch
      %11 = sbr.rel target = $region3
    $region8: #{_lambda_.7} parent=1 // loop_exit
      _
    %639 = vsyncpa [#allocation3], 1
    %s640 = scalar_lea.sflag [#allocation3], 1
    %641 = vsyncpa %s640, 1

// kernel: _lambda_.6
$region0: #{_lambda_.6}
  #allocation0 [shape = 'u32[]', space=smem, size = 0x4, offset = 0x4, fixed_abs, tag = 'smem constant byte address 0x4 - core index']
  #allocation1 [shape = 'u32[72,128]{1,0:T(1,128)}', space=vmem, size = 0x9000, scoped, tag = 'internal scratch']
  %s0 = inlined_call_operand.vmem [shape: f32[2,1], index: 0, kind: input, shape index: {}]
  %s1 = inlined_call_operand.vmem [shape: f32[1,128], index: 1, kind: input, shape index: {}]
  %s2 = inlined_call_operand.vmem [shape: f32[1,128], index: 2, kind: input, shape index: {}]
  %s3 = inlined_call_operand.hbm [shape: bf16[128,128], index: 3, kind: input, shape index: {}]
  %s4 = inlined_call_operand.vmem [shape: f32[1,128], index: 4, kind: input, shape index: {}]
  %s5 = inlined_call_operand.vmem [shape: f32[2,8], index: 5, kind: input, shape index: {}]
  %s6 = inlined_call_operand.vmem [shape: f32[2,3], index: 6, kind: input, shape index: {}]
  %s7 = inlined_call_operand.hbm [shape: bf16[8,1152], index: 7, kind: input, shape index: {}]
  %s8 = inlined_call_operand.vmem [shape: f32[1,1152], index: 8, kind: input, shape index: {}]
  %s9 = inlined_call_operand.vmem [shape: f32[1,384], index: 9, kind: input, shape index: {}]
  %s10 = inlined_call_operand.hbm [shape: bf16[384,128], index: 10, kind: input, shape index: {}]
  %s11 = inlined_call_operand.vmem [shape: f32[1,128], index: 11, kind: input, shape index: {}]
  %s12 = inlined_call_operand.vmem [shape: f32[2,128], index: 12, kind: output, shape index: {}]
  %s13 = sld [smem:[#allocation0]]
  $region70: #{_lambda_.6} parent=0
    _
  %s15 = ssub.s32 1, %s13
  %s16 = scalar_select 0, %s15, %s13
  $region1: #{_lambda_.6} parent=0
    #allocation2 [shape = 'u8[32768]{0}', space=vmem, size = 0x8000, scoped, tag = 'input window, operand 3, single buffered']
    #allocation3 [shape = 's32[1]{0}', space=sflag, size = 0x4, scoped, tag = 'scoped memory for _lambda_.6']
    #allocation4 [shape = 'u8[18432]{0}', space=vmem, size = 0x4800, scoped, tag = 'input window, operand 7, single buffered']
    #allocation5 [shape = 's32[1]{0}', space=sflag, size = 0x4, scoped, tag = 'scoped memory for _lambda_.6']
    #allocation6 [shape = 'u8[98304]{0}', space=vmem, size = 0x18000, scoped, tag = 'input window, operand 10, single buffered']
    %17 = vsyncpa [#allocation3], 0
    %18 = vsyncpa [#allocation5], 0
    // Predicated region
    $region2: #{_lambda_.6} parent=1 // pred_check
      _
    $region3: #{_lambda_.6} parent=1 // pred_check_branch
      %20 = sbr.rel (0) target = $region5
    $region4: #{_lambda_.6} parent=1 // pred_region
      _
    $region5: #{_lambda_.6} parent=1 // pred_fallthru
      _
    // Predicated region
    $region6: #{_lambda_.6} parent=1 // pred_check
      _
    $region7: #{_lambda_.6} parent=1 // pred_check_branch
      %22 = sbr.rel (0) target = $region9
    $region8: #{_lambda_.6} parent=1 // pred_region
      _
    $region9: #{_lambda_.6} parent=1 // pred_fallthru
      _
    // Predicated region
    $region10: #{_lambda_.6} parent=1 // pred_check
      _
    $region11: #{_lambda_.6} parent=1 // pred_check_branch
      %24 = sbr.rel (0) target = $region13
    $region12: #{_lambda_.6} parent=1 // pred_region
      _
    $region13: #{_lambda_.6} parent=1 // pred_fallthru
      _
    // Predicated region
    $region14: #{_lambda_.6} parent=1 // pred_check
      _
    $region15: #{_lambda_.6} parent=1 // pred_check_branch
      %26 = sbr.rel (0) target = $region17
    $region16: #{_lambda_.6} parent=1 // pred_region
      %28 = vsyncadd [#allocation3], 0
      %s29 = sshll.u32 %s3, 4
      %s30 = int_to_ptr.hbm [resolvable:$true] %s29
      %s31 = sshll.u32 [#allocation2], 4
      %s32 = int_to_ptr.vmem [resolvable:$true] %s31
      %37 = dma.hbm_to_vmem [thread:$0]  %s30, 1024, %s32, [#allocation3], 64, 64, 4
    $region17: #{_lambda_.6} parent=1 // pred_fallthru
      _
    // Predicated region
    $region18: #{_lambda_.6} parent=1 // pred_check
      _
    $region19: #{_lambda_.6} parent=1 // pred_check_branch
      %39 = sbr.rel (0) target = $region21
    $region20: #{_lambda_.6} parent=1 // pred_region
      _
    $region21: #{_lambda_.6} parent=1 // pred_fallthru
      _
    // Predicated region
    $region22: #{_lambda_.6} parent=1 // pred_check
      _
    $region23: #{_lambda_.6} parent=1 // pred_check_branch
      %41 = sbr.rel (0) target = $region25
    $region24: #{_lambda_.6} parent=1 // pred_region
      _
    $region25: #{_lambda_.6} parent=1 // pred_fallthru
      _
    // Predicated region
    $region26: #{_lambda_.6} parent=1 // pred_check
      _
    $region27: #{_lambda_.6} parent=1 // pred_check_branch
      %43 = sbr.rel (0) target = $region29
    $region28: #{_lambda_.6} parent=1 // pred_region
      _
    $region29: #{_lambda_.6} parent=1 // pred_fallthru
      _
    // Predicated region
    $region30: #{_lambda_.6} parent=1 // pred_check
      _
    $region31: #{_lambda_.6} parent=1 // pred_check_branch
      %45 = sbr.rel (0) target = $region33
    $region32: #{_lambda_.6} parent=1 // pred_region
      %47 = vsyncadd [#allocation5], 0
      %s49 = sshll.u32 %s7, 4
      %s50 = int_to_ptr.hbm [resolvable:$true] %s49
      %s51 = sshll.u32 [#allocation4], 4
      %s52 = int_to_ptr.vmem [resolvable:$true] %s51
      %54 = dma.hbm_to_vmem [thread:$0]  %s50, 576, %s52, [#allocation5]
    $region33: #{_lambda_.6} parent=1 // pred_fallthru
      _
    // Predicated region
    $region34: #{_lambda_.6} parent=1 // pred_check
      _
    $region35: #{_lambda_.6} parent=1 // pred_check_branch
      %56 = sbr.rel (0) target = $region37
    $region36: #{_lambda_.6} parent=1 // pred_region
      _
    $region37: #{_lambda_.6} parent=1 // pred_fallthru
      _
    // Predicated region
    $region38: #{_lambda_.6} parent=1 // pred_check
      _
    $region39: #{_lambda_.6} parent=1 // pred_check_branch
      %58 = sbr.rel (0) target = $region41
    $region40: #{_lambda_.6} parent=1 // pred_region
      _
    $region41: #{_lambda_.6} parent=1 // pred_fallthru
      _
    // Predicated region
    $region42: #{_lambda_.6} parent=1 // pred_check
      _
    $region43: #{_lambda_.6} parent=1 // pred_check_branch
      %60 = sbr.rel (0) target = $region45
    $region44: #{_lambda_.6} parent=1 // pred_region
      %62 = vsyncadd [#allocation5], 0
      %s63 = sshll.u32 %s10, 4
      %s64 = int_to_ptr.hbm [resolvable:$true] %s63
      %s65 = sshll.u32 [#allocation6], 4
      %s66 = int_to_ptr.vmem [resolvable:$true] %s65
      %71 = dma.hbm_to_vmem [thread:$0]  %s64, 3072, %s66, [#allocation5], 64, 64, 4
    $region45: #{_lambda_.6} parent=1 // pred_fallthru
      _
    // Predicated region
    $region46: #{_lambda_.6} parent=1 // pred_check
      _
    $region47: #{_lambda_.6} parent=1 // pred_check_branch
      %73 = sbr.rel (0) target = $region49
    $region48: #{_lambda_.6} parent=1 // pred_region
      _
    $region49: #{_lambda_.6} parent=1 // pred_fallthru
      _
    // Predicated region
    $region50: #{_lambda_.6} parent=1 // pred_check
      _
    $region51: #{_lambda_.6} parent=1 // pred_check_branch
      %75 = sbr.rel (0) target = $region53
    $region52: #{_lambda_.6} parent=1 // pred_region
      %77 = dma.done [#allocation3], 1024
    $region53: #{_lambda_.6} parent=1 // pred_fallthru
      _
    // Predicated region
    $region54: #{_lambda_.6} parent=1 // pred_check
      _
    $region55: #{_lambda_.6} parent=1 // pred_check_branch
      %79 = sbr.rel (0) target = $region57
    $region56: #{_lambda_.6} parent=1 // pred_region
      %81 = dma.done [#allocation5], 576
    $region57: #{_lambda_.6} parent=1 // pred_fallthru
      _
    // Predicated region
    $region58: #{_lambda_.6} parent=1 // pred_check
      _
    $region59: #{_lambda_.6} parent=1 // pred_check_branch
      %83 = sbr.rel (0) target = $region61
    $region60: #{_lambda_.6} parent=1 // pred_region
      %85 = dma.done [#allocation5], 3072
    $region61: #{_lambda_.6} parent=1 // pred_fallthru
      _
    %v87 = vld [vmem:[%s0] sm:$0x3]
    %v88 = vld [vmem:[%s1] sm:$0x1]
    %90 = vset.pattern.permute.xlu0 0
    %91 = vperm.xlu0 %90, %v87
    %v92 = vpop.permute.xlu0 %91
    %v95 = vperm.slane %v88, 0
    %v97 = vmul.f32 %v92, %v95
    %v98 = vld [vmem:[%s2] sm:$0x1]
    %v100 = vperm.slane %v98, 0
    %v102 = vadd.f32 %v97, %v100
    %v103 = vmax.f32 %v102, 0.0
    %vm104 = vcmp.ne.f32.partialorder %v102, %v102
    %v105 = vadd.f32 %v102, 0.0
    %v106 = vand.u32 2147483647, %v102
    %v107 = vsub.f32 0.0, %v106
    %v108 = vmul.f32 %v107, 1.442695
    %v109 = vpow.pop %v108
    %v110 = vadd.f32 %v109, 1.0
    %v111 = vlog2.pop %v110
    %v112 = vmul.f32 %v111, 0.6931472
    %v113 = vmul.f32 -0.5, %v109
    %v114 = vadd.f32 %v113, 1.0
    %v115 = vmul.f32 %v114, %v109
    %v116 = vand.u32 2147483647, %v109
    %vm117 = vcmp.lt.f32.partialorder %v116, 0.0004427343
    %v118 = vsel %vm117, %v115, %v112
    %v119 = vadd.f32 %v103, %v118
    %v120 = vsel %vm104, %v105, %v119
    %v121 = vtanh.pop %v120
    %v122 = vmul.f32 %v102, %v121
    %v123 = vpack.c.bf16 %v122, %v122
    %v124 = vld [vmem:[#allocation2] sm:$0xf]
    %v125 = vld [vmem:[#allocation2 + $0x4] sm:$0xf]
    %v126 = vld [vmem:[#allocation2 + $0x8] sm:$0xf]
    %v127 = vld [vmem:[#allocation2 + $0xc] sm:$0xf]
    %v128 = vld [vmem:[#allocation2 + $0x10] sm:$0xf]
    %v129 = vld [vmem:[#allocation2 + $0x14] sm:$0xf]
    %v130 = vld [vmem:[#allocation2 + $0x18] sm:$0xf]
    %v131 = vld [vmem:[#allocation2 + $0x1c] sm:$0xf]
    %v132 = vld [vmem:[#allocation2 + $0x20] sm:$0xf]
    %v133 = vld [vmem:[#allocation2 + $0x24] sm:$0xf]
    %v134 = vld [vmem:[#allocation2 + $0x28] sm:$0xf]
    %v135 = vld [vmem:[#allocation2 + $0x2c] sm:$0xf]
    %v136 = vld [vmem:[#allocation2 + $0x30] sm:$0xf]
    %v137 = vld [vmem:[#allocation2 + $0x34] sm:$0xf]
    %v138 = vld [vmem:[#allocation2 + $0x38] sm:$0xf]
    %v139 = vld [vmem:[#allocation2 + $0x3c] sm:$0xf]
    %v140 = vld [vmem:[%s4] sm:$0x1]
    %v142 = vperm.slane %v140, 0
    %v160 = vunpack.c.l.b16 %v124
    %v161 = vunpack.c.l.b16 %v125
    %v162 = vunpack.c.l.b16 %v126
    %v163 = vunpack.c.l.b16 %v127
    %v164 = vunpack.c.l.b16 %v128
    %v165 = vunpack.c.l.b16 %v129
    %v166 = vunpack.c.l.b16 %v130
    %v167 = vunpack.c.l.b16 %v131
    %v168 = vunpack.c.l.b16 %v132
    %v169 = vunpack.c.l.b16 %v133
    %v170 = vunpack.c.l.b16 %v134
    %v171 = vunpack.c.l.b16 %v135
    %v172 = vunpack.c.l.b16 %v136
    %v173 = vunpack.c.l.b16 %v137
    %v174 = vunpack.c.l.b16 %v138
    %v175 = vunpack.c.l.b16 %v139
    %v176 = vpack.c.b16 %v161, %v160
    %v177 = vpack.c.b16 %v163, %v162
    %v178 = vpack.c.b16 %v165, %v164
    %v179 = vpack.c.b16 %v167, %v166
    %v180 = vpack.c.b16 %v169, %v168
    %v181 = vpack.c.b16 %v171, %v170
    %v182 = vpack.c.b16 %v173, %v172
    %v183 = vpack.c.b16 %v175, %v174
    %192 = vmatpush.bf16.msra.mxu0 %v183
    %193 = vmatpush.bf16.msra.mxu0 %v182
    %194 = vmatpush.bf16.msra.mxu0 %v181
    %195 = vmatpush.bf16.msra.mxu0 %v180
    %196 = vmatpush.bf16.msra.mxu0 %v179
    %197 = vmatpush.bf16.msra.mxu0 %v178
    %198 = vmatpush.bf16.msra.mxu0 %v177
    %199 = vmatpush.bf16.msra.mxu0 %v176
    %200 = vmatmul.bf16.gmra.mxu0 %v123
    %v201 = vpop.f32.mrf.mxu0
    %v202 = vadd.f32 %v142, %v201
    %v203 = vpop.f32.mrf.mxu0
    %204 = vdwg.mxu0
    %v205 = vld [vmem:[%s5] sm:$0x3]
    %v206 = vpack.c.bf16 %v205, %v205
    %v207 = vld [vmem:[#allocation4] sm:$0xff]
    %v208 = vld [vmem:[#allocation4 + $0x8] sm:$0xff]
    %v209 = vld [vmem:[#allocation4 + $0x10] sm:$0xff]
    %v210 = vld [vmem:[#allocation4 + $0x18] sm:$0xff]
    %v211 = vld [vmem:[#allocation4 + $0x20] sm:$0xf]
    %v212 = vld [vmem:[%s8] sm:$0xff]
    %v213 = vld [vmem:[%s8 + $0x8] sm:$0x1]
    %v216 = vperm.slane %v212, 0
    %v217 = vperm.slane %v212, 1
    %v218 = vperm.slane %v212, 2
    %v219 = vperm.slane %v212, 3
    %v220 = vperm.slane %v212, 4
    %v221 = vperm.slane %v212, 5
    %v222 = vperm.slane %v212, 6
    %v223 = vperm.slane %v212, 7
    %v224 = vperm.slane %v213, 0
    %v239 = vunpack.c.l.b16 %v207
    %v240 = vunpack.c.h.b16 %v207
    %v241 = vunpack.c.l.b16 %v208
    %v242 = vunpack.c.h.b16 %v208
    %v243 = vunpack.c.l.b16 %v209
    %v244 = vunpack.c.h.b16 %v209
    %v245 = vunpack.c.l.b16 %v210
    %v246 = vunpack.c.h.b16 %v210
    %v247 = vunpack.c.l.b16 %v211
    %v248 = vpack.c.b16 %v239, %v239
    %v249 = vpack.c.b16 %v240, %v240
    %v250 = vpack.c.b16 %v241, %v241
    %v251 = vpack.c.b16 %v242, %v242
    %v252 = vpack.c.b16 %v243, %v243
    %v253 = vpack.c.b16 %v244, %v244
    %v254 = vpack.c.b16 %v245, %v245
    %v255 = vpack.c.b16 %v246, %v246
    %v256 = vpack.c.b16 %v247, %v247
    %vm257 = vcmask 64512
    %v259 = vsel %vm257, %v206, 0
    %vm261 = vcmask 1043456
    %v263 = vsel %vm261, %v248, 0
    %v266 = vsel %vm261, %v249, 0
    %v269 = vsel %vm261, %v250, 0
    %v272 = vsel %vm261, %v251, 0
    %v275 = vsel %vm261, %v252, 0
    %v278 = vsel %vm261, %v253, 0
    %v281 = vsel %vm261, %v254, 0
    %v284 = vsel %vm261, %v255, 0
    %v287 = vsel %vm261, %v256, 0
    %289 = vmatpush.bf16.msra.mxu0 0
    %290 = vmatpush.bf16.msra.mxu0 0
    %291 = vmatpush.bf16.msra.mxu0 0
    %292 = vmatpush.bf16.msra.mxu0 0
    %293 = vmatpush.bf16.msra.mxu0 0
    %294 = vmatpush.bf16.msra.mxu0 0
    %295 = vmatpush.bf16.msra.mxu0 0
    %296 = vmatpush.bf16.msra.mxu0 %v263
    %297 = vmatmul.bf16.gmra.mxu0 %v259
    %v298 = vpop.f32.mrf.mxu0
    %v299 = vadd.f32 %v216, %v298
    %v300 = vpop.f32.mrf.mxu0
    %301 = vdwg.mxu0
    %302 = vmatpush.bf16.msra.mxu0 0
    %303 = vmatpush.bf16.msra.mxu0 0
    %304 = vmatpush.bf16.msra.mxu0 0
    %305 = vmatpush.bf16.msra.mxu0 0
    %306 = vmatpush.bf16.msra.mxu0 0
    %307 = vmatpush.bf16.msra.mxu0 0
    %308 = vmatpush.bf16.msra.mxu0 0
    %309 = vmatpush.bf16.msra.mxu0 %v266
    %310 = vmatmul.bf16.gmra.mxu0 %v259
    %v311 = vpop.f32.mrf.mxu0
    %v312 = vadd.f32 %v217, %v311
    %v313 = vpop.f32.mrf.mxu0
    %314 = vdwg.mxu0
    %315 = vmatpush.bf16.msra.mxu0 0
    %316 = vmatpush.bf16.msra.mxu0 0
    %317 = vmatpush.bf16.msra.mxu0 0
    %318 = vmatpush.bf16.msra.mxu0 0
    %319 = vmatpush.bf16.msra.mxu0 0
    %320 = vmatpush.bf16.msra.mxu0 0
    %321 = vmatpush.bf16.msra.mxu0 0
    %322 = vmatpush.bf16.msra.mxu0 %v269
    %323 = vmatmul.bf16.gmra.mxu0 %v259
    %v324 = vpop.f32.mrf.mxu0
    %v325 = vadd.f32 %v218, %v324
    %v326 = vpop.f32.mrf.mxu0
    %327 = vdwg.mxu0
    %328 = vmatpush.bf16.msra.mxu0 0
    %329 = vmatpush.bf16.msra.mxu0 0
    %330 = vmatpush.bf16.msra.mxu0 0
    %331 = vmatpush.bf16.msra.mxu0 0
    %332 = vmatpush.bf16.msra.mxu0 0
    %333 = vmatpush.bf16.msra.mxu0 0
    %334 = vmatpush.bf16.msra.mxu0 0
    %335 = vmatpush.bf16.msra.mxu0 %v272
    %336 = vmatmul.bf16.gmra.mxu0 %v259
    %v337 = vpop.f32.mrf.mxu0
    %v338 = vadd.f32 %v219, %v337
    %v339 = vpop.f32.mrf.mxu0
    %340 = vdwg.mxu0
    %341 = vmatpush.bf16.msra.mxu0 0
    %342 = vmatpush.bf16.msra.mxu0 0
    %343 = vmatpush.bf16.msra.mxu0 0
    %344 = vmatpush.bf16.msra.mxu0 0
    %345 = vmatpush.bf16.msra.mxu0 0
    %346 = vmatpush.bf16.msra.mxu0 0
    %347 = vmatpush.bf16.msra.mxu0 0
    %348 = vmatpush.bf16.msra.mxu0 %v275
    %349 = vmatmul.bf16.gmra.mxu0 %v259
    %v350 = vpop.f32.mrf.mxu0
    %v351 = vadd.f32 %v220, %v350
    %v352 = vpop.f32.mrf.mxu0
    %353 = vdwg.mxu0
    %354 = vmatpush.bf16.msra.mxu0 0
    %355 = vmatpush.bf16.msra.mxu0 0
    %356 = vmatpush.bf16.msra.mxu0 0
    %357 = vmatpush.bf16.msra.mxu0 0
    %358 = vmatpush.bf16.msra.mxu0 0
    %359 = vmatpush.bf16.msra.mxu0 0
    %360 = vmatpush.bf16.msra.mxu0 0
    %361 = vmatpush.bf16.msra.mxu0 %v278
    %362 = vmatmul.bf16.gmra.mxu0 %v259
    %v363 = vpop.f32.mrf.mxu0
    %v364 = vadd.f32 %v221, %v363
    %v365 = vpop.f32.mrf.mxu0
    %366 = vdwg.mxu0
    %367 = vmatpush.bf16.msra.mxu0 0
    %368 = vmatpush.bf16.msra.mxu0 0
    %369 = vmatpush.bf16.msra.mxu0 0
    %370 = vmatpush.bf16.msra.mxu0 0
    %371 = vmatpush.bf16.msra.mxu0 0
    %372 = vmatpush.bf16.msra.mxu0 0
    %373 = vmatpush.bf16.msra.mxu0 0
    %374 = vmatpush.bf16.msra.mxu0 %v281
    %375 = vmatmul.bf16.gmra.mxu0 %v259
    %v376 = vpop.f32.mrf.mxu0
    %v377 = vadd.f32 %v222, %v376
    %v378 = vpop.f32.mrf.mxu0
    %379 = vdwg.mxu0
    %380 = vmatpush.bf16.msra.mxu0 0
    %381 = vmatpush.bf16.msra.mxu0 0
    %382 = vmatpush.bf16.msra.mxu0 0
    %383 = vmatpush.bf16.msra.mxu0 0
    %384 = vmatpush.bf16.msra.mxu0 0
    %385 = vmatpush.bf16.msra.mxu0 0
    %386 = vmatpush.bf16.msra.mxu0 0
    %387 = vmatpush.bf16.msra.mxu0 %v284
    %388 = vmatmul.bf16.gmra.mxu0 %v259
    %v389 = vpop.f32.mrf.mxu0
    %v390 = vadd.f32 %v223, %v389
    %v391 = vpop.f32.mrf.mxu0
    %392 = vdwg.mxu0
    %393 = vmatpush.bf16.msra.mxu0 0
    %394 = vmatpush.bf16.msra.mxu0 0
    %395 = vmatpush.bf16.msra.mxu0 0
    %396 = vmatpush.bf16.msra.mxu0 0
    %397 = vmatpush.bf16.msra.mxu0 0
    %398 = vmatpush.bf16.msra.mxu0 0
    %399 = vmatpush.bf16.msra.mxu0 0
    %400 = vmatpush.bf16.msra.mxu0 %v287
    %401 = vmatmul.bf16.gmra.mxu0 %v259
    %v402 = vpop.f32.mrf.mxu0
    %v403 = vadd.f32 %v224, %v402
    %v404 = vpop.f32.mrf.mxu0
    %405 = vdwg.mxu0
    %v406 = vld [vmem:[%s9] sm:$0x7]
    %v407 = vld [vmem:[%s6] sm:$0x3]
    %409 = vset.pattern.permute.xlu0 0
    %410 = vperm.xlu0 %409, %v407
    %v411 = vpop.permute.xlu0 %410
    %v413 = vmul.f32 %v299, %v411
    %v414 = vmul.f32 %v312, %v411
    %v415 = vmul.f32 %v325, %v411
    %v417 = vperm.slane %v406, 0
    %v418 = vperm.slane %v406, 1
    %v419 = vperm.slane %v406, 2
    %v423 = vadd.f32 %v413, %v417
    %v424 = vadd.f32 %v414, %v418
    %v425 = vadd.f32 %v415, %v419
    %426 = vset.pattern.permute.xlu0 1
    %427 = vperm.xlu0 %426, %v407
    %v428 = vpop.permute.xlu0 %427
    %v430 = vmul.f32 %v338, %v428
    %v431 = vmul.f32 %v351, %v428
    %v432 = vmul.f32 %v364, %v428
    %v433 = vadd.f32 %v430, %v417
    %v434 = vadd.f32 %v431, %v418
    %v435 = vadd.f32 %v432, %v419
    %436 = vset.pattern.permute.xlu0 2
    %437 = vperm.xlu0 %436, %v407
    %v438 = vpop.permute.xlu0 %437
    %v440 = vmul.f32 %v377, %v438
    %v441 = vmul.f32 %v390, %v438
    %v442 = vmul.f32 %v403, %v438
    %v443 = vadd.f32 %v440, %v417
    %v444 = vadd.f32 %v441, %v418
    %v445 = vadd.f32 %v442, %v419
    %v447 = vrot.slane %v423, 1
    %v450 = vrot.slane %v433, 1
    %v452 = vrot.slane %v443, 1
    %v453 = vperm.slane %v433, 0
    %v454 = vperm.slane %v450, 0
    %v457 = vperm.slane %v443, 0
    %v458 = vperm.slane %v452, 0
    %vm461 = vcmask 1040384
    %v462 = vsel %vm461, %v423, %v453
    %v463 = vsel %vm461, %v447, %v454
    %vm464 = vcmask 1041408
    %v465 = vsel %vm464, %v462, %v457
    %v466 = vsel %vm464, %v463, %v458
    %v468 = vrot.slane %v424, 1
    %v471 = vrot.slane %v434, 1
    %v473 = vrot.slane %v444, 1
    %v474 = vperm.slane %v434, 0
    %v475 = vperm.slane %v471, 0
    %v478 = vperm.slane %v444, 0
    %v479 = vperm.slane %v473, 0
    %v482 = vsel %vm461, %v424, %v474
    %v483 = vsel %vm461, %v468, %v475
    %v484 = vsel %vm464, %v482, %v478
    %v485 = vsel %vm464, %v483, %v479
    %v487 = vrot.slane %v425, 1
    %v490 = vrot.slane %v435, 1
    %v492 = vrot.slane %v445, 1
    %v493 = vperm.slane %v435, 0
    %v494 = vperm.slane %v490, 0
    %v497 = vperm.slane %v445, 0
    %v498 = vperm.slane %v492, 0
    %v501 = vsel %vm461, %v425, %v493
    %v502 = vsel %vm461, %v487, %v494
    %v503 = vsel %vm464, %v501, %v497
    %v504 = vsel %vm464, %v502, %v498
    %v505 = vpack.c.bf16 %v465, %v465
    %v506 = vpack.c.bf16 %v466, %v466
    %v507 = vpack.c.bf16 %v484, %v484
    %v508 = vpack.c.bf16 %v485, %v485
    %vm509 = vcmask 523264
    %v511 = vsel %vm509, %v505, 0
    %v514 = vsel %vm509, %v507, 0
    %516 = vmatpush.bf16.xpose.msra.mxu0 0
    %517 = vmatpush.bf16.xpose.msra.mxu0 0
    %518 = vmatpush.bf16.xpose.msra.mxu0 0
    %519 = vmatpush.bf16.xpose.msra.mxu0 0
    %520 = vmatpush.bf16.xpose.msra.mxu0 0
    %521 = vmatpush.bf16.xpose.msra.mxu0 0
    %522 = vmatpush.bf16.xpose.msra.mxu0 0
    %523 = vmatpush.bf16.xpose.msra.mxu0 %v514
    %524 = vmatmul.bf16.gmra.mxu0 %v511
    %v525 = vpop.f32.mrf.mxu0
    %v526 = vadd.f32 0.0, %v525
    %v527 = vpop.f32.mrf.mxu0
    %528 = vdwg.mxu0
    %v530 = vsel %vm509, %v506, 0
    %v533 = vsel %vm509, %v508, 0
    %535 = vmatpush.bf16.xpose.msra.mxu0 0
    %536 = vmatpush.bf16.xpose.msra.mxu0 0
    %537 = vmatpush.bf16.xpose.msra.mxu0 0
    %538 = vmatpush.bf16.xpose.msra.mxu0 0
    %539 = vmatpush.bf16.xpose.msra.mxu0 0
    %540 = vmatpush.bf16.xpose.msra.mxu0 0
    %541 = vmatpush.bf16.xpose.msra.mxu0 0
    %542 = vmatpush.bf16.xpose.msra.mxu0 %v533
    %543 = vmatmul.bf16.gmra.mxu0 %v530
    %v544 = vpop.f32.mrf.mxu0
    %v545 = vadd.f32 0.0, %v544
    %v546 = vpop.f32.mrf.mxu0
    %547 = vdwg.mxu0
    %vm548 = vcmask 18432
    %v549 = vsel %vm548, %v526, -inf
    %550 = vmax.xlane.f32.xlu0 %v549
    %v551 = vpop.xlane.xlu0 %550
    %v552 = vsel %vm548, %v545, -inf
    %553 = vmax.xlane.f32.xlu0 %v552
    %v554 = vpop.xlane.xlu0 %553
    %v555 = vsub.f32 %v526, %v551
    %v556 = vsub.f32 %v545, %v554
    %v557 = vmul.f32 %v555, 1.442695
    %v558 = vpow.pop %v557
    %v559 = vmul.f32 %v556, 1.442695
    %v560 = vpow.pop %v559
    %v561 = vsel %vm548, %v558, 0.0
    %562 = vadd.xlane.f32.xlu0 %v561
    %v563 = vpop.xlane.xlu0 %562
    %v564 = vsel %vm548, %v560, 0.0
    %565 = vadd.xlane.f32.xlu0 %v564
    %v566 = vpop.xlane.xlu0 %565
    %v567 = vrcp.pop %v563
    %v568 = vrcp.pop %v566
    %v569 = vmul.f32 %v558, %v567
    %v570 = vmul.f32 %v560, %v568
    %v571 = vpack.c.bf16 %v569, %v569
    %v572 = vpack.c.bf16 %v570, %v570
    %v573 = vpack.c.bf16 %v503, %v503
    %v574 = vpack.c.bf16 %v504, %v504
    %vm575 = vcmask 23552
    %v577 = vsel %vm575, %v571, 0
    %v579 = vsel %vm461, 4294967295, 65535
    %v580 = vsel %vm464, %v579, 0
    %v582 = vand.u32 %v573, %v580
    %584 = vmatpush.bf16.msra.mxu0 0
    %585 = vmatpush.bf16.msra.mxu0 0
    %586 = vmatpush.bf16.msra.mxu0 0
    %587 = vmatpush.bf16.msra.mxu0 0
    %588 = vmatpush.bf16.msra.mxu0 0
    %589 = vmatpush.bf16.msra.mxu0 0
    %590 = vmatpush.bf16.msra.mxu0 0
    %591 = vmatpush.bf16.msra.mxu0 %v582
    %592 = vmatmul.bf16.gmra.mxu0 %v577
    %v593 = vpop.f32.mrf.mxu0
    %v594 = vadd.f32 0.0, %v593
    %v595 = vpop.f32.mrf.mxu0
    %596 = vdwg.mxu0
    %v598 = vsel %vm575, %v572, 0
    %v601 = vand.u32 %v574, %v580
    %603 = vmatpush.bf16.msra.mxu0 0
    %604 = vmatpush.bf16.msra.mxu0 0
    %605 = vmatpush.bf16.msra.mxu0 0
    %606 = vmatpush.bf16.msra.mxu0 0
    %607 = vmatpush.bf16.msra.mxu0 0
    %608 = vmatpush.bf16.msra.mxu0 0
    %609 = vmatpush.bf16.msra.mxu0 0
    %610 = vmatpush.bf16.msra.mxu0 %v601
    %611 = vmatmul.bf16.gmra.mxu0 %v598
    %v612 = vpop.f32.mrf.mxu0
    %v613 = vadd.f32 0.0, %v612
    %v614 = vpop.f32.mrf.mxu0
    %615 = vdwg.mxu0
    %v617 = vunpack.c.l.b16 %v505
    %v618 = vpack.c.b16 %v617, %v617
    %619 = vrot.lane.b32.xlu0 %v618, 64
    %v620 = vpop.permute.xlu0 %619
    %v622 = vunpack.c.l.b16 %v507
    %v623 = vpack.c.b16 %v622, %v622
    %624 = vrot.lane.b32.xlu0 %v623, 64
    %v625 = vpop.permute.xlu0 %624
    %v627 = vsel %vm509, %v620, 0
    %v630 = vsel %vm509, %v625, 0
    %632 = vmatpush.bf16.xpose.msra.mxu0 0
    %633 = vmatpush.bf16.xpose.msra.mxu0 0
    %634 = vmatpush.bf16.xpose.msra.mxu0 0
    %635 = vmatpush.bf16.xpose.msra.mxu0 0
    %636 = vmatpush.bf16.xpose.msra.mxu0 0
    %637 = vmatpush.bf16.xpose.msra.mxu0 0
    %638 = vmatpush.bf16.xpose.msra.mxu0 0
    %639 = vmatpush.bf16.xpose.msra.mxu0 %v630
    %640 = vmatmul.bf16.gmra.mxu0 %v627
    %v641 = vpop.f32.mrf.mxu0
    %v642 = vadd.f32 0.0, %v641
    %v643 = vpop.f32.mrf.mxu0
    %644 = vdwg.mxu0
    %v646 = vunpack.c.l.b16 %v506
    %v647 = vpack.c.b16 %v646, %v646
    %648 = vrot.lane.b32.xlu0 %v647, 64
    %v649 = vpop.permute.xlu0 %648
    %v651 = vunpack.c.l.b16 %v508
    %v652 = vpack.c.b16 %v651, %v651
    %653 = vrot.lane.b32.xlu0 %v652, 64
    %v654 = vpop.permute.xlu0 %653
    %v656 = vsel %vm509, %v649, 0
    %v659 = vsel %vm509, %v654, 0
    %661 = vmatpush.bf16.xpose.msra.mxu0 0
    %662 = vmatpush.bf16.xpose.msra.mxu0 0
    %663 = vmatpush.bf16.xpose.msra.mxu0 0
    %664 = vmatpush.bf16.xpose.msra.mxu0 0
    %665 = vmatpush.bf16.xpose.msra.mxu0 0
    %666 = vmatpush.bf16.xpose.msra.mxu0 0
    %667 = vmatpush.bf16.xpose.msra.mxu0 0
    %668 = vmatpush.bf16.xpose.msra.mxu0 %v659
    %669 = vmatmul.bf16.gmra.mxu0 %v656
    %v670 = vpop.f32.mrf.mxu0
    %v671 = vadd.f32 0.0, %v670
    %v672 = vpop.f32.mrf.mxu0
    %673 = vdwg.mxu0
    %v674 = vsel %vm548, %v642, -inf
    %675 = vmax.xlane.f32.xlu0 %v674
    %v676 = vpop.xlane.xlu0 %675
    %v677 = vsel %vm548, %v671, -inf
    %678 = vmax.xlane.f32.xlu0 %v677
    %v679 = vpop.xlane.xlu0 %678
    %v680 = vsub.f32 %v642, %v676
    %v681 = vsub.f32 %v671, %v679
    %v682 = vmul.f32 %v680, 1.442695
    %v683 = vpow.pop %v682
    %v684 = vmul.f32 %v681, 1.442695
    %v685 = vpow.pop %v684
    %v686 = vsel %vm548, %v683, 0.0
    %687 = vadd.xlane.f32.xlu0 %v686
    %v688 = vpop.xlane.xlu0 %687
    %v689 = vsel %vm548, %v685, 0.0
    %690 = vadd.xlane.f32.xlu0 %v689
    %v691 = vpop.xlane.xlu0 %690
    %v692 = vrcp.pop %v688
    %v693 = vrcp.pop %v691
    %v694 = vmul.f32 %v683, %v692
    %v695 = vmul.f32 %v685, %v693
    %v696 = vpack.c.bf16 %v694, %v694
    %v697 = vpack.c.bf16 %v695, %v695
    %v699 = vunpack.c.l.b16 %v573
    %v700 = vpack.c.b16 %v699, %v699
    %701 = vrot.lane.b32.xlu0 %v700, 64
    %v702 = vpop.permute.xlu0 %701
    %v704 = vsel %vm575, %v696, 0
    %v707 = vand.u32 %v702, %v580
    %709 = vmatpush.bf16.msra.mxu0 0
    %710 = vmatpush.bf16.msra.mxu0 0
    %711 = vmatpush.bf16.msra.mxu0 0
    %712 = vmatpush.bf16.msra.mxu0 0
    %713 = vmatpush.bf16.msra.mxu0 0
    %714 = vmatpush.bf16.msra.mxu0 0
    %715 = vmatpush.bf16.msra.mxu0 0
    %716 = vmatpush.bf16.msra.mxu0 %v707
    %717 = vmatmul.bf16.gmra.mxu0 %v704
    %v718 = vpop.f32.mrf.mxu0
    %v719 = vadd.f32 0.0, %v718
    %v720 = vpop.f32.mrf.mxu0
    %721 = vdwg.mxu0
    %v723 = vunpack.c.l.b16 %v574
    %v724 = vpack.c.b16 %v723, %v723
    %725 = vrot.lane.b32.xlu0 %v724, 64
    %v726 = vpop.permute.xlu0 %725
    %v728 = vsel %vm575, %v697, 0
    %v731 = vand.u32 %v726, %v580
    %733 = vmatpush.bf16.msra.mxu0 0
    %734 = vmatpush.bf16.msra.mxu0 0
    %735 = vmatpush.bf16.msra.mxu0 0
    %736 = vmatpush.bf16.msra.mxu0 0
    %737 = vmatpush.bf16.msra.mxu0 0
    %738 = vmatpush.bf16.msra.mxu0 0
    %739 = vmatpush.bf16.msra.mxu0 0
    %740 = vmatpush.bf16.msra.mxu0 %v731
    %741 = vmatmul.bf16.gmra.mxu0 %v728
    %v742 = vpop.f32.mrf.mxu0
    %v743 = vadd.f32 0.0, %v742
    %v744 = vpop.f32.mrf.mxu0
    %745 = vdwg.mxu0
    %748 = vrot.lane.b32.xlu0 %v719, 64
    %v749 = vpop.permute.xlu0 %748
    %750 = vrot.lane.b32.xlu0 %v743, 64
    %v751 = vpop.permute.xlu0 %750
    %v754 = vsel %vm509, %v594, %v749
    %v755 = vsel %vm509, %v613, %v751
    %v756 = vld [vmem:[%s11] sm:$0x1]
    %v757 = vpack.c.bf16 %v754, %v754
    %v758 = vpack.c.bf16 %v755, %v755
    %v759 = vld [vmem:[#allocation6] sm:$0xf]
    %v760 = vld [vmem:[#allocation6 + $0x4] sm:$0xf]
    %v761 = vld [vmem:[#allocation6 + $0x8] sm:$0xf]
    %v762 = vld [vmem:[#allocation6 + $0xc] sm:$0xf]
    %v763 = vld [vmem:[#allocation6 + $0x10] sm:$0xf]
    %v764 = vld [vmem:[#allocation6 + $0x14] sm:$0xf]
    %v765 = vld [vmem:[#allocation6 + $0x18] sm:$0xf]
    %v766 = vld [vmem:[#allocation6 + $0x1c] sm:$0xf]
    %v767 = vld [vmem:[#allocation6 + $0x20] sm:$0xf]
    %v768 = vld [vmem:[#allocation6 + $0x24] sm:$0xf]
    %v769 = vld [vmem:[#allocation6 + $0x28] sm:$0xf]
    %v770 = vld [vmem:[#allocation6 + $0x2c] sm:$0xf]
    %v771 = vld [vmem:[#allocation6 + $0x30] sm:$0xf]
    %v772 = vld [vmem:[#allocation6 + $0x34] sm:$0xf]
    %v773 = vld [vmem:[#allocation6 + $0x38] sm:$0xf]
    %v774 = vld [vmem:[#allocation6 + $0x3c] sm:$0xf]
    %v777 = vunpack.c.l.b16 %v757
    %v778 = vunpack.c.l.b16 %v758
    %v779 = vrot.slane %v778, 7
    %vm780 = vcmask 1041409
    %v781 = vsel %vm780, %v779, %v777
    %v782 = vpack.c.b16 %v781, %v781
    %v800 = vunpack.c.l.b16 %v759
    %v801 = vunpack.c.l.b16 %v760
    %v802 = vunpack.c.l.b16 %v761
    %v803 = vunpack.c.l.b16 %v762
    %v804 = vunpack.c.l.b16 %v763
    %v805 = vunpack.c.l.b16 %v764
    %v806 = vunpack.c.l.b16 %v765
    %v807 = vunpack.c.l.b16 %v766
    %v808 = vunpack.c.l.b16 %v767
    %v809 = vunpack.c.l.b16 %v768
    %v810 = vunpack.c.l.b16 %v769
    %v811 = vunpack.c.l.b16 %v770
    %v812 = vunpack.c.l.b16 %v771
    %v813 = vunpack.c.l.b16 %v772
    %v814 = vunpack.c.l.b16 %v773
    %v815 = vunpack.c.l.b16 %v774
    %v816 = vpack.c.b16 %v801, %v800
    %v817 = vpack.c.b16 %v803, %v802
    %v818 = vpack.c.b16 %v805, %v804
    %v819 = vpack.c.b16 %v807, %v806
    %v820 = vpack.c.b16 %v809, %v808
    %v821 = vpack.c.b16 %v811, %v810
    %v822 = vpack.c.b16 %v813, %v812
    %v823 = vpack.c.b16 %v815, %v814
    %832 = vmatpush.bf16.msra.mxu0 %v823
    %833 = vmatpush.bf16.msra.mxu0 %v822
    %834 = vmatpush.bf16.msra.mxu0 %v821
    %835 = vmatpush.bf16.msra.mxu0 %v820
    %836 = vmatpush.bf16.msra.mxu0 %v819
    %837 = vmatpush.bf16.msra.mxu0 %v818
    %838 = vmatpush.bf16.msra.mxu0 %v817
    %839 = vmatpush.bf16.msra.mxu0 %v816
    %840 = vmatmul.bf16.gmra.mxu0 %v782
    %v841 = vpop.f32.mrf.mxu0
    %v842 = vadd.f32 0.0, %v841
    %v843 = vpop.f32.mrf.mxu0
    %844 = vdwg.mxu0
    %v846 = vperm.slane %v756, 0
    %v848 = vadd.f32 %v846, %v842
    %v849 = vld [vmem:[#allocation6 + $0x40] sm:$0xf]
    %v850 = vld [vmem:[#allocation6 + $0x44] sm:$0xf]
    %v851 = vld [vmem:[#allocation6 + $0x48] sm:$0xf]
    %v852 = vld [vmem:[#allocation6 + $0x4c] sm:$0xf]
    %v853 = vld [vmem:[#allocation6 + $0x50] sm:$0xf]
    %v854 = vld [vmem:[#allocation6 + $0x54] sm:$0xf]
    %v855 = vld [vmem:[#allocation6 + $0x58] sm:$0xf]
    %v856 = vld [vmem:[#allocation6 + $0x5c] sm:$0xf]
    %v857 = vld [vmem:[#allocation6 + $0x60] sm:$0xf]
    %v858 = vld [vmem:[#allocation6 + $0x64] sm:$0xf]
    %v859 = vld [vmem:[#allocation6 + $0x68] sm:$0xf]
    %v860 = vld [vmem:[#allocation6 + $0x6c] sm:$0xf]
    %v861 = vld [vmem:[#allocation6 + $0x70] sm:$0xf]
    %v862 = vld [vmem:[#allocation6 + $0x74] sm:$0xf]
    %v863 = vld [vmem:[#allocation6 + $0x78] sm:$0xf]
    %v864 = vld [vmem:[#allocation6 + $0x7c] sm:$0xf]
    %v865 = vrot.slane %v777, 1
    %v866 = vsel %vm780, %v778, %v865
    %v867 = vpack.c.b16 %v866, %v866
    %v885 = vunpack.c.l.b16 %v849
    %v886 = vunpack.c.l.b16 %v850
    %v887 = vunpack.c.l.b16 %v851
    %v888 = vunpack.c.l.b16 %v852
    %v889 = vunpack.c.l.b16 %v853
    %v890 = vunpack.c.l.b16 %v854
    %v891 = vunpack.c.l.b16 %v855
    %v892 = vunpack.c.l.b16 %v856
    %v893 = vunpack.c.l.b16 %v857
    %v894 = vunpack.c.l.b16 %v858
    %v895 = vunpack.c.l.b16 %v859
    %v896 = vunpack.c.l.b16 %v860
    %v897 = vunpack.c.l.b16 %v861
    %v898 = vunpack.c.l.b16 %v862
    %v899 = vunpack.c.l.b16 %v863
    %v900 = vunpack.c.l.b16 %v864
    %v901 = vpack.c.b16 %v886, %v885
    %v902 = vpack.c.b16 %v888, %v887
    %v903 = vpack.c.b16 %v890, %v889
    %v904 = vpack.c.b16 %v892, %v891
    %v905 = vpack.c.b16 %v894, %v893
    %v906 = vpack.c.b16 %v896, %v895
    %v907 = vpack.c.b16 %v898, %v897
    %v908 = vpack.c.b16 %v900, %v899
    %917 = vmatpush.bf16.msra.mxu0 %v908
    %918 = vmatpush.bf16.msra.mxu0 %v907
    %919 = vmatpush.bf16.msra.mxu0 %v906
    %920 = vmatpush.bf16.msra.mxu0 %v905
    %921 = vmatpush.bf16.msra.mxu0 %v904
    %922 = vmatpush.bf16.msra.mxu0 %v903
    %923 = vmatpush.bf16.msra.mxu0 %v902
    %924 = vmatpush.bf16.msra.mxu0 %v901
    %925 = vmatmul.bf16.gmra.mxu0 %v867
    %v926 = vpop.f32.mrf.mxu0
    %v927 = vadd.f32 0.0, %v926
    %v928 = vpop.f32.mrf.mxu0
    %929 = vdwg.mxu0
    %v930 = vadd.f32 %v848, %v927
    %v931 = vld [vmem:[#allocation6 + $0x80] sm:$0xf]
    %v932 = vld [vmem:[#allocation6 + $0x84] sm:$0xf]
    %v933 = vld [vmem:[#allocation6 + $0x88] sm:$0xf]
    %v934 = vld [vmem:[#allocation6 + $0x8c] sm:$0xf]
    %v935 = vld [vmem:[#allocation6 + $0x90] sm:$0xf]
    %v936 = vld [vmem:[#allocation6 + $0x94] sm:$0xf]
    %v937 = vld [vmem:[#allocation6 + $0x98] sm:$0xf]
    %v938 = vld [vmem:[#allocation6 + $0x9c] sm:$0xf]
    %v939 = vld [vmem:[#allocation6 + $0xa0] sm:$0xf]
    %v940 = vld [vmem:[#allocation6 + $0xa4] sm:$0xf]
    %v941 = vld [vmem:[#allocation6 + $0xa8] sm:$0xf]
    %v942 = vld [vmem:[#allocation6 + $0xac] sm:$0xf]
    %v943 = vld [vmem:[#allocation6 + $0xb0] sm:$0xf]
    %v944 = vld [vmem:[#allocation6 + $0xb4] sm:$0xf]
    %v945 = vld [vmem:[#allocation6 + $0xb8] sm:$0xf]
    %v946 = vld [vmem:[#allocation6 + $0xbc] sm:$0xf]
    %v947 = vrot.slane %v777, 2
    %v948 = vrot.slane %v778, 1
    %v949 = vsel %vm780, %v948, %v947
    %v950 = vpack.c.b16 %v949, %v949
    %v968 = vunpack.c.l.b16 %v931
    %v969 = vunpack.c.l.b16 %v932
    %v970 = vunpack.c.l.b16 %v933
    %v971 = vunpack.c.l.b16 %v934
    %v972 = vunpack.c.l.b16 %v935
    %v973 = vunpack.c.l.b16 %v936
    %v974 = vunpack.c.l.b16 %v937
    %v975 = vunpack.c.l.b16 %v938
    %v976 = vunpack.c.l.b16 %v939
    %v977 = vunpack.c.l.b16 %v940
    %v978 = vunpack.c.l.b16 %v941
    %v979 = vunpack.c.l.b16 %v942
    %v980 = vunpack.c.l.b16 %v943
    %v981 = vunpack.c.l.b16 %v944
    %v982 = vunpack.c.l.b16 %v945
    %v983 = vunpack.c.l.b16 %v946
    %v984 = vpack.c.b16 %v969, %v968
    %v985 = vpack.c.b16 %v971, %v970
    %v986 = vpack.c.b16 %v973, %v972
    %v987 = vpack.c.b16 %v975, %v974
    %v988 = vpack.c.b16 %v977, %v976
    %v989 = vpack.c.b16 %v979, %v978
    %v990 = vpack.c.b16 %v981, %v980
    %v991 = vpack.c.b16 %v983, %v982
    %1000 = vmatpush.bf16.msra.mxu0 %v991
    %1001 = vmatpush.bf16.msra.mxu0 %v990
    %1002 = vmatpush.bf16.msra.mxu0 %v989
    %1003 = vmatpush.bf16.msra.mxu0 %v988
    %1004 = vmatpush.bf16.msra.mxu0 %v987
    %1005 = vmatpush.bf16.msra.mxu0 %v986
    %1006 = vmatpush.bf16.msra.mxu0 %v985
    %1007 = vmatpush.bf16.msra.mxu0 %v984
    %1008 = vmatmul.bf16.gmra.mxu0 %v950
    %v1009 = vpop.f32.mrf.mxu0
    %v1010 = vadd.f32 0.0, %v1009
    %v1011 = vpop.f32.mrf.mxu0
    %1012 = vdwg.mxu0
    %v1013 = vadd.f32 %v930, %v1010
    %v1014 = vadd.f32 %v202, %v1013
    %v1015 = vxor.u32 %v1014, 2147483648
    %v1016 = vmul.f32 %v1015, 1.442695
    %v1017 = vpow.pop %v1016
    %v1018 = vadd.f32 %v1017, 1.0
    %v1019 = vrcp.pop %v1018
    %v1020 = vmul.f32 %v1018, %v1019
    %v1021 = vsub.f32 1.0, %v1020
    %v1022 = vmul.f32 %v1019, %v1021
    %v1023 = vadd.f32 %v1019, %v1022
    %vm1024 = vweird.f32 %v1018
    %vm1025 = vweird.f32 %v1019
    %vm1026 = vmor %vm1024, %vm1025
    %v1027 = vsel %vm1026, %v1019, %v1023
    %v1028 = vand.u32 2147483647, %v1018
    %vm1029 = vcmp.eq.f32.partialorder %v1028, 8.507059e+37
    %v1030 = vand.u32 %v1018, 2147483648
    %v1031 = vor.u32 1.1754944e-38, %v1030
    %v1032 = vsel %vm1029, %v1031, %v1027
    %v1033 = vmul.f32 1.0, %v1032
    %v1034 = vmul.f32 %v1014, %v1033
    %1035 = vst [vmem:[%s12] sm:$0x3] %v1034
    // Predicated region
    $region62: #{_lambda_.6} parent=1 // pred_check
      _
    $region63: #{_lambda_.6} parent=1 // pred_check_branch
      %1037 = sbr.rel (0) target = $region65
    $region64: #{_lambda_.6} parent=1 // pred_region
      _
    $region65: #{_lambda_.6} parent=1 // pred_fallthru
      _
    // Predicated region
    $region66: #{_lambda_.6} parent=1 // pred_check
      _
    $region67: #{_lambda_.6} parent=1 // pred_check_branch
      %1039 = sbr.rel (0) target = $region69
    $region68: #{_lambda_.6} parent=1 // pred_region
      _
    $region69: #{_lambda_.6} parent=1 // pred_fallthru
      _
    %1040 = vsyncpa [#allocation3], 1
    %1041 = vsyncpa [#allocation5], 1

// kernel: _lambda_.9
$region0: #{_lambda_.9}
  #allocation0 [shape = 'u32[]', space=smem, size = 0x4, offset = 0x4, fixed_abs, tag = 'smem constant byte address 0x4 - core index']
  #allocation1 [shape = 'u32[72,128]{1,0:T(1,128)}', space=vmem, size = 0x9000, scoped, tag = 'internal scratch']
  %s0 = inlined_call_operand.vmem [shape: f32[2,16,128], index: 0, kind: input, shape index: {}]
  %s1 = inlined_call_operand.vmem [shape: f32[2,2,128], index: 1, kind: input, shape index: {}]
  %s2 = inlined_call_operand.vmem [shape: bf16[128,128], index: 2, kind: input, shape index: {}]
  %s3 = inlined_call_operand.vmem [shape: f32[1,128], index: 3, kind: input, shape index: {}]
  %s4 = inlined_call_operand.vmem [shape: f32[2,16,128], index: 4, kind: output, shape index: {}]
  %s5 = sld [smem:[#allocation0]]
  $region49: #{_lambda_.9} parent=0
    _
  %s7 = ssub.s32 1, %s5
  %s8 = scalar_select 0, %s7, %s5
  loop: start=0, step=1, limit=4
  $region2: #{_lambda_.9} parent=0 // loop_pre_header
    _
  $region3: #{_lambda_.9} parent=0 // loop_header
    %s10 = sphi 0, %s14
    %p11 = scmp.ge.s32.totalorder %s10, 4
    %s20 = sphi 0, %s22
    %s23 = sphi 0, %s20
    %s24 = sphi 0, %s23
    %s40 = sphi 0, %s24
    %s46 = sphi 0, %s48
    %s49 = sphi 0, %s46
    %s50 = sphi 0, %s49
    %s66 = sphi 0, %s50
    %s70 = sphi 0, %s70
    %s72 = sphi 0, %s70
    %s73 = sphi 0, %s72
    %s87 = sphi 0, %s73
    %s91 = sphi 0, %s91
    %s93 = sphi 0, %s91
    %s94 = sphi 0, %s93
    %s108 = sphi 0, %s94
    %s114 = sphi 0, %s116
    %s117 = sphi 0, %s114
    %s118 = sphi 0, %s117
    %s134 = sphi 0, %s118
  $region4: #{_lambda_.9} parent=0 // loop_header_branch
    %13 = sbr.rel (%p11) target = $region8
  $region5: #{_lambda_.9} parent=0 // loop_body
    %s15 = ssub.s32 %s10, 1
    %s16 = ssub.s32 %s10, 2
    %s17 = sadd.s32 %s10, 1
    %s18 = ssub.s32 %s10, %s17
    %p19 = scmp.eq.s32.totalorder %s18, 0
    %s21 = sadd.s32 %s20, 1
    %s22 = scalar_select %p19, %s20, %s21
    %p25 = pneg %p19
    %p26 = scmp.eq.s32.totalorder %s10, 1
    %p27 = por %p25, %p26
    %p28 = scmp.ne.s32.totalorder %s20, %s23
    %p29 = scmp.eq.s32.totalorder %s10, 0
    %p30 = por %p28, %p29
    %p31 = scmp.ne.s32.totalorder %s20, %s23
    %p32 = scmp.eq.s32.totalorder %s15, 1
    %p33 = por %p31, %p32
    %p34 = scmp.ne.s32.totalorder %s23, %s24
    %p35 = scmp.eq.s32.totalorder %s15, 0
    %p36 = por %p34, %p35
    %p37 = scmp.ne.s32.totalorder %s23, %s24
    %p38 = scmp.eq.s32.totalorder %s16, 1
    %p39 = por %p37, %p38
    %p41 = scmp.ne.s32.totalorder %s24, %s40
    %p42 = scmp.eq.s32.totalorder %s16, 0
    %p43 = por %p41, %p42
    %s44 = ssub.s32 %s10, %s17
    %p45 = scmp.eq.s32.totalorder %s44, 0
    %s47 = sadd.s32 %s46, 1
    %s48 = scalar_select %p45, %s46, %s47
    %p51 = pneg %p45
    %p52 = scmp.eq.s32.totalorder %s10, 1
    %p53 = por %p51, %p52
    %p54 = scmp.ne.s32.totalorder %s46, %s49
    %p55 = scmp.eq.s32.totalorder %s10, 0
    %p56 = por %p54, %p55
    %p57 = scmp.ne.s32.totalorder %s46, %s49
    %p58 = scmp.eq.s32.totalorder %s15, 1
    %p59 = por %p57, %p58
    %p60 = scmp.ne.s32.totalorder %s49, %s50
    %p61 = scmp.eq.s32.totalorder %s15, 0
    %p62 = por %p60, %p61
    %p63 = scmp.ne.s32.totalorder %s49, %s50
    %p64 = scmp.eq.s32.totalorder %s16, 1
    %p65 = por %p63, %p64
    %p67 = scmp.ne.s32.totalorder %s50, %s66
    %p68 = scmp.eq.s32.totalorder %s16, 0
    %p69 = por %p67, %p68
    %s71 = sadd.s32 %s70, 1
    %p74 = scmp.eq.s32.totalorder %s10, 1
    %p75 = scmp.ne.s32.totalorder %s70, %s72
    %p76 = scmp.eq.s32.totalorder %s10, 0
    %p77 = por %p75, %p76
    %p78 = scmp.ne.s32.totalorder %s70, %s72
    %p79 = scmp.eq.s32.totalorder %s15, 1
    %p80 = por %p78, %p79
    %p81 = scmp.ne.s32.totalorder %s72, %s73
    %p82 = scmp.eq.s32.totalorder %s15, 0
    %p83 = por %p81, %p82
    %p84 = scmp.ne.s32.totalorder %s72, %s73
    %p85 = scmp.eq.s32.totalorder %s16, 1
    %p86 = por %p84, %p85
    %p88 = scmp.ne.s32.totalorder %s73, %s87
    %p89 = scmp.eq.s32.totalorder %s16, 0
    %p90 = por %p88, %p89
    %s92 = sadd.s32 %s91, 1
    %p95 = scmp.eq.s32.totalorder %s10, 1
    %p96 = scmp.ne.s32.totalorder %s91, %s93
    %p97 = scmp.eq.s32.totalorder %s10, 0
    %p98 = por %p96, %p97
    %p99 = scmp.ne.s32.totalorder %s91, %s93
    %p100 = scmp.eq.s32.totalorder %s15, 1
    %p101 = por %p99, %p100
    %p102 = scmp.ne.s32.totalorder %s93, %s94
    %p103 = scmp.eq.s32.totalorder %s15, 0
    %p104 = por %p102, %p103
    %p105 = scmp.ne.s32.totalorder %s93, %s94
    %p106 = scmp.eq.s32.totalorder %s16, 1
    %p107 = por %p105, %p106
    %p109 = scmp.ne.s32.totalorder %s94, %s108
    %p110 = scmp.eq.s32.totalorder %s16, 0
    %p111 = por %p109, %p110
    %s112 = ssub.s32 %s10, %s17
    %p113 = scmp.eq.s32.totalorder %s112, 0
    %s115 = sadd.s32 %s114, 1
    %s116 = scalar_select %p113, %s114, %s115
    %p119 = pneg %p113
    %p120 = scmp.eq.s32.totalorder %s10, 1
    %p121 = por %p119, %p120
    %p122 = scmp.ne.s32.totalorder %s114, %s117
    %p123 = scmp.eq.s32.totalorder %s10, 0
    %p124 = por %p122, %p123
    %p125 = scmp.ne.s32.totalorder %s114, %s117
    %p126 = scmp.eq.s32.totalorder %s15, 1
    %p127 = por %p125, %p126
    %p128 = scmp.ne.s32.totalorder %s117, %s118
    %p129 = scmp.eq.s32.totalorder %s15, 0
    %p130 = por %p128, %p129
    %p131 = scmp.ne.s32.totalorder %s117, %s118
    %p132 = scmp.eq.s32.totalorder %s16, 1
    %p133 = por %p131, %p132
    %p135 = scmp.ne.s32.totalorder %s118, %s134
    %p136 = scmp.eq.s32.totalorder %s16, 0
    %p137 = por %p135, %p136
    %p138 = scmp.le.s32.totalorder 1, %s10
    %p139 = scmp.lt.s32.totalorder %s10, 3
    %p140 = pnand %p138, %p139
    %p141 = pneg %p140
    // Predicated region
    $region9: #{_lambda_.9} parent=5 // pred_check
      _
    $region10: #{_lambda_.9} parent=5 // pred_check_branch
      %143 = sbr.rel (%p140) target = $region12
    $region11: #{_lambda_.9} parent=5 // pred_region
      %s144 = ssub.s32 %s10, 1
      // Predicated region
      $region13: #{_lambda_.9} parent=11 // pred_check
        %p145 = pneg %p83
      $region14: #{_lambda_.9} parent=11 // pred_check_branch
        %147 = sbr.rel (%p145) target = $region16
      $region15: #{_lambda_.9} parent=11 // pred_region
        _
      $region16: #{_lambda_.9} parent=11 // pred_fallthru
        _
      // Predicated region
      $region17: #{_lambda_.9} parent=11 // pred_check
        %p148 = pneg %p104
      $region18: #{_lambda_.9} parent=11 // pred_check_branch
        %150 = sbr.rel (%p148) target = $region20
      $region19: #{_lambda_.9} parent=11 // pred_region
        _
      $region20: #{_lambda_.9} parent=11 // pred_fallthru
        _
    $region12: #{_lambda_.9} parent=5 // pred_fallthru
      _
    %p151 = scmp.lt.s32.totalorder %s10, 2
    // Predicated region
    $region21: #{_lambda_.9} parent=5 // pred_check
      %p152 = pneg %p151
    $region22: #{_lambda_.9} parent=5 // pred_check_branch
      %154 = sbr.rel (%p152) target = $region24
    $region23: #{_lambda_.9} parent=5 // pred_region
      // Predicated region
      $region25: #{_lambda_.9} parent=23 // pred_check
        %p155 = pneg %p30
      $region26: #{_lambda_.9} parent=23 // pred_check_branch
        %157 = sbr.rel (%p155) target = $region28
      $region27: #{_lambda_.9} parent=23 // pred_region
        %p158 = scmp.lt.s32.totalorder %s10, 1
        %s159 = scalar_select %p158, %s10, 1
        %s160 = smul.addr %s159, 2
        %s161 = smul.addr %s160, 8
        %s162 = scalar_lea.vmem %s0, %s161
      $region28: #{_lambda_.9} parent=23 // pred_fallthru
        _
      // Predicated region
      $region29: #{_lambda_.9} parent=23 // pred_check
        %p163 = pneg %p56
      $region30: #{_lambda_.9} parent=23 // pred_check_branch
        %165 = sbr.rel (%p163) target = $region32
      $region31: #{_lambda_.9} parent=23 // pred_region
        %p166 = scmp.lt.s32.totalorder %s10, 1
        %s167 = scalar_select %p166, %s10, 1
        %s168 = smul.addr %s167, 2
        %s169 = scalar_lea.vmem %s1, %s168
      $region32: #{_lambda_.9} parent=23 // pred_fallthru
        _
    $region24: #{_lambda_.9} parent=5 // pred_fallthru
      _
    %p170 = scmp.le.s32.totalorder 1, %s10
    %p171 = scmp.lt.s32.totalorder %s10, 3
    %p172 = pnand %p170, %p171
    %p173 = pneg %p172
    // Predicated region
    $region33: #{_lambda_.9} parent=5 // pred_check
      _
    $region34: #{_lambda_.9} parent=5 // pred_check_branch
      %175 = sbr.rel (%p172) target = $region36
    $region35: #{_lambda_.9} parent=5 // pred_region
      %s176 = ssub.s32 %s10, 1
      %p177 = scmp.lt.s32.totalorder %s15, 1
      %s178 = scalar_select %p177, %s15, 1
      %s179 = smul.addr %s178, 2
      %s180 = smul.addr %s179, 8
      %s181 = scalar_lea.vmem %s0, %s180
      %p182 = pneg %p36
      %p183 = pneg %p33
      %p184 = scmp.lt.s32.totalorder %s15, 1
      %s185 = scalar_select %p184, %s15, 1
      %s186 = smul.addr %s185, 2
      %s187 = scalar_lea.vmem %s1, %s186
      %p188 = pneg %p62
      %p189 = pneg %p59
      %p190 = pneg %p83
      %p191 = pneg %p80
      %p192 = pneg %p104
      %p193 = pneg %p101
      %p194 = pneg %p130
      %p195 = pneg %p127
      %p196 = scmp.lt.s32.totalorder %s15, 1
      %s197 = scalar_select %p196, %s15, 1
      %s198 = smul.addr %s197, 2
      %s199 = smul.addr %s198, 8
      %s200 = scalar_lea.vmem %s4, %s199
      %p201 = scmp.lt.s32.totalorder %s15, 1
      %s202 = scalar_select %p201, %s15, 1
      %s203 = smul.addr %s202, 2
      %s204 = smul.addr %s203, 8
      %s205 = scalar_lea.vmem %s0, %s204
      %p206 = scmp.lt.s32.totalorder %s15, 1
      %s207 = scalar_select %p206, %s15, 1
      %s208 = smul.addr %s207, 2
      %s209 = scalar_lea.vmem %s1, %s208
      %p210 = scmp.lt.s32.totalorder %s15, 1
      %s211 = scalar_select %p210, %s15, 1
      %s212 = smul.addr %s211, 2
      %s213 = smul.addr %s212, 8
      %s214 = scalar_lea.vmem %s4, %s213
      %v215 = vld [vmem:[%s205] sm:$0xff]
      %v216 = vld [vmem:[%s205 + $0x8] sm:$0xff]
      %v217 = vld [vmem:[%s209] sm:$0x3]
      %218 = vadd.xlane.f32.xlu0 %v215
      %v219 = vpop.xlane.xlu0 %218
      %220 = vadd.xlane.f32.xlu0 %v216
      %v221 = vpop.xlane.xlu0 %220
      %v222 = vrcp.pop 128.0
      %v223 = vmul.f32 128.0, %v222
      %v224 = vsub.f32 1.0, %v223
      %v225 = vmul.f32 %v222, %v224
      %v226 = vadd.f32 %v222, %v225
      %vm227 = vweird.f32 %v222
      %v228 = vsel %vm227, %v222, %v226
      %v229 = vmul.f32 %v219, %v228
      %v230 = vmul.f32 %v221, %v228
      %v231 = vsub.f32 %v215, %v229
      %v232 = vsub.f32 %v216, %v230
      %v233 = vmul.f32 %v231, %v231
      %v234 = vmul.f32 %v232, %v232
      %235 = vadd.xlane.f32.xlu0 %v233
      %v236 = vpop.xlane.xlu0 %235
      %237 = vadd.xlane.f32.xlu0 %v234
      %v238 = vpop.xlane.xlu0 %237
      %v239 = vmul.f32 %v236, %v228
      %v240 = vmul.f32 %v238, %v228
      %v241 = vadd.f32 %v239, 1e-06
      %v242 = vadd.f32 %v240, 1e-06
      %v243 = vrsqrt.pop %v241
      %v244 = vmul.f32 %v243, %v241
      %v245 = vmul.f32 %v244, %v243
      %v246 = vmul.f32 0.5, %v245
      %v247 = vsub.f32 1.5, %v246
      %v248 = vmul.f32 %v243, %v247
      %vm249 = vweird.f32 %v241
      %vm250 = vweird.f32 %v243
      %vm251 = vmor %vm249, %vm250
      %v252 = vsel %vm251, %v243, %v248
      %v253 = vrsqrt.pop %v242
      %v254 = vmul.f32 %v253, %v242
      %v255 = vmul.f32 %v254, %v253
      %v256 = vmul.f32 0.5, %v255
      %v257 = vsub.f32 1.5, %v256
      %v258 = vmul.f32 %v253, %v257
      %vm259 = vweird.f32 %v242
      %vm260 = vweird.f32 %v253
      %vm261 = vmor %vm259, %vm260
      %v262 = vsel %vm261, %v253, %v258
      %v263 = vmul.f32 %v231, %v252
      %v264 = vmul.f32 %v232, %v262
      %v265 = vadd.f32 %v217, 1.0
      %v266 = vperm.slane %v265, 1
      %v267 = vmul.f32 %v263, %v266
      %v268 = vmul.f32 %v264, %v266
      %v269 = vperm.slane %v217, 0
      %v270 = vadd.f32 %v267, %v269
      %v271 = vadd.f32 %v268, %v269
      %v272 = vpack.c.bf16 %v271, %v270
      %v273 = vld [vmem:[%s2] sm:$0xf]
      %v274 = vld [vmem:[%s2 + $0x4] sm:$0xf]
      %v275 = vld [vmem:[%s2 + $0x8] sm:$0xf]
      %v276 = vld [vmem:[%s2 + $0xc] sm:$0xf]
      %v277 = vld [vmem:[%s2 + $0x10] sm:$0xf]
      %v278 = vld [vmem:[%s2 + $0x14] sm:$0xf]
      %v279 = vld [vmem:[%s2 + $0x18] sm:$0xf]
      %v280 = vld [vmem:[%s2 + $0x1c] sm:$0xf]
      %v281 = vld [vmem:[%s2 + $0x20] sm:$0xf]
      %v282 = vld [vmem:[%s2 + $0x24] sm:$0xf]
      %v283 = vld [vmem:[%s2 + $0x28] sm:$0xf]
      %v284 = vld [vmem:[%s2 + $0x2c] sm:$0xf]
      %v285 = vld [vmem:[%s2 + $0x30] sm:$0xf]
      %v286 = vld [vmem:[%s2 + $0x34] sm:$0xf]
      %v287 = vld [vmem:[%s2 + $0x38] sm:$0xf]
      %v288 = vld [vmem:[%s2 + $0x3c] sm:$0xf]
      %v289 = vld [vmem:[%s3] sm:$0x1]
      %v291 = vperm.slane %v289, 0
      %v309 = vunpack.c.l.b16 %v273
      %v310 = vunpack.c.l.b16 %v274
      %v311 = vunpack.c.l.b16 %v275
      %v312 = vunpack.c.l.b16 %v276
      %v313 = vunpack.c.l.b16 %v277
      %v314 = vunpack.c.l.b16 %v278
      %v315 = vunpack.c.l.b16 %v279
      %v316 = vunpack.c.l.b16 %v280
      %v317 = vunpack.c.l.b16 %v281
      %v318 = vunpack.c.l.b16 %v282
      %v319 = vunpack.c.l.b16 %v283
      %v320 = vunpack.c.l.b16 %v284
      %v321 = vunpack.c.l.b16 %v285
      %v322 = vunpack.c.l.b16 %v286
      %v323 = vunpack.c.l.b16 %v287
      %v324 = vunpack.c.l.b16 %v288
      %v325 = vpack.c.b16 %v310, %v309
      %v326 = vpack.c.b16 %v312, %v311
      %v327 = vpack.c.b16 %v314, %v313
      %v328 = vpack.c.b16 %v316, %v315
      %v329 = vpack.c.b16 %v318, %v317
      %v330 = vpack.c.b16 %v320, %v319
      %v331 = vpack.c.b16 %v322, %v321
      %v332 = vpack.c.b16 %v324, %v323
      %341 = vmatpush.bf16.msra.mxu0 %v332
      %342 = vmatpush.bf16.msra.mxu0 %v331
      %343 = vmatpush.bf16.msra.mxu0 %v330
      %344 = vmatpush.bf16.msra.mxu0 %v329
      %345 = vmatpush.bf16.msra.mxu0 %v328
      %346 = vmatpush.bf16.msra.mxu0 %v327
      %347 = vmatpush.bf16.msra.mxu0 %v326
      %348 = vmatpush.bf16.msra.mxu0 %v325
      %349 = vmatmul.bf16.gmra.mxu0 %v272
      %v350 = vpop.f32.mrf.mxu0
      %v351 = vadd.f32 %v291, %v350
      %v352 = vpop.f32.mrf.mxu0
      %v353 = vadd.f32 %v291, %v352
      %354 = vdwg.mxu0
      %355 = vst [vmem:[%s214] sm:$0xff] %v351
      %356 = vst [vmem:[%s214 + $0x8] sm:$0xff] %v353
      %p357 = scmp.lt.s32.totalorder %s15, 1
      %s358 = scalar_select %p357, %s15, 1
      %s359 = smul.addr %s358, 2
      %s360 = smul.addr %s359, 8
      %s361 = scalar_lea.vmem %s4, %s360
      // Predicated region
      $region37: #{_lambda_.9} parent=35 // pred_check
        %p362 = pneg %p127
      $region38: #{_lambda_.9} parent=35 // pred_check_branch
        %364 = sbr.rel (%p362) target = $region40
      $region39: #{_lambda_.9} parent=35 // pred_region
        _
      $region40: #{_lambda_.9} parent=35 // pred_fallthru
        _
    $region36: #{_lambda_.9} parent=5 // pred_fallthru
      _
    %p365 = scmp.le.s32.totalorder 2, %s10
    // Predicated region
    $region41: #{_lambda_.9} parent=5 // pred_check
      %p366 = pneg %p365
    $region42: #{_lambda_.9} parent=5 // pred_check_branch
      %368 = sbr.rel (%p366) target = $region44
    $region43: #{_lambda_.9} parent=5 // pred_region
      %s369 = ssub.s32 %s10, 2
      // Predicated region
      $region45: #{_lambda_.9} parent=43 // pred_check
        %p370 = pneg %p133
      $region46: #{_lambda_.9} parent=43 // pred_check_branch
        %372 = sbr.rel (%p370) target = $region48
      $region47: #{_lambda_.9} parent=43 // pred_region
        %p373 = scmp.lt.s32.totalorder %s16, 1
        %s374 = scalar_select %p373, %s16, 1
        %s375 = smul.addr %s374, 2
        %s376 = smul.addr %s375, 8
        %s377 = scalar_lea.vmem %s4, %s376
      $region48: #{_lambda_.9} parent=43 // pred_fallthru
        _
    $region44: #{_lambda_.9} parent=5 // pred_fallthru
      _
  $region6: #{_lambda_.9} parent=0 // loop_footer
    %s14 = sadd.s32 1, %s10
  $region7: #{_lambda_.9} parent=0 // loop_footer_branch
    %9 = sbr.rel target = $region3
  $region8: #{_lambda_.9} parent=0 // loop_exit
    _

// kernel: _lambda_.8
$region0: #{_lambda_.8}
  #allocation0 [shape = 'u32[]', space=smem, size = 0x4, offset = 0x4, fixed_abs, tag = 'smem constant byte address 0x4 - core index']
  #allocation1 [shape = 'u32[72,128]{1,0:T(1,128)}', space=vmem, size = 0x9000, scoped, tag = 'internal scratch']
  %s0 = inlined_call_operand.vmem [shape: f32[2,16,128], index: 0, kind: input, shape index: {}]
  %s1 = inlined_call_operand.vmem [shape: f32[2,3,6,128], index: 1, kind: input, shape index: {}]
  %s2 = inlined_call_operand.hbm [shape: bf16[2,128,384], index: 2, kind: input, shape index: {}]
  %s3 = inlined_call_operand.vmem [shape: f32[2,1,384], index: 3, kind: input, shape index: {}]
  %s4 = inlined_call_operand.vmem [shape: bf16[2,128,128], index: 4, kind: input, shape index: {}]
  %s5 = inlined_call_operand.vmem [shape: f32[2,1,128], index: 5, kind: input, shape index: {}]
  %s6 = inlined_call_operand.hbm [shape: bf16[2,128,512], index: 6, kind: input, shape index: {}]
  %s7 = inlined_call_operand.vmem [shape: f32[2,1,512], index: 7, kind: input, shape index: {}]
  %s8 = inlined_call_operand.hbm [shape: bf16[2,512,128], index: 8, kind: input, shape index: {}]
  %s9 = inlined_call_operand.vmem [shape: f32[2,1,128], index: 9, kind: input, shape index: {}]
  %s10 = inlined_call_operand.vmem [shape: f32[2,16,128], index: 10, kind: output, shape index: {}]
  %s11 = sld [smem:[#allocation0]]
  $region89: #{_lambda_.8} parent=0
    _
  %s13 = ssub.s32 1, %s11
  %s14 = scalar_select 0, %s13, %s11
  $region1: #{_lambda_.8} parent=0
    #allocation2 [shape = 'u8[196608]{0}', space=vmem, size = 0x30000, scoped, tag = 'input window, operand 2']
    #allocation3 [shape = 's32[2]{0}', space=sflag, size = 0x8, scoped, tag = 'scoped memory for _lambda_.8']
    #allocation4 [shape = 'u8[262144]{0}', space=vmem, size = 0x40000, scoped, tag = 'input window, operand 6']
    #allocation5 [shape = 's32[2]{0}', space=sflag, size = 0x8, scoped, tag = 'scoped memory for _lambda_.8']
    #allocation6 [shape = 'u8[262144]{0}', space=vmem, size = 0x40000, scoped, tag = 'input window, operand 8']
    %15 = vsyncpa [#allocation3], 0
    %s16 = scalar_lea.sflag [#allocation3], 1
    %17 = vsyncpa %s16, 0
    %18 = vsyncpa [#allocation5], 0
    %s19 = scalar_lea.sflag [#allocation5], 1
    %20 = vsyncpa %s19, 0
    loop: start=0, step=1, limit=6
    $region2: #{_lambda_.8} parent=1 // loop_pre_header
      _
    $region3: #{_lambda_.8} parent=1 // loop_header
      %s22 = sphi 0, %s26
      %p23 = scmp.ge.s32.totalorder %s22, 6
      %s29 = sphi 0, %s41
      %s30 = sphi 0, %s37
      %s31 = sphi 0, %s29
      %s32 = sphi 0, %s30
      %s33 = sphi 0, %s31
      %s34 = sphi 0, %s32
      %s44 = sphi 0, %s46
      %s47 = sphi 0, %s44
      %s48 = sphi 0, %s47
      %s64 = sphi 0, %s48
      %s72 = sphi 0, %s74
      %s75 = sphi 0, %s72
      %s76 = sphi 0, %s75
      %s92 = sphi 0, %s76
      %s98 = sphi 0, %s100
      %s101 = sphi 0, %s98
      %s102 = sphi 0, %s101
      %s118 = sphi 0, %s102
      %s124 = sphi 0, %s126
      %s127 = sphi 0, %s124
      %s128 = sphi 0, %s127
      %s144 = sphi 0, %s128
      %s150 = sphi 0, %s152
      %s153 = sphi 0, %s150
      %s154 = sphi 0, %s153
      %s170 = sphi 0, %s154
      %s176 = sphi 0, %s178
      %s179 = sphi 0, %s176
      %s180 = sphi 0, %s179
      %s196 = sphi 0, %s180
      %s202 = sphi 0, %s204
      %s205 = sphi 0, %s202
      %s206 = sphi 0, %s205
      %s222 = sphi 0, %s206
      %s228 = sphi 0, %s230
      %s231 = sphi 0, %s228
      %s232 = sphi 0, %s231
      %s248 = sphi 0, %s232
      %s254 = sphi 0, %s256
      %s257 = sphi 0, %s254
      %s258 = sphi 0, %s257
      %s274 = sphi 0, %s258
      %s280 = sphi 0, %s282
      %s283 = sphi 0, %s280
      %s284 = sphi 0, %s283
      %s300 = sphi 0, %s284
      %s306 = sphi 0, %s308
      %s309 = sphi 0, %s306
      %s310 = sphi 0, %s309
      %s326 = sphi 0, %s310
    $region4: #{_lambda_.8} parent=1 // loop_header_branch
      %25 = sbr.rel (%p23) target = $region8
    $region5: #{_lambda_.8} parent=1 // loop_body
      %s27 = ssub.s32 %s22, 1
      %s28 = ssub.s32 %s22, 2
      %s35 = sadd.s32 1, %s30
      %p36 = scmp.ge.s32.totalorder %s35, 2
      %s37 = scalar_select %p36, 0, %s35
      %s38 = sadd.s32 1, %s29
      %s39 = scalar_select %p36, %s38, %s29
      %p40 = scmp.ge.s32.totalorder %s39, 2
      %s41 = scalar_select %p40, 0, %s39
      %s42 = ssub.s32 %s29, %s41
      %p43 = scmp.eq.s32.totalorder %s42, 0
      %s45 = sadd.s32 %s44, 1
      %s46 = scalar_select %p43, %s44, %s45
      %p49 = pneg %p43
      %p50 = scmp.eq.s32.totalorder %s22, 3
      %p51 = por %p49, %p50
      %p52 = scmp.ne.s32.totalorder %s44, %s47
      %p53 = scmp.eq.s32.totalorder %s22, 0
      %p54 = por %p52, %p53
      %p55 = scmp.ne.s32.totalorder %s44, %s47
      %p56 = scmp.eq.s32.totalorder %s27, 3
      %p57 = por %p55, %p56
      %p58 = scmp.ne.s32.totalorder %s47, %s48
      %p59 = scmp.eq.s32.totalorder %s27, 0
      %p60 = por %p58, %p59
      %p61 = scmp.ne.s32.totalorder %s47, %s48
      %p62 = scmp.eq.s32.totalorder %s28, 3
      %p63 = por %p61, %p62
      %p65 = scmp.ne.s32.totalorder %s48, %s64
      %p66 = scmp.eq.s32.totalorder %s28, 0
      %p67 = por %p65, %p66
      %s68 = ssub.s32 %s29, %s41
      %s69 = ssub.s32 %s30, %s37
      %s70 = sor.u32 %s68, %s69
      %p71 = scmp.eq.s32.totalorder %s70, 0
      %s73 = sadd.s32 %s72, 1
      %s74 = scalar_select %p71, %s72, %s73
      %p77 = pneg %p71
      %p78 = scmp.eq.s32.totalorder %s22, 3
      %p79 = por %p77, %p78
      %p80 = scmp.ne.s32.totalorder %s72, %s75
      %p81 = scmp.eq.s32.totalorder %s22, 0
      %p82 = por %p80, %p81
      %p83 = scmp.ne.s32.totalorder %s72, %s75
      %p84 = scmp.eq.s32.totalorder %s27, 3
      %p85 = por %p83, %p84
      %p86 = scmp.ne.s32.totalorder %s75, %s76
      %p87 = scmp.eq.s32.totalorder %s27, 0
      %p88 = por %p86, %p87
      %p89 = scmp.ne.s32.totalorder %s75, %s76
      %p90 = scmp.eq.s32.totalorder %s28, 3
      %p91 = por %p89, %p90
      %p93 = scmp.ne.s32.totalorder %s76, %s92
      %p94 = scmp.eq.s32.totalorder %s28, 0
      %p95 = por %p93, %p94
      %s96 = ssub.s32 %s30, %s37
      %p97 = scmp.eq.s32.totalorder %s96, 0
      %s99 = sadd.s32 %s98, 1
      %s100 = scalar_select %p97, %s98, %s99
      %p103 = pneg %p97
      %p104 = scmp.eq.s32.totalorder %s22, 3
      %p105 = por %p103, %p104
      %p106 = scmp.ne.s32.totalorder %s98, %s101
      %p107 = scmp.eq.s32.totalorder %s22, 0
      %p108 = por %p106, %p107
      %p109 = scmp.ne.s32.totalorder %s98, %s101
      %p110 = scmp.eq.s32.totalorder %s27, 3
      %p111 = por %p109, %p110
      %p112 = scmp.ne.s32.totalorder %s101, %s102
      %p113 = scmp.eq.s32.totalorder %s27, 0
      %p114 = por %p112, %p113
      %p115 = scmp.ne.s32.totalorder %s101, %s102
      %p116 = scmp.eq.s32.totalorder %s28, 3
      %p117 = por %p115, %p116
      %p119 = scmp.ne.s32.totalorder %s102, %s118
      %p120 = scmp.eq.s32.totalorder %s28, 0
      %p121 = por %p119, %p120
      %s122 = ssub.s32 %s30, %s37
      %p123 = scmp.eq.s32.totalorder %s122, 0
      %s125 = sadd.s32 %s124, 1
      %s126 = scalar_select %p123, %s124, %s125
      %p129 = pneg %p123
      %p130 = scmp.eq.s32.totalorder %s22, 3
      %p131 = por %p129, %p130
      %p132 = scmp.ne.s32.totalorder %s124, %s127
      %p133 = scmp.eq.s32.totalorder %s22, 0
      %p134 = por %p132, %p133
      %p135 = scmp.ne.s32.totalorder %s124, %s127
      %p136 = scmp.eq.s32.totalorder %s27, 3
      %p137 = por %p135, %p136
      %p138 = scmp.ne.s32.totalorder %s127, %s128
      %p139 = scmp.eq.s32.totalorder %s27, 0
      %p140 = por %p138, %p139
      %p141 = scmp.ne.s32.totalorder %s127, %s128
      %p142 = scmp.eq.s32.totalorder %s28, 3
      %p143 = por %p141, %p142
      %p145 = scmp.ne.s32.totalorder %s128, %s144
      %p146 = scmp.eq.s32.totalorder %s28, 0
      %p147 = por %p145, %p146
      %s148 = ssub.s32 %s30, %s37
      %p149 = scmp.eq.s32.totalorder %s148, 0
      %s151 = sadd.s32 %s150, 1
      %s152 = scalar_select %p149, %s150, %s151
      %p155 = pneg %p149
      %p156 = scmp.eq.s32.totalorder %s22, 3
      %p157 = por %p155, %p156
      %p158 = scmp.ne.s32.totalorder %s150, %s153
      %p159 = scmp.eq.s32.totalorder %s22, 0
      %p160 = por %p158, %p159
      %p161 = scmp.ne.s32.totalorder %s150, %s153
      %p162 = scmp.eq.s32.totalorder %s27, 3
      %p163 = por %p161, %p162
      %p164 = scmp.ne.s32.totalorder %s153, %s154
      %p165 = scmp.eq.s32.totalorder %s27, 0
      %p166 = por %p164, %p165
      %p167 = scmp.ne.s32.totalorder %s153, %s154
      %p168 = scmp.eq.s32.totalorder %s28, 3
      %p169 = por %p167, %p168
      %p171 = scmp.ne.s32.totalorder %s154, %s170
      %p172 = scmp.eq.s32.totalorder %s28, 0
      %p173 = por %p171, %p172
      %s174 = ssub.s32 %s30, %s37
      %p175 = scmp.eq.s32.totalorder %s174, 0
      %s177 = sadd.s32 %s176, 1
      %s178 = scalar_select %p175, %s176, %s177
      %p181 = pneg %p175
      %p182 = scmp.eq.s32.totalorder %s22, 3
      %p183 = por %p181, %p182
      %p184 = scmp.ne.s32.totalorder %s176, %s179
      %p185 = scmp.eq.s32.totalorder %s22, 0
      %p186 = por %p184, %p185
      %p187 = scmp.ne.s32.totalorder %s176, %s179
      %p188 = scmp.eq.s32.totalorder %s27, 3
      %p189 = por %p187, %p188
      %p190 = scmp.ne.s32.totalorder %s179, %s180
      %p191 = scmp.eq.s32.totalorder %s27, 0
      %p192 = por %p190, %p191
      %p193 = scmp.ne.s32.totalorder %s179, %s180
      %p194 = scmp.eq.s32.totalorder %s28, 3
      %p195 = por %p193, %p194
      %p197 = scmp.ne.s32.totalorder %s180, %s196
      %p198 = scmp.eq.s32.totalorder %s28, 0
      %p199 = por %p197, %p198
      %s200 = ssub.s32 %s30, %s37
      %p201 = scmp.eq.s32.totalorder %s200, 0
      %s203 = sadd.s32 %s202, 1
      %s204 = scalar_select %p201, %s202, %s203
      %p207 = pneg %p201
      %p208 = scmp.eq.s32.totalorder %s22, 3
      %p209 = por %p207, %p208
      %p210 = scmp.ne.s32.totalorder %s202, %s205
      %p211 = scmp.eq.s32.totalorder %s22, 0
      %p212 = por %p210, %p211
      %p213 = scmp.ne.s32.totalorder %s202, %s205
      %p214 = scmp.eq.s32.totalorder %s27, 3
      %p215 = por %p213, %p214
      %p216 = scmp.ne.s32.totalorder %s205, %s206
      %p217 = scmp.eq.s32.totalorder %s27, 0
      %p218 = por %p216, %p217
      %p219 = scmp.ne.s32.totalorder %s205, %s206
      %p220 = scmp.eq.s32.totalorder %s28, 3
      %p221 = por %p219, %p220
      %p223 = scmp.ne.s32.totalorder %s206, %s222
      %p224 = scmp.eq.s32.totalorder %s28, 0
      %p225 = por %p223, %p224
      %s226 = ssub.s32 %s30, %s37
      %p227 = scmp.eq.s32.totalorder %s226, 0
      %s229 = sadd.s32 %s228, 1
      %s230 = scalar_select %p227, %s228, %s229
      %p233 = pneg %p227
      %p234 = scmp.eq.s32.totalorder %s22, 3
      %p235 = por %p233, %p234
      %p236 = scmp.ne.s32.totalorder %s228, %s231
      %p237 = scmp.eq.s32.totalorder %s22, 0
      %p238 = por %p236, %p237
      %p239 = scmp.ne.s32.totalorder %s228, %s231
      %p240 = scmp.eq.s32.totalorder %s27, 3
      %p241 = por %p239, %p240
      %p242 = scmp.ne.s32.totalorder %s231, %s232
      %p243 = scmp.eq.s32.totalorder %s27, 0
      %p244 = por %p242, %p243
      %p245 = scmp.ne.s32.totalorder %s231, %s232
      %p246 = scmp.eq.s32.totalorder %s28, 3
      %p247 = por %p245, %p246
      %p249 = scmp.ne.s32.totalorder %s232, %s248
      %p250 = scmp.eq.s32.totalorder %s28, 0
      %p251 = por %p249, %p250
      %s252 = ssub.s32 %s30, %s37
      %p253 = scmp.eq.s32.totalorder %s252, 0
      %s255 = sadd.s32 %s254, 1
      %s256 = scalar_select %p253, %s254, %s255
      %p259 = pneg %p253
      %p260 = scmp.eq.s32.totalorder %s22, 3
      %p261 = por %p259, %p260
      %p262 = scmp.ne.s32.totalorder %s254, %s257
      %p263 = scmp.eq.s32.totalorder %s22, 0
      %p264 = por %p262, %p263
      %p265 = scmp.ne.s32.totalorder %s254, %s257
      %p266 = scmp.eq.s32.totalorder %s27, 3
      %p267 = por %p265, %p266
      %p268 = scmp.ne.s32.totalorder %s257, %s258
      %p269 = scmp.eq.s32.totalorder %s27, 0
      %p270 = por %p268, %p269
      %p271 = scmp.ne.s32.totalorder %s257, %s258
      %p272 = scmp.eq.s32.totalorder %s28, 3
      %p273 = por %p271, %p272
      %p275 = scmp.ne.s32.totalorder %s258, %s274
      %p276 = scmp.eq.s32.totalorder %s28, 0
      %p277 = por %p275, %p276
      %s278 = ssub.s32 %s30, %s37
      %p279 = scmp.eq.s32.totalorder %s278, 0
      %s281 = sadd.s32 %s280, 1
      %s282 = scalar_select %p279, %s280, %s281
      %p285 = pneg %p279
      %p286 = scmp.eq.s32.totalorder %s22, 3
      %p287 = por %p285, %p286
      %p288 = scmp.ne.s32.totalorder %s280, %s283
      %p289 = scmp.eq.s32.totalorder %s22, 0
      %p290 = por %p288, %p289
      %p291 = scmp.ne.s32.totalorder %s280, %s283
      %p292 = scmp.eq.s32.totalorder %s27, 3
      %p293 = por %p291, %p292
      %p294 = scmp.ne.s32.totalorder %s283, %s284
      %p295 = scmp.eq.s32.totalorder %s27, 0
      %p296 = por %p294, %p295
      %p297 = scmp.ne.s32.totalorder %s283, %s284
      %p298 = scmp.eq.s32.totalorder %s28, 3
      %p299 = por %p297, %p298
      %p301 = scmp.ne.s32.totalorder %s284, %s300
      %p302 = scmp.eq.s32.totalorder %s28, 0
      %p303 = por %p301, %p302
      %s304 = ssub.s32 %s29, %s41
      %p305 = scmp.eq.s32.totalorder %s304, 0
      %s307 = sadd.s32 %s306, 1
      %s308 = scalar_select %p305, %s306, %s307
      %p311 = pneg %p305
      %p312 = scmp.eq.s32.totalorder %s22, 3
      %p313 = por %p311, %p312
      %p314 = scmp.ne.s32.totalorder %s306, %s309
      %p315 = scmp.eq.s32.totalorder %s22, 0
      %p316 = por %p314, %p315
      %p317 = scmp.ne.s32.totalorder %s306, %s309
      %p318 = scmp.eq.s32.totalorder %s27, 3
      %p319 = por %p317, %p318
      %p320 = scmp.ne.s32.totalorder %s309, %s310
      %p321 = scmp.eq.s32.totalorder %s27, 0
      %p322 = por %p320, %p321
      %p323 = scmp.ne.s32.totalorder %s309, %s310
      %p324 = scmp.eq.s32.totalorder %s28, 3
      %p325 = por %p323, %p324
      %p327 = scmp.ne.s32.totalorder %s310, %s326
      %p328 = scmp.eq.s32.totalorder %s28, 0
      %p329 = por %p327, %p328
      %p330 = scmp.le.s32.totalorder 1, %s22
      %p331 = scmp.lt.s32.totalorder %s22, 5
      %p332 = pnand %p330, %p331
      %p333 = pneg %p332
      // Predicated region
      $region9: #{_lambda_.8} parent=5 // pred_check
        _
      $region10: #{_lambda_.8} parent=5 // pred_check_branch
        %335 = sbr.rel (%p332) target = $region12
      $region11: #{_lambda_.8} parent=5 // pred_region
        %s336 = ssub.s32 %s22, 1
      $region12: #{_lambda_.8} parent=5 // pred_fallthru
        _
      %p337 = scmp.lt.s32.totalorder %s22, 4
      // Predicated region
      $region13: #{_lambda_.8} parent=5 // pred_check
        %p338 = pneg %p337
      $region14: #{_lambda_.8} parent=5 // pred_check_branch
        %340 = sbr.rel (%p338) target = $region16
      $region15: #{_lambda_.8} parent=5 // pred_region
        // Predicated region
        $region17: #{_lambda_.8} parent=15 // pred_check
          %p341 = pneg %p54
        $region18: #{_lambda_.8} parent=15 // pred_check_branch
          %343 = sbr.rel (%p341) target = $region20
        $region19: #{_lambda_.8} parent=15 // pred_region
          %p344 = scmp.lt.s32.totalorder %s29, 1
          %s345 = scalar_select %p344, %s29, 1
          %s346 = smul.addr %s345, 2
          %s347 = smul.addr %s346, 8
          %s348 = scalar_lea.vmem %s0, %s347
        $region20: #{_lambda_.8} parent=15 // pred_fallthru
          _
        // Predicated region
        $region21: #{_lambda_.8} parent=15 // pred_check
          %p349 = pneg %p82
        $region22: #{_lambda_.8} parent=15 // pred_check_branch
          %351 = sbr.rel (%p349) target = $region24
        $region23: #{_lambda_.8} parent=15 // pred_region
          %p352 = scmp.lt.s32.totalorder %s29, 1
          %s353 = scalar_select %p352, %s29, 1
          %p354 = scmp.lt.s32.totalorder %s30, 2
          %s355 = scalar_select %p354, %s30, 2
          %s356 = smul.addr %s353, 3
          %s357 = sadd.s32 %s355, %s356
          %s358 = smul.addr %s357, 8
          %s359 = scalar_lea.vmem %s1, %s358
        $region24: #{_lambda_.8} parent=15 // pred_fallthru
          _
        // Predicated region
        $region25: #{_lambda_.8} parent=15 // pred_check
          %p360 = pneg %p108
        $region26: #{_lambda_.8} parent=15 // pred_check_branch
          %362 = sbr.rel (%p360) target = $region28
        $region27: #{_lambda_.8} parent=15 // pred_region
          %s363 = sand.u32 %s98, 1
          %s364 = scalar_lea.sflag [#allocation3], %s363
          %s365 = sand.u32 %s98, 1
          %s366 = smul.addr %s365, 192
          %s367 = scalar_lea.vmem [#allocation2], %s366
          %369 = vsyncadd %s364, 0
          %s370 = smul.addr %s30, 48
          %s371 = smul.addr %s370, 4
          %s372 = scalar_lea.hbm %s2, %s371
          %s373 = sshll.u32 %s372, 4
          %s374 = int_to_ptr.hbm [resolvable:$true] %s373
          %s375 = sshll.u32 %s367, 4
          %s376 = int_to_ptr.vmem [resolvable:$true] %s375
          %381 = dma.hbm_to_vmem [thread:$0]  %s374, 3072, %s376, %s364, 192, 192, 12
        $region28: #{_lambda_.8} parent=15 // pred_fallthru
          _
        // Predicated region
        $region29: #{_lambda_.8} parent=15 // pred_check
          %p382 = pneg %p134
        $region30: #{_lambda_.8} parent=15 // pred_check_branch
          %384 = sbr.rel (%p382) target = $region32
        $region31: #{_lambda_.8} parent=15 // pred_region
          %p385 = scmp.lt.s32.totalorder %s30, 1
          %s386 = scalar_select %p385, %s30, 1
          %s387 = smul.addr %s386, 3
          %s388 = scalar_lea.vmem %s3, %s387
        $region32: #{_lambda_.8} parent=15 // pred_fallthru
          _
        // Predicated region
        $region33: #{_lambda_.8} parent=15 // pred_check
          %p389 = pneg %p160
        $region34: #{_lambda_.8} parent=15 // pred_check_branch
          %391 = sbr.rel (%p389) target = $region36
        $region35: #{_lambda_.8} parent=15 // pred_region
          %p392 = scmp.lt.s32.totalorder %s30, 1
          %s393 = scalar_select %p392, %s30, 1
          %s394 = smul.addr %s393, 16
          %s395 = smul.addr %s394, 4
          %s396 = scalar_lea.vmem %s4, %s395
        $region36: #{_lambda_.8} parent=15 // pred_fallthru
          _
        // Predicated region
        $region37: #{_lambda_.8} parent=15 // pred_check
          %p397 = pneg %p186
        $region38: #{_lambda_.8} parent=15 // pred_check_branch
          %399 = sbr.rel (%p397) target = $region40
        $region39: #{_lambda_.8} parent=15 // pred_region
          %p400 = scmp.lt.s32.totalorder %s30, 1
          %s401 = scalar_select %p400, %s30, 1
          %s402 = scalar_lea.vmem %s5, %s401
        $region40: #{_lambda_.8} parent=15 // pred_fallthru
          _
        // Predicated region
        $region41: #{_lambda_.8} parent=15 // pred_check
          %p403 = pneg %p212
        $region42: #{_lambda_.8} parent=15 // pred_check_branch
          %405 = sbr.rel (%p403) target = $region44
        $region43: #{_lambda_.8} parent=15 // pred_region
          %s406 = sand.u32 %s22, 1
          %s407 = scalar_lea.sflag [#allocation5], %s406
          %s408 = sand.u32 %s202, 1
          %s409 = smul.addr %s408, 256
          %s410 = scalar_lea.vmem [#allocation4], %s409
          %412 = vsyncadd %s407, 0
          %s413 = smul.addr %s30, 64
          %s414 = smul.addr %s413, 4
          %s415 = scalar_lea.hbm %s6, %s414
          %s416 = sshll.u32 %s415, 4
          %s417 = int_to_ptr.hbm [resolvable:$true] %s416
          %s418 = sshll.u32 %s410, 4
          %s419 = int_to_ptr.vmem [resolvable:$true] %s418
          %424 = dma.hbm_to_vmem [thread:$0]  %s417, 4096, %s419, %s407, 256, 256, 16
        $region44: #{_lambda_.8} parent=15 // pred_fallthru
          _
        // Predicated region
        $region45: #{_lambda_.8} parent=15 // pred_check
          %p425 = pneg %p238
        $region46: #{_lambda_.8} parent=15 // pred_check_branch
          %427 = sbr.rel (%p425) target = $region48
        $region47: #{_lambda_.8} parent=15 // pred_region
          %p428 = scmp.lt.s32.totalorder %s30, 1
          %s429 = scalar_select %p428, %s30, 1
          %s430 = smul.addr %s429, 4
          %s431 = scalar_lea.vmem %s7, %s430
        $region48: #{_lambda_.8} parent=15 // pred_fallthru
          _
        // Predicated region
        $region49: #{_lambda_.8} parent=15 // pred_check
          %p432 = pneg %p264
        $region50: #{_lambda_.8} parent=15 // pred_check_branch
          %434 = sbr.rel (%p432) target = $region52
        $region51: #{_lambda_.8} parent=15 // pred_region
          %s435 = sand.u32 %s22, 1
          %s436 = scalar_lea.sflag [#allocation5], %s435
          %s437 = sand.u32 %s254, 1
          %s438 = smul.addr %s437, 256
          %s439 = scalar_lea.vmem [#allocation6], %s438
          %441 = vsyncadd %s436, 0
          %s442 = smul.addr %s30, 64
          %s443 = smul.addr %s442, 4
          %s444 = scalar_lea.hbm %s8, %s443
          %s445 = sshll.u32 %s444, 4
          %s446 = int_to_ptr.hbm [resolvable:$true] %s445
          %s447 = sshll.u32 %s439, 4
          %s448 = int_to_ptr.vmem [resolvable:$true] %s447
          %453 = dma.hbm_to_vmem [thread:$0]  %s446, 4096, %s448, %s436, 64, 64, 4
        $region52: #{_lambda_.8} parent=15 // pred_fallthru
          _
        // Predicated region
        $region53: #{_lambda_.8} parent=15 // pred_check
          %p454 = pneg %p290
        $region54: #{_lambda_.8} parent=15 // pred_check_branch
          %456 = sbr.rel (%p454) target = $region56
        $region55: #{_lambda_.8} parent=15 // pred_region
          %p457 = scmp.lt.s32.totalorder %s30, 1
          %s458 = scalar_select %p457, %s30, 1
          %s459 = scalar_lea.vmem %s9, %s458
        $region56: #{_lambda_.8} parent=15 // pred_fallthru
          _
      $region16: #{_lambda_.8} parent=5 // pred_fallthru
        _
      %p460 = scmp.le.s32.totalorder 1, %s22
      %p461 = scmp.lt.s32.totalorder %s22, 5
      %p462 = pnand %p460, %p461
      %p463 = pneg %p462
      // Predicated region
      $region57: #{_lambda_.8} parent=5 // pred_check
        _
      $region58: #{_lambda_.8} parent=5 // pred_check_branch
        %465 = sbr.rel (%p462) target = $region60
      $region59: #{_lambda_.8} parent=5 // pred_region
        %s466 = ssub.s32 %s22, 1
        %s467 = sand.u32 %s101, 1
        %s468 = scalar_lea.sflag [#allocation3], %s467
        %s469 = sand.u32 %s101, 1
        %s470 = smul.addr %s469, 192
        %s471 = scalar_lea.vmem [#allocation2], %s470
        // Predicated region
        $region61: #{_lambda_.8} parent=59 // pred_check
          %p472 = pneg %p114
        $region62: #{_lambda_.8} parent=59 // pred_check_branch
          %474 = sbr.rel (%p472) target = $region64
        $region63: #{_lambda_.8} parent=59 // pred_region
          %476 = dma.done %s468, 3072
        $region64: #{_lambda_.8} parent=59 // pred_fallthru
          _
        %s477 = sand.u32 %s27, 1
        %s478 = scalar_lea.sflag [#allocation5], %s477
        %s479 = sand.u32 %s205, 1
        %s480 = smul.addr %s479, 256
        %s481 = scalar_lea.vmem [#allocation4], %s480
        // Predicated region
        $region65: #{_lambda_.8} parent=59 // pred_check
          %p482 = pneg %p218
        $region66: #{_lambda_.8} parent=59 // pred_check_branch
          %484 = sbr.rel (%p482) target = $region68
        $region67: #{_lambda_.8} parent=59 // pred_region
          %486 = dma.done %s478, 4096
        $region68: #{_lambda_.8} parent=59 // pred_fallthru
          _
        %s487 = sand.u32 %s27, 1
        %s488 = scalar_lea.sflag [#allocation5], %s487
        %s489 = sand.u32 %s257, 1
        %s490 = smul.addr %s489, 256
        %s491 = scalar_lea.vmem [#allocation6], %s490
        // Predicated region
        $region69: #{_lambda_.8} parent=59 // pred_check
          %p492 = pneg %p270
        $region70: #{_lambda_.8} parent=59 // pred_check_branch
          %494 = sbr.rel (%p492) target = $region72
        $region71: #{_lambda_.8} parent=59 // pred_region
          %496 = dma.done %s488, 4096
        $region72: #{_lambda_.8} parent=59 // pred_fallthru
          _
        %p497 = scmp.lt.s32.totalorder %s31, 1
        %s498 = scalar_select %p497, %s31, 1
        %s499 = smul.addr %s498, 2
        %s500 = smul.addr %s499, 8
        %s501 = scalar_lea.vmem %s0, %s500
        %p502 = pneg %p60
        %p503 = pneg %p57
        %p504 = scmp.lt.s32.totalorder %s31, 1
        %s505 = scalar_select %p504, %s31, 1
        %p506 = scmp.lt.s32.totalorder %s32, 2
        %s507 = scalar_select %p506, %s32, 2
        %s508 = smul.addr %s505, 3
        %s509 = sadd.s32 %s507, %s508
        %s510 = smul.addr %s509, 8
        %s511 = scalar_lea.vmem %s1, %s510
        %p512 = pneg %p88
        %p513 = pneg %p85
        %s514 = sand.u32 %s101, 1
        %s515 = scalar_lea.sflag [#allocation3], %s514
        %s516 = sand.u32 %s101, 1
        %s517 = smul.addr %s516, 192
        %s518 = scalar_lea.vmem [#allocation2], %s517
        %p519 = pneg %p114
        %p520 = pneg %p111
        %p521 = scmp.lt.s32.totalorder %s32, 1
        %s522 = scalar_select %p521, %s32, 1
        %s523 = smul.addr %s522, 3
        %s524 = scalar_lea.vmem %s3, %s523
        %p525 = pneg %p140
        %p526 = pneg %p137
        %p527 = scmp.lt.s32.totalorder %s32, 1
        %s528 = scalar_select %p527, %s32, 1
        %s529 = smul.addr %s528, 16
        %s530 = smul.addr %s529, 4
        %s531 = scalar_lea.vmem %s4, %s530
        %p532 = pneg %p166
        %p533 = pneg %p163
        %p534 = scmp.lt.s32.totalorder %s32, 1
        %s535 = scalar_select %p534, %s32, 1
        %s536 = scalar_lea.vmem %s5, %s535
        %p537 = pneg %p192
        %p538 = pneg %p189
        %s539 = sand.u32 %s27, 1
        %s540 = scalar_lea.sflag [#allocation5], %s539
        %s541 = sand.u32 %s205, 1
        %s542 = smul.addr %s541, 256
        %s543 = scalar_lea.vmem [#allocation4], %s542
        %p544 = pneg %p218
        %p545 = pneg %p215
        %p546 = scmp.lt.s32.totalorder %s32, 1
        %s547 = scalar_select %p546, %s32, 1
        %s548 = smul.addr %s547, 4
        %s549 = scalar_lea.vmem %s7, %s548
        %p550 = pneg %p244
        %p551 = pneg %p241
        %s552 = sand.u32 %s27, 1
        %s553 = scalar_lea.sflag [#allocation5], %s552
        %s554 = sand.u32 %s257, 1
        %s555 = smul.addr %s554, 256
        %s556 = scalar_lea.vmem [#allocation6], %s555
        %p557 = pneg %p270
        %p558 = pneg %p267
        %p559 = scmp.lt.s32.totalorder %s32, 1
        %s560 = scalar_select %p559, %s32, 1
        %s561 = scalar_lea.vmem %s9, %s560
        %p562 = pneg %p296
        %p563 = pneg %p293
        %p564 = pneg %p322
        %p565 = pneg %p319
        %p566 = scmp.lt.s32.totalorder %s31, 1
        %s567 = scalar_select %p566, %s31, 1
        %s568 = smul.addr %s567, 2
        %s569 = smul.addr %s568, 8
        %s570 = scalar_lea.vmem %s10, %s569
        %p571 = scmp.lt.s32.totalorder %s31, 1
        %s572 = scalar_select %p571, %s31, 1
        %s573 = smul.addr %s572, 2
        %s574 = smul.addr %s573, 8
        %s575 = scalar_lea.vmem %s0, %s574
        %p576 = scmp.lt.s32.totalorder %s31, 1
        %s577 = scalar_select %p576, %s31, 1
        %p578 = scmp.lt.s32.totalorder %s32, 2
        %s579 = scalar_select %p578, %s32, 2
        %s580 = smul.addr %s577, 3
        %s581 = sadd.s32 %s579, %s580
        %s582 = smul.addr %s581, 8
        %s583 = scalar_lea.vmem %s1, %s582
        %p584 = scmp.lt.s32.totalorder %s32, 1
        %s585 = scalar_select %p584, %s32, 1
        %s586 = smul.addr %s585, 3
        %s587 = scalar_lea.vmem %s3, %s586
        %p588 = scmp.lt.s32.totalorder %s32, 1
        %s589 = scalar_select %p588, %s32, 1
        %s590 = smul.addr %s589, 16
        %s591 = smul.addr %s590, 4
        %s592 = scalar_lea.vmem %s4, %s591
        %p593 = scmp.lt.s32.totalorder %s32, 1
        %s594 = scalar_select %p593, %s32, 1
        %s595 = scalar_lea.vmem %s5, %s594
        %p596 = scmp.lt.s32.totalorder %s32, 1
        %s597 = scalar_select %p596, %s32, 1
        %s598 = smul.addr %s597, 4
        %s599 = scalar_lea.vmem %s7, %s598
        %p600 = scmp.lt.s32.totalorder %s32, 1
        %s601 = scalar_select %p600, %s32, 1
        %s602 = scalar_lea.vmem %s9, %s601
        %p603 = scmp.lt.s32.totalorder %s31, 1
        %s604 = scalar_select %p603, %s31, 1
        %s605 = smul.addr %s604, 2
        %s606 = smul.addr %s605, 8
        %s607 = scalar_lea.vmem %s10, %s606
        %p609 = scmp.eq.s32.totalorder %s32, 0
        // Predicated region
        $region73: #{_lambda_.8} parent=59 // pred_check
          %p610 = pneg %p609
        $region74: #{_lambda_.8} parent=59 // pred_check_branch
          %612 = sbr.rel (%p610) target = $region76
        $region75: #{_lambda_.8} parent=59 // pred_region
          %v613 = vld [vmem:[%s575] sm:$0xff]
          %v614 = vld [vmem:[%s575 + $0x8] sm:$0xff]
          %615 = vst [vmem:[%s607] sm:$0xff] %v613
          %616 = vst [vmem:[%s607 + $0x8] sm:$0xff] %v614
        $region76: #{_lambda_.8} parent=59 // pred_fallthru
          _
        %v617 = vld [vmem:[%s607] sm:$0xff]
        %v618 = vld [vmem:[%s607 + $0x8] sm:$0xff]
        %v619 = vld [vmem:[%s583] sm:$0x3f]
        %620 = vadd.xlane.f32.xlu0 %v617
        %v621 = vpop.xlane.xlu0 %620
        %622 = vadd.xlane.f32.xlu0 %v618
        %v623 = vpop.xlane.xlu0 %622
        %v624 = vrcp.pop 128.0
        %v625 = vmul.f32 128.0, %v624
        %v626 = vsub.f32 1.0, %v625
        %v627 = vmul.f32 %v624, %v626
        %v628 = vadd.f32 %v624, %v627
        %vm629 = vweird.f32 %v624
        %v630 = vsel %vm629, %v624, %v628
        %v631 = vmul.f32 %v621, %v630
        %v632 = vmul.f32 %v623, %v630
        %v633 = vsub.f32 %v617, %v631
        %v634 = vsub.f32 %v618, %v632
        %v635 = vmul.f32 %v633, %v633
        %v636 = vmul.f32 %v634, %v634
        %637 = vadd.xlane.f32.xlu0 %v635
        %v638 = vpop.xlane.xlu0 %637
        %639 = vadd.xlane.f32.xlu0 %v636
        %v640 = vpop.xlane.xlu0 %639
        %v641 = vmul.f32 %v638, %v630
        %v642 = vmul.f32 %v640, %v630
        %v643 = vadd.f32 %v641, 1e-06
        %v644 = vadd.f32 %v642, 1e-06
        %v645 = vrsqrt.pop %v643
        %v646 = vmul.f32 %v645, %v643
        %v647 = vmul.f32 %v646, %v645
        %v648 = vmul.f32 0.5, %v647
        %v649 = vsub.f32 1.5, %v648
        %v650 = vmul.f32 %v645, %v649
        %vm651 = vweird.f32 %v643
        %vm652 = vweird.f32 %v645
        %vm653 = vmor %vm651, %vm652
        %v654 = vsel %vm653, %v645, %v650
        %v655 = vrsqrt.pop %v644
        %v656 = vmul.f32 %v655, %v644
        %v657 = vmul.f32 %v656, %v655
        %v658 = vmul.f32 0.5, %v657
        %v659 = vsub.f32 1.5, %v658
        %v660 = vmul.f32 %v655, %v659
        %vm661 = vweird.f32 %v644
        %vm662 = vweird.f32 %v655
        %vm663 = vmor %vm661, %vm662
        %v664 = vsel %vm663, %v655, %v660
        %v665 = vmul.f32 %v633, %v654
        %v666 = vmul.f32 %v634, %v664
        %v667 = vadd.f32 %v619, 1.0
        %v668 = vperm.slane %v667, 1
        %v669 = vmul.f32 %v665, %v668
        %v670 = vmul.f32 %v666, %v668
        %v671 = vperm.slane %v619, 0
        %v672 = vadd.f32 %v669, %v671
        %v673 = vadd.f32 %v670, %v671
        %v674 = vpack.c.bf16 %v673, %v672
        %v675 = vld [vmem:[%s471] sm:$0xff]
        %v676 = vld [vmem:[%s471 + $0x8] sm:$0xf]
        %v677 = vld [vmem:[%s471 + $0xc] sm:$0xff]
        %v678 = vld [vmem:[%s471 + $0x14] sm:$0xf]
        %v679 = vld [vmem:[%s471 + $0x18] sm:$0xff]
        %v680 = vld [vmem:[%s471 + $0x20] sm:$0xf]
        %v681 = vld [vmem:[%s471 + $0x24] sm:$0xff]
        %v682 = vld [vmem:[%s471 + $0x2c] sm:$0xf]
        %v683 = vld [vmem:[%s471 + $0x30] sm:$0xff]
        %v684 = vld [vmem:[%s471 + $0x38] sm:$0xf]
        %v685 = vld [vmem:[%s471 + $0x3c] sm:$0xff]
        %v686 = vld [vmem:[%s471 + $0x44] sm:$0xf]
        %v687 = vld [vmem:[%s471 + $0x48] sm:$0xff]
        %v688 = vld [vmem:[%s471 + $0x50] sm:$0xf]
        %v689 = vld [vmem:[%s471 + $0x54] sm:$0xff]
        %v690 = vld [vmem:[%s471 + $0x5c] sm:$0xf]
        %v691 = vld [vmem:[%s471 + $0x60] sm:$0xff]
        %v692 = vld [vmem:[%s471 + $0x68] sm:$0xf]
        %v693 = vld [vmem:[%s471 + $0x6c] sm:$0xff]
        %v694 = vld [vmem:[%s471 + $0x74] sm:$0xf]
        %v695 = vld [vmem:[%s471 + $0x78] sm:$0xff]
        %v696 = vld [vmem:[%s471 + $0x80] sm:$0xf]
        %v697 = vld [vmem:[%s471 + $0x84] sm:$0xff]
        %v698 = vld [vmem:[%s471 + $0x8c] sm:$0xf]
        %v699 = vld [vmem:[%s471 + $0x90] sm:$0xff]
        %v700 = vld [vmem:[%s471 + $0x98] sm:$0xf]
        %v701 = vld [vmem:[%s471 + $0x9c] sm:$0xff]
        %v702 = vld [vmem:[%s471 + $0xa4] sm:$0xf]
        %v703 = vld [vmem:[%s471 + $0xa8] sm:$0xff]
        %v704 = vld [vmem:[%s471 + $0xb0] sm:$0xf]
        %v705 = vld [vmem:[%s471 + $0xb4] sm:$0xff]
        %v706 = vld [vmem:[%s471 + $0xbc] sm:$0xf]
        %v707 = vld [vmem:[%s587] sm:$0x7]
        %v709 = vperm.slane %v707, 0
        %v710 = vperm.slane %v707, 1
        %v711 = vperm.slane %v707, 2
        %v747 = vunpack.c.l.b16 %v675
        %v748 = vunpack.c.h.b16 %v675
        %v749 = vunpack.c.l.b16 %v676
        %v750 = vunpack.c.l.b16 %v677
        %v751 = vunpack.c.h.b16 %v677
        %v752 = vunpack.c.l.b16 %v678
        %v753 = vunpack.c.l.b16 %v679
        %v754 = vunpack.c.h.b16 %v679
        %v755 = vunpack.c.l.b16 %v680
        %v756 = vunpack.c.l.b16 %v681
        %v757 = vunpack.c.h.b16 %v681
        %v758 = vunpack.c.l.b16 %v682
        %v759 = vunpack.c.l.b16 %v683
        %v760 = vunpack.c.h.b16 %v683
        %v761 = vunpack.c.l.b16 %v684
        %v762 = vunpack.c.l.b16 %v685
        %v763 = vunpack.c.h.b16 %v685
        %v764 = vunpack.c.l.b16 %v686
        %v765 = vunpack.c.l.b16 %v687
        %v766 = vunpack.c.h.b16 %v687
        %v767 = vunpack.c.l.b16 %v688
        %v768 = vunpack.c.l.b16 %v689
        %v769 = vunpack.c.h.b16 %v689
        %v770 = vunpack.c.l.b16 %v690
        %v771 = vunpack.c.l.b16 %v691
        %v772 = vunpack.c.h.b16 %v691
        %v773 = vunpack.c.l.b16 %v692
        %v774 = vunpack.c.l.b16 %v693
        %v775 = vunpack.c.h.b16 %v693
        %v776 = vunpack.c.l.b16 %v694
        %v777 = vunpack.c.l.b16 %v695
        %v778 = vunpack.c.h.b16 %v695
        %v779 = vunpack.c.l.b16 %v696
        %v780 = vunpack.c.l.b16 %v697
        %v781 = vunpack.c.h.b16 %v697
        %v782 = vunpack.c.l.b16 %v698
        %v783 = vunpack.c.l.b16 %v699
        %v784 = vunpack.c.h.b16 %v699
        %v785 = vunpack.c.l.b16 %v700
        %v786 = vunpack.c.l.b16 %v701
        %v787 = vunpack.c.h.b16 %v701
        %v788 = vunpack.c.l.b16 %v702
        %v789 = vunpack.c.l.b16 %v703
        %v790 = vunpack.c.h.b16 %v703
        %v791 = vunpack.c.l.b16 %v704
        %v792 = vunpack.c.l.b16 %v705
        %v793 = vunpack.c.h.b16 %v705
        %v794 = vunpack.c.l.b16 %v706
        %v795 = vpack.c.b16 %v750, %v747
        %v796 = vpack.c.b16 %v751, %v748
        %v797 = vpack.c.b16 %v752, %v749
        %v798 = vpack.c.b16 %v756, %v753
        %v799 = vpack.c.b16 %v757, %v754
        %v800 = vpack.c.b16 %v758, %v755
        %v801 = vpack.c.b16 %v762, %v759
        %v802 = vpack.c.b16 %v763, %v760
        %v803 = vpack.c.b16 %v764, %v761
        %v804 = vpack.c.b16 %v768, %v765
        %v805 = vpack.c.b16 %v769, %v766
        %v806 = vpack.c.b16 %v770, %v767
        %v807 = vpack.c.b16 %v774, %v771
        %v808 = vpack.c.b16 %v775, %v772
        %v809 = vpack.c.b16 %v776, %v773
        %v810 = vpack.c.b16 %v780, %v777
        %v811 = vpack.c.b16 %v781, %v778
        %v812 = vpack.c.b16 %v782, %v779
        %v813 = vpack.c.b16 %v786, %v783
        %v814 = vpack.c.b16 %v787, %v784
        %v815 = vpack.c.b16 %v788, %v785
        %v816 = vpack.c.b16 %v792, %v789
        %v817 = vpack.c.b16 %v793, %v790
        %v818 = vpack.c.b16 %v794, %v791
        %843 = vmatpush.bf16.msra.mxu0 %v816
        %844 = vmatpush.bf16.msra.mxu0 %v813
        %845 = vmatpush.bf16.msra.mxu0 %v810
        %846 = vmatpush.bf16.msra.mxu0 %v807
        %847 = vmatpush.bf16.msra.mxu0 %v804
        %848 = vmatpush.bf16.msra.mxu0 %v801
        %849 = vmatpush.bf16.msra.mxu0 %v798
        %850 = vmatpush.bf16.msra.mxu0 %v795
        %851 = vmatmul.bf16.gmra.mxu0 %v674
        %v852 = vpop.f32.mrf.mxu0
        %v853 = vadd.f32 %v709, %v852
        %v854 = vpop.f32.mrf.mxu0
        %v855 = vadd.f32 %v709, %v854
        %856 = vdwg.mxu0
        %857 = vmatpush.bf16.msra.mxu0 %v817
        %858 = vmatpush.bf16.msra.mxu0 %v814
        %859 = vmatpush.bf16.msra.mxu0 %v811
        %860 = vmatpush.bf16.msra.mxu0 %v808
        %861 = vmatpush.bf16.msra.mxu0 %v805
        %862 = vmatpush.bf16.msra.mxu0 %v802
        %863 = vmatpush.bf16.msra.mxu0 %v799
        %864 = vmatpush.bf16.msra.mxu0 %v796
        %865 = vmatmul.bf16.gmra.mxu0 %v674
        %v866 = vpop.f32.mrf.mxu0
        %v867 = vadd.f32 %v710, %v866
        %v868 = vpop.f32.mrf.mxu0
        %v869 = vadd.f32 %v710, %v868
        %870 = vdwg.mxu0
        %871 = vmatpush.bf16.msra.mxu0 %v818
        %872 = vmatpush.bf16.msra.mxu0 %v815
        %873 = vmatpush.bf16.msra.mxu0 %v812
        %874 = vmatpush.bf16.msra.mxu0 %v809
        %875 = vmatpush.bf16.msra.mxu0 %v806
        %876 = vmatpush.bf16.msra.mxu0 %v803
        %877 = vmatpush.bf16.msra.mxu0 %v800
        %878 = vmatpush.bf16.msra.mxu0 %v797
        %879 = vmatmul.bf16.gmra.mxu0 %v674
        %v880 = vpop.f32.mrf.mxu0
        %v881 = vadd.f32 %v711, %v880
        %v882 = vpop.f32.mrf.mxu0
        %v883 = vadd.f32 %v711, %v882
        %884 = vdwg.mxu0
        %v885 = vpack.c.bf16 %v855, %v853
        %v886 = vpack.c.bf16 %v869, %v867
        %vm887 = vcmask 523264
        %v889 = vsel %vm887, %v885, 0
        %v892 = vsel %vm887, %v886, 0
        %894 = vmatpush.bf16.xpose.msra.mxu0 0
        %895 = vmatpush.bf16.xpose.msra.mxu0 0
        %896 = vmatpush.bf16.xpose.msra.mxu0 0
        %897 = vmatpush.bf16.xpose.msra.mxu0 0
        %898 = vmatpush.bf16.xpose.msra.mxu0 0
        %899 = vmatpush.bf16.xpose.msra.mxu0 0
        %900 = vmatpush.bf16.xpose.msra.mxu0 0
        %901 = vmatpush.bf16.xpose.msra.mxu0 %v892
        %902 = vmatmul.bf16.gmra.mxu0 %v889
        %v903 = vpop.f32.mrf.mxu0
        %v904 = vadd.f32 0.0, %v903
        %v905 = vpop.f32.mrf.mxu0
        %v906 = vadd.f32 0.0, %v905
        %907 = vdwg.mxu0
        %vm908 = vcmask 130048
        %v909 = vsel %vm908, %v904, -inf
        %910 = vmax.xlane.f32.xlu0 %v909
        %v911 = vpop.xlane.xlu0 %910
        %v912 = vsel %vm908, %v906, -inf
        %913 = vmax.xlane.f32.xlu0 %v912
        %v914 = vpop.xlane.xlu0 %913
        %v915 = vsub.f32 %v904, %v911
        %v916 = vsub.f32 %v906, %v914
        %v917 = vmul.f32 %v915, 1.442695
        %v918 = vpow.pop %v917
        %v919 = vmul.f32 %v916, 1.442695
        %v920 = vpow.pop %v919
        %v921 = vsel %vm908, %v918, 0.0
        %922 = vadd.xlane.f32.xlu0 %v921
        %v923 = vpop.xlane.xlu0 %922
        %v924 = vsel %vm908, %v920, 0.0
        %925 = vadd.xlane.f32.xlu0 %v924
        %v926 = vpop.xlane.xlu0 %925
        %v927 = vrcp.pop %v923
        %v928 = vrcp.pop %v926
        %v929 = vmul.f32 %v918, %v927
        %v930 = vmul.f32 %v920, %v928
        %v931 = vpack.c.bf16 %v930, %v929
        %v932 = vpack.c.bf16 %v883, %v881
        %v934 = vsel %vm908, %v931, 0
        %936 = vmatpush.bf16.msra.mxu0 0
        %937 = vmatpush.bf16.msra.mxu0 0
        %938 = vmatpush.bf16.msra.mxu0 0
        %939 = vmatpush.bf16.msra.mxu0 0
        %940 = vmatpush.bf16.msra.mxu0 0
        %941 = vmatpush.bf16.msra.mxu0 0
        %942 = vmatpush.bf16.msra.mxu0 0
        %943 = vmatpush.bf16.msra.mxu0 %v932
        %944 = vmatmul.bf16.gmra.mxu0 %v934
        %v945 = vpop.f32.mrf.mxu0
        %v946 = vadd.f32 0.0, %v945
        %v947 = vpop.f32.mrf.mxu0
        %v948 = vadd.f32 0.0, %v947
        %949 = vdwg.mxu0
        %951 = vrot.lane.b32.xlu0 %v885, 64
        %v952 = vpop.permute.xlu0 %951
        %954 = vrot.lane.b32.xlu0 %v886, 64
        %v955 = vpop.permute.xlu0 %954
        %v957 = vsel %vm887, %v952, 0
        %v960 = vsel %vm887, %v955, 0
        %962 = vmatpush.bf16.xpose.msra.mxu0 0
        %963 = vmatpush.bf16.xpose.msra.mxu0 0
        %964 = vmatpush.bf16.xpose.msra.mxu0 0
        %965 = vmatpush.bf16.xpose.msra.mxu0 0
        %966 = vmatpush.bf16.xpose.msra.mxu0 0
        %967 = vmatpush.bf16.xpose.msra.mxu0 0
        %968 = vmatpush.bf16.xpose.msra.mxu0 0
        %969 = vmatpush.bf16.xpose.msra.mxu0 %v960
        %970 = vmatmul.bf16.gmra.mxu0 %v957
        %v971 = vpop.f32.mrf.mxu0
        %v972 = vadd.f32 0.0, %v971
        %v973 = vpop.f32.mrf.mxu0
        %v974 = vadd.f32 0.0, %v973
        %975 = vdwg.mxu0
        %v976 = vsel %vm908, %v972, -inf
        %977 = vmax.xlane.f32.xlu0 %v976
        %v978 = vpop.xlane.xlu0 %977
        %v979 = vsel %vm908, %v974, -inf
        %980 = vmax.xlane.f32.xlu0 %v979
        %v981 = vpop.xlane.xlu0 %980
        %v982 = vsub.f32 %v972, %v978
        %v983 = vsub.f32 %v974, %v981
        %v984 = vmul.f32 %v982, 1.442695
        %v985 = vpow.pop %v984
        %v986 = vmul.f32 %v983, 1.442695
        %v987 = vpow.pop %v986
        %v988 = vsel %vm908, %v985, 0.0
        %989 = vadd.xlane.f32.xlu0 %v988
        %v990 = vpop.xlane.xlu0 %989
        %v991 = vsel %vm908, %v987, 0.0
        %992 = vadd.xlane.f32.xlu0 %v991
        %v993 = vpop.xlane.xlu0 %992
        %v994 = vrcp.pop %v990
        %v995 = vrcp.pop %v993
        %v996 = vmul.f32 %v985, %v994
        %v997 = vmul.f32 %v987, %v995
        %v998 = vpack.c.bf16 %v997, %v996
        %1000 = vrot.lane.b32.xlu0 %v932, 64
        %v1001 = vpop.permute.xlu0 %1000
        %v1004 = vsel %vm908, %v998, 0
        %1006 = vmatpush.bf16.msra.mxu0 0
        %1007 = vmatpush.bf16.msra.mxu0 0
        %1008 = vmatpush.bf16.msra.mxu0 0
        %1009 = vmatpush.bf16.msra.mxu0 0
        %1010 = vmatpush.bf16.msra.mxu0 0
        %1011 = vmatpush.bf16.msra.mxu0 0
        %1012 = vmatpush.bf16.msra.mxu0 0
        %1013 = vmatpush.bf16.msra.mxu0 %v1001
        %1014 = vmatmul.bf16.gmra.mxu0 %v1004
        %v1015 = vpop.f32.mrf.mxu0
        %v1016 = vadd.f32 0.0, %v1015
        %v1017 = vpop.f32.mrf.mxu0
        %v1018 = vadd.f32 0.0, %v1017
        %1019 = vdwg.mxu0
        %1022 = vrot.lane.b32.xlu0 %v1016, 64
        %v1023 = vpop.permute.xlu0 %1022
        %1024 = vrot.lane.b32.xlu0 %v1018, 64
        %v1025 = vpop.permute.xlu0 %1024
        %v1028 = vsel %vm887, %v946, %v1023
        %v1029 = vsel %vm887, %v948, %v1025
        %v1030 = vpack.c.bf16 %v1029, %v1028
        %v1031 = vld [vmem:[%s592] sm:$0xf]
        %v1032 = vld [vmem:[%s592 + $0x4] sm:$0xf]
        %v1033 = vld [vmem:[%s592 + $0x8] sm:$0xf]
        %v1034 = vld [vmem:[%s592 + $0xc] sm:$0xf]
        %v1035 = vld [vmem:[%s592 + $0x10] sm:$0xf]
        %v1036 = vld [vmem:[%s592 + $0x14] sm:$0xf]
        %v1037 = vld [vmem:[%s592 + $0x18] sm:$0xf]
        %v1038 = vld [vmem:[%s592 + $0x1c] sm:$0xf]
        %v1039 = vld [vmem:[%s592 + $0x20] sm:$0xf]
        %v1040 = vld [vmem:[%s592 + $0x24] sm:$0xf]
        %v1041 = vld [vmem:[%s592 + $0x28] sm:$0xf]
        %v1042 = vld [vmem:[%s592 + $0x2c] sm:$0xf]
        %v1043 = vld [vmem:[%s592 + $0x30] sm:$0xf]
        %v1044 = vld [vmem:[%s592 + $0x34] sm:$0xf]
        %v1045 = vld [vmem:[%s592 + $0x38] sm:$0xf]
        %v1046 = vld [vmem:[%s592 + $0x3c] sm:$0xf]
        %v1047 = vld [vmem:[%s595] sm:$0x1]
        %v1049 = vperm.slane %v1047, 0
        %v1067 = vunpack.c.l.b16 %v1031
        %v1068 = vunpack.c.l.b16 %v1032
        %v1069 = vunpack.c.l.b16 %v1033
        %v1070 = vunpack.c.l.b16 %v1034
        %v1071 = vunpack.c.l.b16 %v1035
        %v1072 = vunpack.c.l.b16 %v1036
        %v1073 = vunpack.c.l.b16 %v1037
        %v1074 = vunpack.c.l.b16 %v1038
        %v1075 = vunpack.c.l.b16 %v1039
        %v1076 = vunpack.c.l.b16 %v1040
        %v1077 = vunpack.c.l.b16 %v1041
        %v1078 = vunpack.c.l.b16 %v1042
        %v1079 = vunpack.c.l.b16 %v1043
        %v1080 = vunpack.c.l.b16 %v1044
        %v1081 = vunpack.c.l.b16 %v1045
        %v1082 = vunpack.c.l.b16 %v1046
        %v1083 = vpack.c.b16 %v1068, %v1067
        %v1084 = vpack.c.b16 %v1070, %v1069
        %v1085 = vpack.c.b16 %v1072, %v1071
        %v1086 = vpack.c.b16 %v1074, %v1073
        %v1087 = vpack.c.b16 %v1076, %v1075
        %v1088 = vpack.c.b16 %v1078, %v1077
        %v1089 = vpack.c.b16 %v1080, %v1079
        %v1090 = vpack.c.b16 %v1082, %v1081
        %1099 = vmatpush.bf16.msra.mxu0 %v1090
        %1100 = vmatpush.bf16.msra.mxu0 %v1089
        %1101 = vmatpush.bf16.msra.mxu0 %v1088
        %1102 = vmatpush.bf16.msra.mxu0 %v1087
        %1103 = vmatpush.bf16.msra.mxu0 %v1086
        %1104 = vmatpush.bf16.msra.mxu0 %v1085
        %1105 = vmatpush.bf16.msra.mxu0 %v1084
        %1106 = vmatpush.bf16.msra.mxu0 %v1083
        %1107 = vmatmul.bf16.gmra.mxu0 %v1030
        %v1108 = vpop.f32.mrf.mxu0
        %v1109 = vadd.f32 %v1049, %v1108
        %v1110 = vpop.f32.mrf.mxu0
        %v1111 = vadd.f32 %v1049, %v1110
        %1112 = vdwg.mxu0
        %v1113 = vperm.slane %v619, 2
        %v1114 = vmul.f32 %v1113, %v1109
        %v1115 = vmul.f32 %v1113, %v1111
        %v1116 = vadd.f32 %v672, %v1114
        %v1117 = vadd.f32 %v673, %v1115
        %1118 = vadd.xlane.f32.xlu0 %v1116
        %v1119 = vpop.xlane.xlu0 %1118
        %1120 = vadd.xlane.f32.xlu0 %v1117
        %v1121 = vpop.xlane.xlu0 %1120
        %v1122 = vmul.f32 %v1119, %v630
        %v1123 = vmul.f32 %v1121, %v630
        %v1124 = vsub.f32 %v1116, %v1122
        %v1125 = vsub.f32 %v1117, %v1123
        %v1126 = vmul.f32 %v1124, %v1124
        %v1127 = vmul.f32 %v1125, %v1125
        %1128 = vadd.xlane.f32.xlu0 %v1126
        %v1129 = vpop.xlane.xlu0 %1128
        %1130 = vadd.xlane.f32.xlu0 %v1127
        %v1131 = vpop.xlane.xlu0 %1130
        %v1132 = vmul.f32 %v1129, %v630
        %v1133 = vmul.f32 %v1131, %v630
        %v1134 = vadd.f32 %v1132, 1e-06
        %v1135 = vadd.f32 %v1133, 1e-06
        %v1136 = vrsqrt.pop %v1134
        %v1137 = vmul.f32 %v1136, %v1134
        %v1138 = vmul.f32 %v1137, %v1136
        %v1139 = vmul.f32 0.5, %v1138
        %v1140 = vsub.f32 1.5, %v1139
        %v1141 = vmul.f32 %v1136, %v1140
        %vm1142 = vweird.f32 %v1134
        %vm1143 = vweird.f32 %v1136
        %vm1144 = vmor %vm1142, %vm1143
        %v1145 = vsel %vm1144, %v1136, %v1141
        %v1146 = vrsqrt.pop %v1135
        %v1147 = vmul.f32 %v1146, %v1135
        %v1148 = vmul.f32 %v1147, %v1146
        %v1149 = vmul.f32 0.5, %v1148
        %v1150 = vsub.f32 1.5, %v1149
        %v1151 = vmul.f32 %v1146, %v1150
        %vm1152 = vweird.f32 %v1135
        %vm1153 = vweird.f32 %v1146
        %vm1154 = vmor %vm1152, %vm1153
        %v1155 = vsel %vm1154, %v1146, %v1151
        %v1156 = vmul.f32 %v1124, %v1145
        %v1157 = vmul.f32 %v1125, %v1155
        %v1158 = vperm.slane %v667, 4
        %v1159 = vmul.f32 %v1156, %v1158
        %v1160 = vmul.f32 %v1157, %v1158
        %v1161 = vperm.slane %v619, 3
        %v1162 = vadd.f32 %v1159, %v1161
        %v1163 = vadd.f32 %v1160, %v1161
        %v1164 = vpack.c.bf16 %v1163, %v1162
        %v1165 = vld [vmem:[%s481] sm:$0xff]
        %v1166 = vld [vmem:[%s481 + $0x8] sm:$0xff]
        %v1167 = vld [vmem:[%s481 + $0x10] sm:$0xff]
        %v1168 = vld [vmem:[%s481 + $0x18] sm:$0xff]
        %v1169 = vld [vmem:[%s481 + $0x20] sm:$0xff]
        %v1170 = vld [vmem:[%s481 + $0x28] sm:$0xff]
        %v1171 = vld [vmem:[%s481 + $0x30] sm:$0xff]
        %v1172 = vld [vmem:[%s481 + $0x38] sm:$0xff]
        %v1173 = vld [vmem:[%s481 + $0x40] sm:$0xff]
        %v1174 = vld [vmem:[%s481 + $0x48] sm:$0xff]
        %v1175 = vld [vmem:[%s481 + $0x50] sm:$0xff]
        %v1176 = vld [vmem:[%s481 + $0x58] sm:$0xff]
        %v1177 = vld [vmem:[%s481 + $0x60] sm:$0xff]
        %v1178 = vld [vmem:[%s481 + $0x68] sm:$0xff]
        %v1179 = vld [vmem:[%s481 + $0x70] sm:$0xff]
        %v1180 = vld [vmem:[%s481 + $0x78] sm:$0xff]
        %v1181 = vld [vmem:[%s481 + $0x80] sm:$0xff]
        %v1182 = vld [vmem:[%s481 + $0x88] sm:$0xff]
        %v1183 = vld [vmem:[%s481 + $0x90] sm:$0xff]
        %v1184 = vld [vmem:[%s481 + $0x98] sm:$0xff]
        %v1185 = vld [vmem:[%s481 + $0xa0] sm:$0xff]
        %v1186 = vld [vmem:[%s481 + $0xa8] sm:$0xff]
        %v1187 = vld [vmem:[%s481 + $0xb0] sm:$0xff]
        %v1188 = vld [vmem:[%s481 + $0xb8] sm:$0xff]
        %v1189 = vld [vmem:[%s481 + $0xc0] sm:$0xff]
        %v1190 = vld [vmem:[%s481 + $0xc8] sm:$0xff]
        %v1191 = vld [vmem:[%s481 + $0xd0] sm:$0xff]
        %v1192 = vld [vmem:[%s481 + $0xd8] sm:$0xff]
        %v1193 = vld [vmem:[%s481 + $0xe0] sm:$0xff]
        %v1194 = vld [vmem:[%s481 + $0xe8] sm:$0xff]
        %v1195 = vld [vmem:[%s481 + $0xf0] sm:$0xff]
        %v1196 = vld [vmem:[%s481 + $0xf8] sm:$0xff]
        %v1197 = vld [vmem:[%s599] sm:$0xf]
        %v1199 = vperm.slane %v1197, 0
        %v1200 = vperm.slane %v1197, 1
        %v1201 = vperm.slane %v1197, 2
        %v1202 = vperm.slane %v1197, 3
        %v1239 = vunpack.c.l.b16 %v1165
        %v1240 = vunpack.c.h.b16 %v1165
        %v1241 = vunpack.c.l.b16 %v1166
        %v1242 = vunpack.c.h.b16 %v1166
        %v1243 = vunpack.c.l.b16 %v1167
        %v1244 = vunpack.c.h.b16 %v1167
        %v1245 = vunpack.c.l.b16 %v1168
        %v1246 = vunpack.c.h.b16 %v1168
        %v1247 = vunpack.c.l.b16 %v1169
        %v1248 = vunpack.c.h.b16 %v1169
        %v1249 = vunpack.c.l.b16 %v1170
        %v1250 = vunpack.c.h.b16 %v1170
        %v1251 = vunpack.c.l.b16 %v1171
        %v1252 = vunpack.c.h.b16 %v1171
        %v1253 = vunpack.c.l.b16 %v1172
        %v1254 = vunpack.c.h.b16 %v1172
        %v1255 = vunpack.c.l.b16 %v1173
        %v1256 = vunpack.c.h.b16 %v1173
        %v1257 = vunpack.c.l.b16 %v1174
        %v1258 = vunpack.c.h.b16 %v1174
        %v1259 = vunpack.c.l.b16 %v1175
        %v1260 = vunpack.c.h.b16 %v1175
        %v1261 = vunpack.c.l.b16 %v1176
        %v1262 = vunpack.c.h.b16 %v1176
        %v1263 = vunpack.c.l.b16 %v1177
        %v1264 = vunpack.c.h.b16 %v1177
        %v1265 = vunpack.c.l.b16 %v1178
        %v1266 = vunpack.c.h.b16 %v1178
        %v1267 = vunpack.c.l.b16 %v1179
        %v1268 = vunpack.c.h.b16 %v1179
        %v1269 = vunpack.c.l.b16 %v1180
        %v1270 = vunpack.c.h.b16 %v1180
        %v1271 = vunpack.c.l.b16 %v1181
        %v1272 = vunpack.c.h.b16 %v1181
        %v1273 = vunpack.c.l.b16 %v1182
        %v1274 = vunpack.c.h.b16 %v1182
        %v1275 = vunpack.c.l.b16 %v1183
        %v1276 = vunpack.c.h.b16 %v1183
        %v1277 = vunpack.c.l.b16 %v1184
        %v1278 = vunpack.c.h.b16 %v1184
        %v1279 = vunpack.c.l.b16 %v1185
        %v1280 = vunpack.c.h.b16 %v1185
        %v1281 = vunpack.c.l.b16 %v1186
        %v1282 = vunpack.c.h.b16 %v1186
        %v1283 = vunpack.c.l.b16 %v1187
        %v1284 = vunpack.c.h.b16 %v1187
        %v1285 = vunpack.c.l.b16 %v1188
        %v1286 = vunpack.c.h.b16 %v1188
        %v1287 = vunpack.c.l.b16 %v1189
        %v1288 = vunpack.c.h.b16 %v1189
        %v1289 = vunpack.c.l.b16 %v1190
        %v1290 = vunpack.c.h.b16 %v1190
        %v1291 = vunpack.c.l.b16 %v1191
        %v1292 = vunpack.c.h.b16 %v1191
        %v1293 = vunpack.c.l.b16 %v1192
        %v1294 = vunpack.c.h.b16 %v1192
        %v1295 = vunpack.c.l.b16 %v1193
        %v1296 = vunpack.c.h.b16 %v1193
        %v1297 = vunpack.c.l.b16 %v1194
        %v1298 = vunpack.c.h.b16 %v1194
        %v1299 = vunpack.c.l.b16 %v1195
        %v1300 = vunpack.c.h.b16 %v1195
        %v1301 = vunpack.c.l.b16 %v1196
        %v1302 = vunpack.c.h.b16 %v1196
        %v1303 = vpack.c.b16 %v1243, %v1239
        %v1304 = vpack.c.b16 %v1244, %v1240
        %v1305 = vpack.c.b16 %v1245, %v1241
        %v1306 = vpack.c.b16 %v1246, %v1242
        %v1307 = vpack.c.b16 %v1251, %v1247
        %v1308 = vpack.c.b16 %v1252, %v1248
        %v1309 = vpack.c.b16 %v1253, %v1249
        %v1310 = vpack.c.b16 %v1254, %v1250
        %v1311 = vpack.c.b16 %v1259, %v1255
        %v1312 = vpack.c.b16 %v1260, %v1256
        %v1313 = vpack.c.b16 %v1261, %v1257
        %v1314 = vpack.c.b16 %v1262, %v1258
        %v1315 = vpack.c.b16 %v1267, %v1263
        %v1316 = vpack.c.b16 %v1268, %v1264
        %v1317 = vpack.c.b16 %v1269, %v1265
        %v1318 = vpack.c.b16 %v1270, %v1266
        %v1319 = vpack.c.b16 %v1275, %v1271
        %v1320 = vpack.c.b16 %v1276, %v1272
        %v1321 = vpack.c.b16 %v1277, %v1273
        %v1322 = vpack.c.b16 %v1278, %v1274
        %v1323 = vpack.c.b16 %v1283, %v1279
        %v1324 = vpack.c.b16 %v1284, %v1280
        %v1325 = vpack.c.b16 %v1285, %v1281
        %v1326 = vpack.c.b16 %v1286, %v1282
        %v1327 = vpack.c.b16 %v1291, %v1287
        %v1328 = vpack.c.b16 %v1292, %v1288
        %v1329 = vpack.c.b16 %v1293, %v1289
        %v1330 = vpack.c.b16 %v1294, %v1290
        %v1331 = vpack.c.b16 %v1299, %v1295
        %v1332 = vpack.c.b16 %v1300, %v1296
        %v1333 = vpack.c.b16 %v1301, %v1297
        %v1334 = vpack.c.b16 %v1302, %v1298
        %1367 = vmatpush.bf16.msra.mxu0 %v1331
        %1368 = vmatpush.bf16.msra.mxu0 %v1327
        %1369 = vmatpush.bf16.msra.mxu0 %v1323
        %1370 = vmatpush.bf16.msra.mxu0 %v1319
        %1371 = vmatpush.bf16.msra.mxu0 %v1315
        %1372 = vmatpush.bf16.msra.mxu0 %v1311
        %1373 = vmatpush.bf16.msra.mxu0 %v1307
        %1374 = vmatpush.bf16.msra.mxu0 %v1303
        %1375 = vmatmul.bf16.gmra.mxu0 %v1164
        %v1376 = vpop.f32.mrf.mxu0
        %v1377 = vadd.f32 %v1199, %v1376
        %v1378 = vpop.f32.mrf.mxu0
        %v1379 = vadd.f32 %v1199, %v1378
        %1380 = vdwg.mxu0
        %1381 = vmatpush.bf16.msra.mxu0 %v1332
        %1382 = vmatpush.bf16.msra.mxu0 %v1328
        %1383 = vmatpush.bf16.msra.mxu0 %v1324
        %1384 = vmatpush.bf16.msra.mxu0 %v1320
        %1385 = vmatpush.bf16.msra.mxu0 %v1316
        %1386 = vmatpush.bf16.msra.mxu0 %v1312
        %1387 = vmatpush.bf16.msra.mxu0 %v1308
        %1388 = vmatpush.bf16.msra.mxu0 %v1304
        %1389 = vmatmul.bf16.gmra.mxu0 %v1164
        %v1390 = vpop.f32.mrf.mxu0
        %v1391 = vadd.f32 %v1200, %v1390
        %v1392 = vpop.f32.mrf.mxu0
        %v1393 = vadd.f32 %v1200, %v1392
        %1394 = vdwg.mxu0
        %1395 = vmatpush.bf16.msra.mxu0 %v1333
        %1396 = vmatpush.bf16.msra.mxu0 %v1329
        %1397 = vmatpush.bf16.msra.mxu0 %v1325
        %1398 = vmatpush.bf16.msra.mxu0 %v1321
        %1399 = vmatpush.bf16.msra.mxu0 %v1317
        %1400 = vmatpush.bf16.msra.mxu0 %v1313
        %1401 = vmatpush.bf16.msra.mxu0 %v1309
        %1402 = vmatpush.bf16.msra.mxu0 %v1305
        %1403 = vmatmul.bf16.gmra.mxu0 %v1164
        %v1404 = vpop.f32.mrf.mxu0
        %v1405 = vadd.f32 %v1201, %v1404
        %v1406 = vpop.f32.mrf.mxu0
        %v1407 = vadd.f32 %v1201, %v1406
        %1408 = vdwg.mxu0
        %1409 = vmatpush.bf16.msra.mxu0 %v1334
        %1410 = vmatpush.bf16.msra.mxu0 %v1330
        %1411 = vmatpush.bf16.msra.mxu0 %v1326
        %1412 = vmatpush.bf16.msra.mxu0 %v1322
        %1413 = vmatpush.bf16.msra.mxu0 %v1318
        %1414 = vmatpush.bf16.msra.mxu0 %v1314
        %1415 = vmatpush.bf16.msra.mxu0 %v1310
        %1416 = vmatpush.bf16.msra.mxu0 %v1306
        %1417 = vmatmul.bf16.gmra.mxu0 %v1164
        %v1418 = vpop.f32.mrf.mxu0
        %v1419 = vadd.f32 %v1202, %v1418
        %v1420 = vpop.f32.mrf.mxu0
        %v1421 = vadd.f32 %v1202, %v1420
        %1422 = vdwg.mxu0
        %v1423 = vmul.f32 %v1377, 0.5
        %v1424 = vmul.f32 %v1391, 0.5
        %v1425 = vmul.f32 %v1405, 0.5
        %v1426 = vmul.f32 %v1419, 0.5
        %v1427 = vmul.f32 %v1379, 0.5
        %v1428 = vmul.f32 %v1393, 0.5
        %v1429 = vmul.f32 %v1407, 0.5
        %v1430 = vmul.f32 %v1421, 0.5
        %v1431 = vmul.f32 %v1377, 0.044715
        %v1432 = vmul.f32 %v1391, 0.044715
        %v1433 = vmul.f32 %v1405, 0.044715
        %v1434 = vmul.f32 %v1419, 0.044715
        %v1435 = vmul.f32 %v1379, 0.044715
        %v1436 = vmul.f32 %v1393, 0.044715
        %v1437 = vmul.f32 %v1407, 0.044715
        %v1438 = vmul.f32 %v1421, 0.044715
        %v1439 = vmul.f32 %v1431, %v1377
        %v1440 = vmul.f32 %v1432, %v1391
        %v1441 = vmul.f32 %v1433, %v1405
        %v1442 = vmul.f32 %v1434, %v1419
        %v1443 = vmul.f32 %v1435, %v1379
        %v1444 = vmul.f32 %v1436, %v1393
        %v1445 = vmul.f32 %v1437, %v1407
        %v1446 = vmul.f32 %v1438, %v1421
        %v1447 = vmul.f32 %v1439, %v1377
        %v1448 = vmul.f32 %v1440, %v1391
        %v1449 = vmul.f32 %v1441, %v1405
        %v1450 = vmul.f32 %v1442, %v1419
        %v1451 = vmul.f32 %v1443, %v1379
        %v1452 = vmul.f32 %v1444, %v1393
        %v1453 = vmul.f32 %v1445, %v1407
        %v1454 = vmul.f32 %v1446, %v1421
        %v1455 = vadd.f32 %v1377, %v1447
        %v1456 = vadd.f32 %v1391, %v1448
        %v1457 = vadd.f32 %v1405, %v1449
        %v1458 = vadd.f32 %v1419, %v1450
        %v1459 = vadd.f32 %v1379, %v1451
        %v1460 = vadd.f32 %v1393, %v1452
        %v1461 = vadd.f32 %v1407, %v1453
        %v1462 = vadd.f32 %v1421, %v1454
        %v1463 = vmul.f32 %v1455, 0.7978846
        %v1464 = vmul.f32 %v1456, 0.7978846
        %v1465 = vmul.f32 %v1457, 0.7978846
        %v1466 = vmul.f32 %v1458, 0.7978846
        %v1467 = vmul.f32 %v1459, 0.7978846
        %v1468 = vmul.f32 %v1460, 0.7978846
        %v1469 = vmul.f32 %v1461, 0.7978846
        %v1470 = vmul.f32 %v1462, 0.7978846
        %v1471 = vtanh.pop %v1463
        %v1472 = vtanh.pop %v1464
        %v1473 = vtanh.pop %v1465
        %v1474 = vtanh.pop %v1466
        %v1475 = vtanh.pop %v1467
        %v1476 = vtanh.pop %v1468
        %v1477 = vtanh.pop %v1469
        %v1478 = vtanh.pop %v1470
        %v1479 = vadd.f32 %v1471, 1.0
        %v1480 = vadd.f32 %v1472, 1.0
        %v1481 = vadd.f32 %v1473, 1.0
        %v1482 = vadd.f32 %v1474, 1.0
        %v1483 = vadd.f32 %v1475, 1.0
        %v1484 = vadd.f32 %v1476, 1.0
        %v1485 = vadd.f32 %v1477, 1.0
        %v1486 = vadd.f32 %v1478, 1.0
        %v1487 = vmul.f32 %v1423, %v1479
        %v1488 = vmul.f32 %v1424, %v1480
        %v1489 = vmul.f32 %v1425, %v1481
        %v1490 = vmul.f32 %v1426, %v1482
        %v1491 = vmul.f32 %v1427, %v1483
        %v1492 = vmul.f32 %v1428, %v1484
        %v1493 = vmul.f32 %v1429, %v1485
        %v1494 = vmul.f32 %v1430, %v1486
        %v1495 = vpack.c.bf16 %v1491, %v1487
        %v1496 = vpack.c.bf16 %v1492, %v1488
        %v1497 = vpack.c.bf16 %v1493, %v1489
        %v1498 = vpack.c.bf16 %v1494, %v1490
        %v1499 = vld [vmem:[%s491] sm:$0xf]
        %v1500 = vld [vmem:[%s491 + $0x4] sm:$0xf]
        %v1501 = vld [vmem:[%s491 + $0x8] sm:$0xf]
        %v1502 = vld [vmem:[%s491 + $0xc] sm:$0xf]
        %v1503 = vld [vmem:[%s491 + $0x10] sm:$0xf]
        %v1504 = vld [vmem:[%s491 + $0x14] sm:$0xf]
        %v1505 = vld [vmem:[%s491 + $0x18] sm:$0xf]
        %v1506 = vld [vmem:[%s491 + $0x1c] sm:$0xf]
        %v1507 = vld [vmem:[%s491 + $0x20] sm:$0xf]
        %v1508 = vld [vmem:[%s491 + $0x24] sm:$0xf]
        %v1509 = vld [vmem:[%s491 + $0x28] sm:$0xf]
        %v1510 = vld [vmem:[%s491 + $0x2c] sm:$0xf]
        %v1511 = vld [vmem:[%s491 + $0x30] sm:$0xf]
        %v1512 = vld [vmem:[%s491 + $0x34] sm:$0xf]
        %v1513 = vld [vmem:[%s491 + $0x38] sm:$0xf]
        %v1514 = vld [vmem:[%s491 + $0x3c] sm:$0xf]
        %v1515 = vld [vmem:[%s491 + $0x40] sm:$0xf]
        %v1516 = vld [vmem:[%s491 + $0x44] sm:$0xf]
        %v1517 = vld [vmem:[%s491 + $0x48] sm:$0xf]
        %v1518 = vld [vmem:[%s491 + $0x4c] sm:$0xf]
        %v1519 = vld [vmem:[%s491 + $0x50] sm:$0xf]
        %v1520 = vld [vmem:[%s491 + $0x54] sm:$0xf]
        %v1521 = vld [vmem:[%s491 + $0x58] sm:$0xf]
        %v1522 = vld [vmem:[%s491 + $0x5c] sm:$0xf]
        %v1523 = vld [vmem:[%s491 + $0x60] sm:$0xf]
        %v1524 = vld [vmem:[%s491 + $0x64] sm:$0xf]
        %v1525 = vld [vmem:[%s491 + $0x68] sm:$0xf]
        %v1526 = vld [vmem:[%s491 + $0x6c] sm:$0xf]
        %v1527 = vld [vmem:[%s491 + $0x70] sm:$0xf]
        %v1528 = vld [vmem:[%s491 + $0x74] sm:$0xf]
        %v1529 = vld [vmem:[%s491 + $0x78] sm:$0xf]
        %v1530 = vld [vmem:[%s491 + $0x7c] sm:$0xf]
        %v1531 = vld [vmem:[%s491 + $0x80] sm:$0xf]
        %v1532 = vld [vmem:[%s491 + $0x84] sm:$0xf]
        %v1533 = vld [vmem:[%s491 + $0x88] sm:$0xf]
        %v1534 = vld [vmem:[%s491 + $0x8c] sm:$0xf]
        %v1535 = vld [vmem:[%s491 + $0x90] sm:$0xf]
        %v1536 = vld [vmem:[%s491 + $0x94] sm:$0xf]
        %v1537 = vld [vmem:[%s491 + $0x98] sm:$0xf]
        %v1538 = vld [vmem:[%s491 + $0x9c] sm:$0xf]
        %v1539 = vld [vmem:[%s491 + $0xa0] sm:$0xf]
        %v1540 = vld [vmem:[%s491 + $0xa4] sm:$0xf]
        %v1541 = vld [vmem:[%s491 + $0xa8] sm:$0xf]
        %v1542 = vld [vmem:[%s491 + $0xac] sm:$0xf]
        %v1543 = vld [vmem:[%s491 + $0xb0] sm:$0xf]
        %v1544 = vld [vmem:[%s491 + $0xb4] sm:$0xf]
        %v1545 = vld [vmem:[%s491 + $0xb8] sm:$0xf]
        %v1546 = vld [vmem:[%s491 + $0xbc] sm:$0xf]
        %v1547 = vld [vmem:[%s491 + $0xc0] sm:$0xf]
        %v1548 = vld [vmem:[%s491 + $0xc4] sm:$0xf]
        %v1549 = vld [vmem:[%s491 + $0xc8] sm:$0xf]
        %v1550 = vld [vmem:[%s491 + $0xcc] sm:$0xf]
        %v1551 = vld [vmem:[%s491 + $0xd0] sm:$0xf]
        %v1552 = vld [vmem:[%s491 + $0xd4] sm:$0xf]
        %v1553 = vld [vmem:[%s491 + $0xd8] sm:$0xf]
        %v1554 = vld [vmem:[%s491 + $0xdc] sm:$0xf]
        %v1555 = vld [vmem:[%s491 + $0xe0] sm:$0xf]
        %v1556 = vld [vmem:[%s491 + $0xe4] sm:$0xf]
        %v1557 = vld [vmem:[%s491 + $0xe8] sm:$0xf]
        %v1558 = vld [vmem:[%s491 + $0xec] sm:$0xf]
        %v1559 = vld [vmem:[%s491 + $0xf0] sm:$0xf]
        %v1560 = vld [vmem:[%s491 + $0xf4] sm:$0xf]
        %v1561 = vld [vmem:[%s491 + $0xf8] sm:$0xf]
        %v1562 = vld [vmem:[%s491 + $0xfc] sm:$0xf]
        %v1563 = vld [vmem:[%s602] sm:$0x1]
        %v1565 = vperm.slane %v1563, 0
        %v1631 = vunpack.c.l.b16 %v1499
        %v1632 = vunpack.c.l.b16 %v1500
        %v1633 = vunpack.c.l.b16 %v1501
        %v1634 = vunpack.c.l.b16 %v1502
        %v1635 = vunpack.c.l.b16 %v1503
        %v1636 = vunpack.c.l.b16 %v1504
        %v1637 = vunpack.c.l.b16 %v1505
        %v1638 = vunpack.c.l.b16 %v1506
        %v1639 = vunpack.c.l.b16 %v1507
        %v1640 = vunpack.c.l.b16 %v1508
        %v1641 = vunpack.c.l.b16 %v1509
        %v1642 = vunpack.c.l.b16 %v1510
        %v1643 = vunpack.c.l.b16 %v1511
        %v1644 = vunpack.c.l.b16 %v1512
        %v1645 = vunpack.c.l.b16 %v1513
        %v1646 = vunpack.c.l.b16 %v1514
        %v1647 = vunpack.c.l.b16 %v1515
        %v1648 = vunpack.c.l.b16 %v1516
        %v1649 = vunpack.c.l.b16 %v1517
        %v1650 = vunpack.c.l.b16 %v1518
        %v1651 = vunpack.c.l.b16 %v1519
        %v1652 = vunpack.c.l.b16 %v1520
        %v1653 = vunpack.c.l.b16 %v1521
        %v1654 = vunpack.c.l.b16 %v1522
        %v1655 = vunpack.c.l.b16 %v1523
        %v1656 = vunpack.c.l.b16 %v1524
        %v1657 = vunpack.c.l.b16 %v1525
        %v1658 = vunpack.c.l.b16 %v1526
        %v1659 = vunpack.c.l.b16 %v1527
        %v1660 = vunpack.c.l.b16 %v1528
        %v1661 = vunpack.c.l.b16 %v1529
        %v1662 = vunpack.c.l.b16 %v1530
        %v1663 = vunpack.c.l.b16 %v1531
        %v1664 = vunpack.c.l.b16 %v1532
        %v1665 = vunpack.c.l.b16 %v1533
        %v1666 = vunpack.c.l.b16 %v1534
        %v1667 = vunpack.c.l.b16 %v1535
        %v1668 = vunpack.c.l.b16 %v1536
        %v1669 = vunpack.c.l.b16 %v1537
        %v1670 = vunpack.c.l.b16 %v1538
        %v1671 = vunpack.c.l.b16 %v1539
        %v1672 = vunpack.c.l.b16 %v1540
        %v1673 = vunpack.c.l.b16 %v1541
        %v1674 = vunpack.c.l.b16 %v1542
        %v1675 = vunpack.c.l.b16 %v1543
        %v1676 = vunpack.c.l.b16 %v1544
        %v1677 = vunpack.c.l.b16 %v1545
        %v1678 = vunpack.c.l.b16 %v1546
        %v1679 = vunpack.c.l.b16 %v1547
        %v1680 = vunpack.c.l.b16 %v1548
        %v1681 = vunpack.c.l.b16 %v1549
        %v1682 = vunpack.c.l.b16 %v1550
        %v1683 = vunpack.c.l.b16 %v1551
        %v1684 = vunpack.c.l.b16 %v1552
        %v1685 = vunpack.c.l.b16 %v1553
        %v1686 = vunpack.c.l.b16 %v1554
        %v1687 = vunpack.c.l.b16 %v1555
        %v1688 = vunpack.c.l.b16 %v1556
        %v1689 = vunpack.c.l.b16 %v1557
        %v1690 = vunpack.c.l.b16 %v1558
        %v1691 = vunpack.c.l.b16 %v1559
        %v1692 = vunpack.c.l.b16 %v1560
        %v1693 = vunpack.c.l.b16 %v1561
        %v1694 = vunpack.c.l.b16 %v1562
        %v1695 = vpack.c.b16 %v1632, %v1631
        %v1696 = vpack.c.b16 %v1634, %v1633
        %v1697 = vpack.c.b16 %v1636, %v1635
        %v1698 = vpack.c.b16 %v1638, %v1637
        %v1699 = vpack.c.b16 %v1640, %v1639
        %v1700 = vpack.c.b16 %v1642, %v1641
        %v1701 = vpack.c.b16 %v1644, %v1643
        %v1702 = vpack.c.b16 %v1646, %v1645
        %v1703 = vpack.c.b16 %v1648, %v1647
        %v1704 = vpack.c.b16 %v1650, %v1649
        %v1705 = vpack.c.b16 %v1652, %v1651
        %v1706 = vpack.c.b16 %v1654, %v1653
        %v1707 = vpack.c.b16 %v1656, %v1655
        %v1708 = vpack.c.b16 %v1658, %v1657
        %v1709 = vpack.c.b16 %v1660, %v1659
        %v1710 = vpack.c.b16 %v1662, %v1661
        %v1711 = vpack.c.b16 %v1664, %v1663
        %v1712 = vpack.c.b16 %v1666, %v1665
        %v1713 = vpack.c.b16 %v1668, %v1667
        %v1714 = vpack.c.b16 %v1670, %v1669
        %v1715 = vpack.c.b16 %v1672, %v1671
        %v1716 = vpack.c.b16 %v1674, %v1673
        %v1717 = vpack.c.b16 %v1676, %v1675
        %v1718 = vpack.c.b16 %v1678, %v1677
        %v1719 = vpack.c.b16 %v1680, %v1679
        %v1720 = vpack.c.b16 %v1682, %v1681
        %v1721 = vpack.c.b16 %v1684, %v1683
        %v1722 = vpack.c.b16 %v1686, %v1685
        %v1723 = vpack.c.b16 %v1688, %v1687
        %v1724 = vpack.c.b16 %v1690, %v1689
        %v1725 = vpack.c.b16 %v1692, %v1691
        %v1726 = vpack.c.b16 %v1694, %v1693
        %1759 = vmatpush.bf16.msra.mxu0 %v1702
        %1760 = vmatpush.bf16.msra.mxu0 %v1701
        %1761 = vmatpush.bf16.msra.mxu0 %v1700
        %1762 = vmatpush.bf16.msra.mxu0 %v1699
        %1763 = vmatpush.bf16.msra.mxu0 %v1698
        %1764 = vmatpush.bf16.msra.mxu0 %v1697
        %1765 = vmatpush.bf16.msra.mxu0 %v1696
        %1766 = vmatpush.bf16.msra.mxu0 %v1695
        %1767 = vmatmul.bf16.gmra.mxu0 %v1495
        %v1768 = vpop.f32.mrf.mxu0
        %v1769 = vadd.f32 %v1565, %v1768
        %v1770 = vpop.f32.mrf.mxu0
        %v1771 = vadd.f32 %v1565, %v1770
        %1772 = vdwg.mxu0
        %1773 = vmatpush.bf16.msra.mxu0 %v1710
        %1774 = vmatpush.bf16.msra.mxu0 %v1709
        %1775 = vmatpush.bf16.msra.mxu0 %v1708
        %1776 = vmatpush.bf16.msra.mxu0 %v1707
        %1777 = vmatpush.bf16.msra.mxu0 %v1706
        %1778 = vmatpush.bf16.msra.mxu0 %v1705
        %1779 = vmatpush.bf16.msra.mxu0 %v1704
        %1780 = vmatpush.bf16.msra.mxu0 %v1703
        %1781 = vmatmul.bf16.gmra.mxu0 %v1496
        %v1782 = vpop.f32.mrf.mxu0
        %v1783 = vadd.f32 %v1769, %v1782
        %v1784 = vpop.f32.mrf.mxu0
        %v1785 = vadd.f32 %v1771, %v1784
        %1786 = vdwg.mxu0
        %1787 = vmatpush.bf16.msra.mxu0 %v1718
        %1788 = vmatpush.bf16.msra.mxu0 %v1717
        %1789 = vmatpush.bf16.msra.mxu0 %v1716
        %1790 = vmatpush.bf16.msra.mxu0 %v1715
        %1791 = vmatpush.bf16.msra.mxu0 %v1714
        %1792 = vmatpush.bf16.msra.mxu0 %v1713
        %1793 = vmatpush.bf16.msra.mxu0 %v1712
        %1794 = vmatpush.bf16.msra.mxu0 %v1711
        %1795 = vmatmul.bf16.gmra.mxu0 %v1497
        %v1796 = vpop.f32.mrf.mxu0
        %v1797 = vadd.f32 %v1783, %v1796
        %v1798 = vpop.f32.mrf.mxu0
        %v1799 = vadd.f32 %v1785, %v1798
        %1800 = vdwg.mxu0
        %1801 = vmatpush.bf16.msra.mxu0 %v1726
        %1802 = vmatpush.bf16.msra.mxu0 %v1725
        %1803 = vmatpush.bf16.msra.mxu0 %v1724
        %1804 = vmatpush.bf16.msra.mxu0 %v1723
        %1805 = vmatpush.bf16.msra.mxu0 %v1722
        %1806 = vmatpush.bf16.msra.mxu0 %v1721
        %1807 = vmatpush.bf16.msra.mxu0 %v1720
        %1808 = vmatpush.bf16.msra.mxu0 %v1719
        %1809 = vmatmul.bf16.gmra.mxu0 %v1498
        %v1810 = vpop.f32.mrf.mxu0
        %v1811 = vadd.f32 %v1797, %v1810
        %v1812 = vpop.f32.mrf.mxu0
        %v1813 = vadd.f32 %v1799, %v1812
        %1814 = vdwg.mxu0
        %v1815 = vperm.slane %v619, 5
        %v1816 = vmul.f32 %v1815, %v1811
        %v1817 = vmul.f32 %v1815, %v1813
        %v1818 = vadd.f32 %v1116, %v1816
        %v1819 = vadd.f32 %v1117, %v1817
        %1820 = vst [vmem:[%s607] sm:$0xff] %v1818
        %1821 = vst [vmem:[%s607 + $0x8] sm:$0xff] %v1819
        %p1822 = scmp.lt.s32.totalorder %s31, 1
        %s1823 = scalar_select %p1822, %s31, 1
        %s1824 = smul.addr %s1823, 2
        %s1825 = smul.addr %s1824, 8
        %s1826 = scalar_lea.vmem %s10, %s1825
        // Predicated region
        $region77: #{_lambda_.8} parent=59 // pred_check
          %p1827 = pneg %p319
        $region78: #{_lambda_.8} parent=59 // pred_check_branch
          %1829 = sbr.rel (%p1827) target = $region80
        $region79: #{_lambda_.8} parent=59 // pred_region
          _
        $region80: #{_lambda_.8} parent=59 // pred_fallthru
          _
      $region60: #{_lambda_.8} parent=5 // pred_fallthru
        _
      %p1830 = scmp.le.s32.totalorder 2, %s22
      // Predicated region
      $region81: #{_lambda_.8} parent=5 // pred_check
        %p1831 = pneg %p1830
      $region82: #{_lambda_.8} parent=5 // pred_check_branch
        %1833 = sbr.rel (%p1831) target = $region84
      $region83: #{_lambda_.8} parent=5 // pred_region
        %s1834 = ssub.s32 %s22, 2
        // Predicated region
        $region85: #{_lambda_.8} parent=83 // pred_check
          %p1835 = pneg %p325
        $region86: #{_lambda_.8} parent=83 // pred_check_branch
          %1837 = sbr.rel (%p1835) target = $region88
        $region87: #{_lambda_.8} parent=83 // pred_region
          %p1838 = scmp.lt.s32.totalorder %s33, 1
          %s1839 = scalar_select %p1838, %s33, 1
          %s1840 = smul.addr %s1839, 2
          %s1841 = smul.addr %s1840, 8
          %s1842 = scalar_lea.vmem %s10, %s1841
        $region88: #{_lambda_.8} parent=83 // pred_fallthru
          _
      $region84: #{_lambda_.8} parent=5 // pred_fallthru
        _
    $region6: #{_lambda_.8} parent=1 // loop_footer
      %s26 = sadd.s32 1, %s22
    $region7: #{_lambda_.8} parent=1 // loop_footer_branch
      %21 = sbr.rel target = $region3
    $region8: #{_lambda_.8} parent=1 // loop_exit
      _
    %1843 = vsyncpa [#allocation3], 1
    %s1844 = scalar_lea.sflag [#allocation3], 1
    %1845 = vsyncpa %s1844, 1
    %1846 = vsyncpa [#allocation5], 1
    %s1847 = scalar_lea.sflag [#allocation5], 1
    %1848 = vsyncpa %s1847, 1

</llo_original>
